<compile_context>
chip_gen: v6e
topology: v6e:2x2x1
jax: 0.10.0
libtpu: 0.0.40
codegen_flags: <defaults>
</compile_context>

<pallas_src>
import functools
import numpy as np
import jax
import jax.numpy as jnp
from jax import lax
from jax.experimental import pallas as pl
from jax.experimental.pallas import tpu as pltpu


# ----------------------------- configuration -----------------------------
INPUT_SHAPE = (4, 8)          # (Z, H) extent used to derive type_of_windows (global in reference)
WINDOW_SIZE = (2, 4, 4)       # (Wz, Wh, Ww)
DIM = 32
HEADS = 4
DROPOUT_RATE = 0.0            # eval mode -> identity
BATCH = 2

HEAD_DIM = DIM // HEADS
N_TOK = WINDOW_SIZE[0] * WINDOW_SIZE[1] * WINDOW_SIZE[2]          # tokens per window (=32)
TYPE_OF_WINDOWS = (INPUT_SHAPE[0] // WINDOW_SIZE[0]) * (INPUT_SHAPE[1] // WINDOW_SIZE[1])  # =4
SCALE = HEAD_DIM ** (-0.5)
BIAS_TABLE_LEN = ((2 * WINDOW_SIZE[2] - 1) * WINDOW_SIZE[1] * WINDOW_SIZE[1]
                  * WINDOW_SIZE[0] * WINDOW_SIZE[0])

NEG_INF = -1e30               # off-window block fill for the block-diagonal bias


# ----------------------------- position index ----------------------------
def construct_position_index(window_size):
    """Reproduces EarthAttention3D._construct_index (with torch.range -> arange fix)."""
    wz, wh, ww = window_size
    coords_zi = np.arange(wz)
    coords_zj = -np.arange(wz) * wz
    coords_hi = np.arange(wh)
    coords_hj = -np.arange(wh) * wh
    coords_w = np.arange(ww)

    coords_1 = np.stack(np.meshgrid(coords_zi, coords_hi, coords_w, indexing="ij"))
    coords_2 = np.stack(np.meshgrid(coords_zj, coords_hj, coords_w, indexing="ij"))
    coords_flatten_1 = coords_1.reshape(3, -1)
    coords_flatten_2 = coords_2.reshape(3, -1)
    coords = coords_flatten_1[:, :, None] - coords_flatten_2[:, None, :]
    coords = np.transpose(coords, (1, 2, 0)).astype(np.int64)
    coords[:, :, 2] += ww - 1
    coords[:, :, 1] *= 2 * ww - 1
    coords[:, :, 0] *= (2 * ww - 1) * wh * wh
    position_index = coords.sum(-1).reshape(-1)
    return position_index


# ------------------------------ Pallas kernel -----------------------------
def _earth_attn_kernel(xT_ref, wqkvT_ref, bqkvT_ref, woutT_ref, boutT_ref, biasF_ref, o_ref,
                       *, n_win, n_tok, dim, heads, head_dim, bpg):
    # xT_ref   : (C, bpg*nW*N)   feature-major input slab, lane index = b*nW*N + w*N + n
    # wqkvT_ref: (3C, C)         W_qkv^T, attention scale folded into the Q rows
    # bqkvT_ref: (3C, 1)
    # woutT_ref: (C, C)   = W_out^T
    # boutT_ref: (C, 1)   = b_out^T
    # biasF_ref: (H, nW*N, nW*N) block-diagonal earth bias (+mask); off-window blocks = -1e30
    # o_ref    : (C, bpg*nW*N)   transposed output -> lane-dense stores
    L = n_win * n_tok                                    # = 128 (lane-dense)

    # fused QKV projection, feature-major: one MXU matmul for all windows / fused batch elements
    qkvT = jnp.dot(wqkvT_ref[...], xT_ref[...],
                   preferred_element_type=jnp.float32) + bqkvT_ref[...]      # (3C, bpg*L)

    out_rows = []                                        # per-head rows of out^T (channel = h*hd+d)
    for h in range(heads):
        r = h * head_dim
        qh_all = qkvT[r:r + head_dim]                            # (hd, bpg*L)  sublane-aligned
        kh_all = qkvT[dim + r:dim + r + head_dim]
        vh_all = qkvT[2 * dim + r:2 * dim + r + head_dim]
        bias_h = biasF_ref[h]                                    # (L, L)

        cols = []
        for bi in range(bpg):
            c0 = bi * L
            qh = qh_all[:, c0:c0 + L]                            # (hd, L)  lane-aligned slices
            kh = kh_all[:, c0:c0 + L]
            vh = vh_all[:, c0:c0 + L]

            # logits for ALL windows of this head at once: S = Q^T K -> one full (128,128) tile;
            # cross-window entries are annihilated by the -1e30 off-diagonal bias blocks.
            s = lax.dot_general(qh, kh, (((0,), (0,)), ((), ())),
                                preferred_element_type=jnp.float32)          # (L, L)
            s = s + bias_h
            s = s - jnp.max(s, axis=-1, keepdims=True)           # lane-dense row reduction
            p = jnp.exp(s)
            p = p / jnp.sum(p, axis=-1, keepdims=True)           # exact divide (dropout = identity)

            # out_h^T: contract P with V_h^T over the 128-lane key axis -> (hd, L)
            cols.append(lax.dot_general(vh, p, (((1,), (1,)), ((), ())),
                                        preferred_element_type=jnp.float32))
        out_rows.append(cols[0] if bpg == 1 else jnp.concatenate(cols, axis=1))

    outT = jnp.concatenate(out_rows, axis=0)                     # (C, bpg*L), sublane-aligned stack
    # output projection as ONE matmul:  y^T = W_out^T @ out^T + b_out^T
    yT = jnp.dot(woutT_ref[...], outT, preferred_element_type=jnp.float32) + boutT_ref[...]
    o_ref[...] = yT.astype(o_ref.dtype)                          # lane-dense store


def _batch_per_step(batch):
    """Batch elements processed per grid step.

    v7x has 2 TensorCores per chip -> keep one batch element per "parallel" grid step there.
    Single-TensorCore chips (v5e/v6e) -> fuse the whole batch into one step (halves step overhead
    and doubles M of the QKV projection matmul).
    """
    try:
        kind = jax.devices()[0].device_kind.lower()
    except Exception:
        kind = ""
    if "7" in kind and batch > 1:
        return 1
    return batch


def earth_attention_3d(x, w_qkv, b_qkv, w_out, b_out, bias_per_window, mask):
    """x: (B, nW, N, C) float32 -> (B, nW, N, C)."""
    B, nW, N, C = x.shape
    H = HEADS
    hd = C // H
    L = nW * N

    # ---- one-time parameter-side rearrangements (XLA glue, outside the kernel) ----
    scale = jnp.float32(hd ** -0.5)
    wqkvT = w_qkv.T                                                       # (3C, C)
    wqkvT = jnp.concatenate([wqkvT[:C] * scale, wqkvT[C:]], axis=0)       # fold scale into Q rows
    bqkvT = b_qkv.T                                                       # (3C, 1)
    bqkvT = jnp.concatenate([bqkvT[:C] * scale, bqkvT[C:]], axis=0)
    woutT = w_out.T                                                       # (C, C)
    boutT = b_out.T                                                       # (C, 1)

    # block-diagonal per-head bias with the additive mask folded in; off-window blocks = -1e30
    blk = (bias_per_window + mask[None, None, :, :]).astype(jnp.float32)  # (nW, H, N, N)
    biasF = jnp.full((H, nW, N, nW, N), NEG_INF, dtype=jnp.float32)
    iw = jnp.arange(nW)
    # advanced indices at axes 1 and 3 are separated -> result dims (nW,) lead: value is (nW,H,N,N)
    biasF = biasF.at[:, iw, :, iw, :].set(blk)
    biasF = biasF.reshape(H, L, L)                                        # (H, 128, 128)

    # feature-major input: lane index = b*L + w*N + n
    xT = x.reshape(B * L, C).T                                            # (C, B*L)

    bpg = _batch_per_step(B)
    steps = B // bpg

    kernel = functools.partial(_earth_attn_kernel, n_win=nW, n_tok=N, dim=C,
                               heads=H, head_dim=hd, bpg=bpg)

    yT = pl.pallas_call(
        kernel,
        out_shape=jax.ShapeDtypeStruct((C, B * L), x.dtype),
        grid_spec=pltpu.PrefetchScalarGridSpec(
            num_scalar_prefetch=0,
            grid=(steps,),
            in_specs=[
                pl.BlockSpec((C, bpg * L), lambda g: (0, g)),             # x^T slab (lane-dense)
                pl.BlockSpec((3 * C, C), lambda g: (0, 0)),               # W_qkv^T (Q pre-scaled)
                pl.BlockSpec((3 * C, 1), lambda g: (0, 0)),               # b_qkv^T
                pl.BlockSpec((C, C), lambda g: (0, 0)),                   # W_out^T
                pl.BlockSpec((C, 1), lambda g: (0, 0)),                   # b_out^T
                pl.BlockSpec((H, L, L), lambda g: (0, 0, 0)),             # block-diag bias (resident)
            ],
            out_specs=pl.BlockSpec((C, bpg * L), lambda g: (0, g)),       # y^T slab (lane-dense)
        ),
        compiler_params=pltpu.CompilerParams(dimension_semantics=("parallel",)),
    )(xT, wqkvT, bqkvT, woutT, boutT, biasF)

    # (C, B*L) -> (B, nW, N, C)   (cheap XLA transpose/reshape outside the kernel)
    return yT.T.reshape(B, nW, N, C)


# ------------------------------ pure-JAX reference -------------------------
def reference(x, w_qkv, b_qkv, w_out, b_out, bias_per_window, mask):
    B, nW, N, C = x.shape
    H, hd = HEADS, HEAD_DIM
    hp = lax.Precision.HIGHEST
    qkv = jnp.einsum("bwnc,cd->bwnd", x, w_qkv, precision=hp) + b_qkv      # (B,nW,N,3C)
    qkv = qkv.reshape(B, nW, N, 3, H, hd).transpose(3, 0, 1, 4, 2, 5)      # (3,B,nW,H,N,hd)
    q, k, v = qkv[0] * SCALE, qkv[1], qkv[2]
    attn = jnp.einsum("bwhnd,bwhmd->bwhnm", q, k, precision=hp)
    attn = attn + bias_per_window[None]                                    # (1,nW,H,N,N)
    attn = attn + mask[None, None, None]
    attn = jax.nn.softmax(attn, axis=-1)
    out = jnp.einsum("bwhnm,bwhmd->bwhnd", attn, v, precision=hp)
    out = out.transpose(0, 1, 3, 2, 4).reshape(B, nW, N, C)
    return jnp.einsum("bwnc,cd->bwnd", out, w_out, precision=hp) + b_out


# ---------------------------------- main -----------------------------------
if __name__ == "__main__":
    key = jax.random.PRNGKey(0)
    k_x, k_w1, k_b1, k_w2, k_b2, k_bias, k_mask = jax.random.split(key, 7)

    # deterministic parameter init (shapes from the module __init__)
    w_qkv = jax.random.normal(k_w1, (DIM, 3 * DIM), jnp.float32) * 0.02
    b_qkv = jax.random.normal(k_b1, (1, 3 * DIM), jnp.float32) * 0.02
    w_out = jax.random.normal(k_w2, (DIM, DIM), jnp.float32) * 0.02
    b_out = jax.random.normal(k_b2, (1, DIM), jnp.float32) * 0.02
    # earth_specific_bias: trunc_normal(std=0.02), shape (table_len, type_of_windows, heads)
    earth_specific_bias = (jax.random.truncated_normal(
        k_bias, -2.0, 2.0, (BIAS_TABLE_LEN, TYPE_OF_WINDOWS, HEADS), jnp.float32) * 0.02)

    # gather + reshape the bias table with the position index (parameter glue, done in JAX)
    position_index = jnp.asarray(construct_position_index(WINDOW_SIZE), dtype=jnp.int32)
    bias_per_window = earth_specific_bias[position_index]                     # (N*N, nW, H)
    bias_per_window = bias_per_window.reshape(N_TOK, N_TOK, TYPE_OF_WINDOWS, HEADS)
    bias_per_window = bias_per_window.transpose(2, 3, 0, 1)                   # (nW, H, N, N)

    # inputs
    x = jax.random.normal(k_x, (BATCH, TYPE_OF_WINDOWS, N_TOK, DIM), jnp.float32)
    mask = jnp.where(jax.random.uniform(k_mask, (N_TOK, N_TOK)) < 0.1,
                     -100.0, 0.0).astype(jnp.float32)

    out = earth_attention_3d(x, w_qkv, b_qkv, w_out, b_out, bias_per_window, mask)
    out = jax.block_until_ready(out)

    ref = reference(x, w_qkv, b_qkv, w_out, b_out, bias_per_window, mask)
    # Softmax uses an exact divide now; remaining tolerance only covers f32->bf16 multi-pass MXU
    # emulation differences between the Pallas matmuls and the HIGHEST-precision XLA reference.
    np.testing.assert_allclose(np.asarray(out), np.asarray(ref), rtol=1e-3, atol=1e-4)

    print("KERNEL_OK")
</pallas_src>

<mosaic_0001>
module attributes {stable_mosaic.version = 11 : i64} {
  func.func @_earth_attn_kernel(%arg0: i32, %arg1: memref<32x256xf32, #tpu.memory_space<vmem>>, %arg2: memref<96x32xf32, #tpu.memory_space<vmem>>, %arg3: memref<96x1xf32, #tpu.memory_space<vmem>>, %arg4: memref<32x32xf32, #tpu.memory_space<vmem>>, %arg5: memref<32x1xf32, #tpu.memory_space<vmem>>, %arg6: memref<4x128x128xf32, #tpu.memory_space<vmem>>, %arg7: memref<32x256xf32, #tpu.memory_space<vmem>>) attributes {dimension_semantics = [#tpu.dimension_semantics<parallel>], iteration_bounds = array<i64: 1>, scalar_prefetch = 0 : i64, scratch_operands = 0 : i64, tpu.core_type = #tpu.core_type<tc>, window_params = [{transform_indices = @transform_0, window_bounds = array<i64: 32, 256>}, {pipeline_mode = #tpu.pipeline_mode<synchronous>, transform_indices = @transform_1, window_bounds = array<i64: 96, 32>}, {pipeline_mode = #tpu.pipeline_mode<synchronous>, transform_indices = @transform_2, window_bounds = array<i64: 96, 1>}, {pipeline_mode = #tpu.pipeline_mode<synchronous>, transform_indices = @transform_3, window_bounds = array<i64: 32, 32>}, {pipeline_mode = #tpu.pipeline_mode<synchronous>, transform_indices = @transform_4, window_bounds = array<i64: 32, 1>}, {pipeline_mode = #tpu.pipeline_mode<synchronous>, transform_indices = @transform_5, window_bounds = array<i64: 4, 128, 128>}, {transform_indices = @transform_6, window_bounds = array<i64: 32, 256>}]} {
    %c0 = arith.constant 0 : index
    %c0_0 = arith.constant 0 : index
    %0 = vector.load %arg2[%c0, %c0_0] : memref<96x32xf32, #tpu.memory_space<vmem>>, vector<96x32xf32>
    %c0_1 = arith.constant 0 : index
    %c0_2 = arith.constant 0 : index
    %1 = vector.load %arg1[%c0_1, %c0_2] : memref<32x256xf32, #tpu.memory_space<vmem>>, vector<32x256xf32>
    %cst = arith.constant dense<0.000000e+00> : vector<96x256xf32>
    %2 = tpu.matmul %0, %1, %cst {dimension_numbers = #tpu.dot_dimension_numbers<[1], [0], [0], [1], [0, 0, 1, 1], [], []>} : vector<96x32xf32>, vector<32x256xf32>, vector<96x256xf32> -> vector<96x256xf32>
    %c0_3 = arith.constant 0 : index
    %c0_4 = arith.constant 0 : index
    %3 = vector.load %arg3[%c0_3, %c0_4] : memref<96x1xf32, #tpu.memory_space<vmem>>, vector<96x1xf32>
    %4 = vector.broadcast %3 : vector<96x1xf32> to vector<96x256xf32>
    %5 = arith.addf %2, %4 : vector<96x256xf32>
    %6 = vector.extract_strided_slice %5 {offsets = [0, 0], sizes = [8, 256], strides = [1, 1]} : vector<96x256xf32> to vector<8x256xf32>
    %7 = vector.extract_strided_slice %5 {offsets = [32, 0], sizes = [8, 256], strides = [1, 1]} : vector<96x256xf32> to vector<8x256xf32>
    %8 = vector.extract_strided_slice %5 {offsets = [64, 0], sizes = [8, 256], strides = [1, 1]} : vector<96x256xf32> to vector<8x256xf32>
    %c0_5 = arith.constant 0 : index
    %c0_6 = arith.constant 0 : index
    %c0_7 = arith.constant 0 : index
    %9 = vector.load %arg6[%c0_5, %c0_6, %c0_7] : memref<4x128x128xf32, #tpu.memory_space<vmem>>, vector<1x128x128xf32>
    %10 = vector.shape_cast %9 : vector<1x128x128xf32> to vector<128x128xf32>
    %11 = vector.extract_strided_slice %6 {offsets = [0, 0], sizes = [8, 128], strides = [1, 1]} : vector<8x256xf32> to vector<8x128xf32>
    %12 = vector.extract_strided_slice %7 {offsets = [0, 0], sizes = [8, 128], strides = [1, 1]} : vector<8x256xf32> to vector<8x128xf32>
    %13 = vector.extract_strided_slice %8 {offsets = [0, 0], sizes = [8, 128], strides = [1, 1]} : vector<8x256xf32> to vector<8x128xf32>
    %cst_8 = arith.constant dense<0.000000e+00> : vector<128x128xf32>
    %14 = tpu.matmul %11, %12, %cst_8 {dimension_numbers = #tpu.dot_dimension_numbers<[0], [0], [1], [1], [0, 1, 1, 1], [], []>} : vector<8x128xf32>, vector<8x128xf32>, vector<128x128xf32> -> vector<128x128xf32>
    %15 = arith.addf %14, %10 : vector<128x128xf32>
    %cst_9 = arith.constant dense<0xFF800000> : vector<128xf32>
    %16 = vector.multi_reduction <maximumf>, %15, %cst_9 [1] : vector<128x128xf32> to vector<128xf32>
    %17 = vector.shape_cast %16 : vector<128xf32> to vector<128x1xf32>
    %18 = vector.broadcast %17 : vector<128x1xf32> to vector<128x128xf32>
    %19 = arith.subf %15, %18 : vector<128x128xf32>
    %20 = math.exp %19 : vector<128x128xf32>
    %cst_10 = arith.constant dense<0.000000e+00> : vector<128xf32>
    %21 = vector.multi_reduction <add>, %20, %cst_10 [1] : vector<128x128xf32> to vector<128xf32>
    %22 = vector.shape_cast %21 : vector<128xf32> to vector<128x1xf32>
    %23 = vector.broadcast %22 : vector<128x1xf32> to vector<128x128xf32>
    %24 = arith.divf %20, %23 : vector<128x128xf32>
    %cst_11 = arith.constant dense<0.000000e+00> : vector<8x128xf32>
    %25 = tpu.matmul %13, %24, %cst_11 {dimension_numbers = #tpu.dot_dimension_numbers<[1], [1], [0], [0], [0, 0, 1, 0], [], []>} : vector<8x128xf32>, vector<128x128xf32>, vector<8x128xf32> -> vector<8x128xf32>
    %26 = vector.extract_strided_slice %6 {offsets = [0, 128], sizes = [8, 128], strides = [1, 1]} : vector<8x256xf32> to vector<8x128xf32>
    %27 = vector.extract_strided_slice %7 {offsets = [0, 128], sizes = [8, 128], strides = [1, 1]} : vector<8x256xf32> to vector<8x128xf32>
    %28 = vector.extract_strided_slice %8 {offsets = [0, 128], sizes = [8, 128], strides = [1, 1]} : vector<8x256xf32> to vector<8x128xf32>
    %cst_12 = arith.constant dense<0.000000e+00> : vector<128x128xf32>
    %29 = tpu.matmul %26, %27, %cst_12 {dimension_numbers = #tpu.dot_dimension_numbers<[0], [0], [1], [1], [0, 1, 1, 1], [], []>} : vector<8x128xf32>, vector<8x128xf32>, vector<128x128xf32> -> vector<128x128xf32>
    %30 = arith.addf %29, %10 : vector<128x128xf32>
    %cst_13 = arith.constant dense<0xFF800000> : vector<128xf32>
    %31 = vector.multi_reduction <maximumf>, %30, %cst_13 [1] : vector<128x128xf32> to vector<128xf32>
    %32 = vector.shape_cast %31 : vector<128xf32> to vector<128x1xf32>
    %33 = vector.broadcast %32 : vector<128x1xf32> to vector<128x128xf32>
    %34 = arith.subf %30, %33 : vector<128x128xf32>
    %35 = math.exp %34 : vector<128x128xf32>
    %cst_14 = arith.constant dense<0.000000e+00> : vector<128xf32>
    %36 = vector.multi_reduction <add>, %35, %cst_14 [1] : vector<128x128xf32> to vector<128xf32>
    %37 = vector.shape_cast %36 : vector<128xf32> to vector<128x1xf32>
    %38 = vector.broadcast %37 : vector<128x1xf32> to vector<128x128xf32>
    %39 = arith.divf %35, %38 : vector<128x128xf32>
    %cst_15 = arith.constant dense<0.000000e+00> : vector<8x128xf32>
    %40 = tpu.matmul %28, %39, %cst_15 {dimension_numbers = #tpu.dot_dimension_numbers<[1], [1], [0], [0], [0, 0, 1, 0], [], []>} : vector<8x128xf32>, vector<128x128xf32>, vector<8x128xf32> -> vector<8x128xf32>
    %41 = tpu.concatenate %25, %40 in 1 : vector<8x128xf32>, vector<8x128xf32> -> vector<8x256xf32>
    %42 = vector.extract_strided_slice %5 {offsets = [8, 0], sizes = [8, 256], strides = [1, 1]} : vector<96x256xf32> to vector<8x256xf32>
    %43 = vector.extract_strided_slice %5 {offsets = [40, 0], sizes = [8, 256], strides = [1, 1]} : vector<96x256xf32> to vector<8x256xf32>
    %44 = vector.extract_strided_slice %5 {offsets = [72, 0], sizes = [8, 256], strides = [1, 1]} : vector<96x256xf32> to vector<8x256xf32>
    %c1 = arith.constant 1 : index
    %c0_16 = arith.constant 0 : index
    %c0_17 = arith.constant 0 : index
    %45 = vector.load %arg6[%c1, %c0_16, %c0_17] : memref<4x128x128xf32, #tpu.memory_space<vmem>>, vector<1x128x128xf32>
    %46 = vector.shape_cast %45 : vector<1x128x128xf32> to vector<128x128xf32>
    %47 = vector.extract_strided_slice %42 {offsets = [0, 0], sizes = [8, 128], strides = [1, 1]} : vector<8x256xf32> to vector<8x128xf32>
    %48 = vector.extract_strided_slice %43 {offsets = [0, 0], sizes = [8, 128], strides = [1, 1]} : vector<8x256xf32> to vector<8x128xf32>
    %49 = vector.extract_strided_slice %44 {offsets = [0, 0], sizes = [8, 128], strides = [1, 1]} : vector<8x256xf32> to vector<8x128xf32>
    %cst_18 = arith.constant dense<0.000000e+00> : vector<128x128xf32>
    %50 = tpu.matmul %47, %48, %cst_18 {dimension_numbers = #tpu.dot_dimension_numbers<[0], [0], [1], [1], [0, 1, 1, 1], [], []>} : vector<8x128xf32>, vector<8x128xf32>, vector<128x128xf32> -> vector<128x128xf32>
    %51 = arith.addf %50, %46 : vector<128x128xf32>
    %cst_19 = arith.constant dense<0xFF800000> : vector<128xf32>
    %52 = vector.multi_reduction <maximumf>, %51, %cst_19 [1] : vector<128x128xf32> to vector<128xf32>
    %53 = vector.shape_cast %52 : vector<128xf32> to vector<128x1xf32>
    %54 = vector.broadcast %53 : vector<128x1xf32> to vector<128x128xf32>
    %55 = arith.subf %51, %54 : vector<128x128xf32>
    %56 = math.exp %55 : vector<128x128xf32>
    %cst_20 = arith.constant dense<0.000000e+00> : vector<128xf32>
    %57 = vector.multi_reduction <add>, %56, %cst_20 [1] : vector<128x128xf32> to vector<128xf32>
    %58 = vector.shape_cast %57 : vector<128xf32> to vector<128x1xf32>
    %59 = vector.broadcast %58 : vector<128x1xf32> to vector<128x128xf32>
    %60 = arith.divf %56, %59 : vector<128x128xf32>
    %cst_21 = arith.constant dense<0.000000e+00> : vector<8x128xf32>
    %61 = tpu.matmul %49, %60, %cst_21 {dimension_numbers = #tpu.dot_dimension_numbers<[1], [1], [0], [0], [0, 0, 1, 0], [], []>} : vector<8x128xf32>, vector<128x128xf32>, vector<8x128xf32> -> vector<8x128xf32>
    %62 = vector.extract_strided_slice %42 {offsets = [0, 128], sizes = [8, 128], strides = [1, 1]} : vector<8x256xf32> to vector<8x128xf32>
    %63 = vector.extract_strided_slice %43 {offsets = [0, 128], sizes = [8, 128], strides = [1, 1]} : vector<8x256xf32> to vector<8x128xf32>
    %64 = vector.extract_strided_slice %44 {offsets = [0, 128], sizes = [8, 128], strides = [1, 1]} : vector<8x256xf32> to vector<8x128xf32>
    %cst_22 = arith.constant dense<0.000000e+00> : vector<128x128xf32>
    %65 = tpu.matmul %62, %63, %cst_22 {dimension_numbers = #tpu.dot_dimension_numbers<[0], [0], [1], [1], [0, 1, 1, 1], [], []>} : vector<8x128xf32>, vector<8x128xf32>, vector<128x128xf32> -> vector<128x128xf32>
    %66 = arith.addf %65, %46 : vector<128x128xf32>
    %cst_23 = arith.constant dense<0xFF800000> : vector<128xf32>
    %67 = vector.multi_reduction <maximumf>, %66, %cst_23 [1] : vector<128x128xf32> to vector<128xf32>
    %68 = vector.shape_cast %67 : vector<128xf32> to vector<128x1xf32>
    %69 = vector.broadcast %68 : vector<128x1xf32> to vector<128x128xf32>
    %70 = arith.subf %66, %69 : vector<128x128xf32>
    %71 = math.exp %70 : vector<128x128xf32>
    %cst_24 = arith.constant dense<0.000000e+00> : vector<128xf32>
    %72 = vector.multi_reduction <add>, %71, %cst_24 [1] : vector<128x128xf32> to vector<128xf32>
    %73 = vector.shape_cast %72 : vector<128xf32> to vector<128x1xf32>
    %74 = vector.broadcast %73 : vector<128x1xf32> to vector<128x128xf32>
    %75 = arith.divf %71, %74 : vector<128x128xf32>
    %cst_25 = arith.constant dense<0.000000e+00> : vector<8x128xf32>
    %76 = tpu.matmul %64, %75, %cst_25 {dimension_numbers = #tpu.dot_dimension_numbers<[1], [1], [0], [0], [0, 0, 1, 0], [], []>} : vector<8x128xf32>, vector<128x128xf32>, vector<8x128xf32> -> vector<8x128xf32>
    %77 = tpu.concatenate %61, %76 in 1 : vector<8x128xf32>, vector<8x128xf32> -> vector<8x256xf32>
    %78 = vector.extract_strided_slice %5 {offsets = [16, 0], sizes = [8, 256], strides = [1, 1]} : vector<96x256xf32> to vector<8x256xf32>
    %79 = vector.extract_strided_slice %5 {offsets = [48, 0], sizes = [8, 256], strides = [1, 1]} : vector<96x256xf32> to vector<8x256xf32>
    %80 = vector.extract_strided_slice %5 {offsets = [80, 0], sizes = [8, 256], strides = [1, 1]} : vector<96x256xf32> to vector<8x256xf32>
    %c2 = arith.constant 2 : index
    %c0_26 = arith.constant 0 : index
    %c0_27 = arith.constant 0 : index
    %81 = vector.load %arg6[%c2, %c0_26, %c0_27] : memref<4x128x128xf32, #tpu.memory_space<vmem>>, vector<1x128x128xf32>
    %82 = vector.shape_cast %81 : vector<1x128x128xf32> to vector<128x128xf32>
    %83 = vector.extract_strided_slice %78 {offsets = [0, 0], sizes = [8, 128], strides = [1, 1]} : vector<8x256xf32> to vector<8x128xf32>
    %84 = vector.extract_strided_slice %79 {offsets = [0, 0], sizes = [8, 128], strides = [1, 1]} : vector<8x256xf32> to vector<8x128xf32>
    %85 = vector.extract_strided_slice %80 {offsets = [0, 0], sizes = [8, 128], strides = [1, 1]} : vector<8x256xf32> to vector<8x128xf32>
    %cst_28 = arith.constant dense<0.000000e+00> : vector<128x128xf32>
    %86 = tpu.matmul %83, %84, %cst_28 {dimension_numbers = #tpu.dot_dimension_numbers<[0], [0], [1], [1], [0, 1, 1, 1], [], []>} : vector<8x128xf32>, vector<8x128xf32>, vector<128x128xf32> -> vector<128x128xf32>
    %87 = arith.addf %86, %82 : vector<128x128xf32>
    %cst_29 = arith.constant dense<0xFF800000> : vector<128xf32>
    %88 = vector.multi_reduction <maximumf>, %87, %cst_29 [1] : vector<128x128xf32> to vector<128xf32>
    %89 = vector.shape_cast %88 : vector<128xf32> to vector<128x1xf32>
    %90 = vector.broadcast %89 : vector<128x1xf32> to vector<128x128xf32>
    %91 = arith.subf %87, %90 : vector<128x128xf32>
    %92 = math.exp %91 : vector<128x128xf32>
    %cst_30 = arith.constant dense<0.000000e+00> : vector<128xf32>
    %93 = vector.multi_reduction <add>, %92, %cst_30 [1] : vector<128x128xf32> to vector<128xf32>
    %94 = vector.shape_cast %93 : vector<128xf32> to vector<128x1xf32>
    %95 = vector.broadcast %94 : vector<128x1xf32> to vector<128x128xf32>
    %96 = arith.divf %92, %95 : vector<128x128xf32>
    %cst_31 = arith.constant dense<0.000000e+00> : vector<8x128xf32>
    %97 = tpu.matmul %85, %96, %cst_31 {dimension_numbers = #tpu.dot_dimension_numbers<[1], [1], [0], [0], [0, 0, 1, 0], [], []>} : vector<8x128xf32>, vector<128x128xf32>, vector<8x128xf32> -> vector<8x128xf32>
    %98 = vector.extract_strided_slice %78 {offsets = [0, 128], sizes = [8, 128], strides = [1, 1]} : vector<8x256xf32> to vector<8x128xf32>
    %99 = vector.extract_strided_slice %79 {offsets = [0, 128], sizes = [8, 128], strides = [1, 1]} : vector<8x256xf32> to vector<8x128xf32>
    %100 = vector.extract_strided_slice %80 {offsets = [0, 128], sizes = [8, 128], strides = [1, 1]} : vector<8x256xf32> to vector<8x128xf32>
    %cst_32 = arith.constant dense<0.000000e+00> : vector<128x128xf32>
    %101 = tpu.matmul %98, %99, %cst_32 {dimension_numbers = #tpu.dot_dimension_numbers<[0], [0], [1], [1], [0, 1, 1, 1], [], []>} : vector<8x128xf32>, vector<8x128xf32>, vector<128x128xf32> -> vector<128x128xf32>
    %102 = arith.addf %101, %82 : vector<128x128xf32>
    %cst_33 = arith.constant dense<0xFF800000> : vector<128xf32>
    %103 = vector.multi_reduction <maximumf>, %102, %cst_33 [1] : vector<128x128xf32> to vector<128xf32>
    %104 = vector.shape_cast %103 : vector<128xf32> to vector<128x1xf32>
    %105 = vector.broadcast %104 : vector<128x1xf32> to vector<128x128xf32>
    %106 = arith.subf %102, %105 : vector<128x128xf32>
    %107 = math.exp %106 : vector<128x128xf32>
    %cst_34 = arith.constant dense<0.000000e+00> : vector<128xf32>
    %108 = vector.multi_reduction <add>, %107, %cst_34 [1] : vector<128x128xf32> to vector<128xf32>
    %109 = vector.shape_cast %108 : vector<128xf32> to vector<128x1xf32>
    %110 = vector.broadcast %109 : vector<128x1xf32> to vector<128x128xf32>
    %111 = arith.divf %107, %110 : vector<128x128xf32>
    %cst_35 = arith.constant dense<0.000000e+00> : vector<8x128xf32>
    %112 = tpu.matmul %100, %111, %cst_35 {dimension_numbers = #tpu.dot_dimension_numbers<[1], [1], [0], [0], [0, 0, 1, 0], [], []>} : vector<8x128xf32>, vector<128x128xf32>, vector<8x128xf32> -> vector<8x128xf32>
    %113 = tpu.concatenate %97, %112 in 1 : vector<8x128xf32>, vector<8x128xf32> -> vector<8x256xf32>
    %114 = vector.extract_strided_slice %5 {offsets = [24, 0], sizes = [8, 256], strides = [1, 1]} : vector<96x256xf32> to vector<8x256xf32>
    %115 = vector.extract_strided_slice %5 {offsets = [56, 0], sizes = [8, 256], strides = [1, 1]} : vector<96x256xf32> to vector<8x256xf32>
    %116 = vector.extract_strided_slice %5 {offsets = [88, 0], sizes = [8, 256], strides = [1, 1]} : vector<96x256xf32> to vector<8x256xf32>
    %c3 = arith.constant 3 : index
    %c0_36 = arith.constant 0 : index
    %c0_37 = arith.constant 0 : index
    %117 = vector.load %arg6[%c3, %c0_36, %c0_37] : memref<4x128x128xf32, #tpu.memory_space<vmem>>, vector<1x128x128xf32>
    %118 = vector.shape_cast %117 : vector<1x128x128xf32> to vector<128x128xf32>
    %119 = vector.extract_strided_slice %114 {offsets = [0, 0], sizes = [8, 128], strides = [1, 1]} : vector<8x256xf32> to vector<8x128xf32>
    %120 = vector.extract_strided_slice %115 {offsets = [0, 0], sizes = [8, 128], strides = [1, 1]} : vector<8x256xf32> to vector<8x128xf32>
    %121 = vector.extract_strided_slice %116 {offsets = [0, 0], sizes = [8, 128], strides = [1, 1]} : vector<8x256xf32> to vector<8x128xf32>
    %cst_38 = arith.constant dense<0.000000e+00> : vector<128x128xf32>
    %122 = tpu.matmul %119, %120, %cst_38 {dimension_numbers = #tpu.dot_dimension_numbers<[0], [0], [1], [1], [0, 1, 1, 1], [], []>} : vector<8x128xf32>, vector<8x128xf32>, vector<128x128xf32> -> vector<128x128xf32>
    %123 = arith.addf %122, %118 : vector<128x128xf32>
    %cst_39 = arith.constant dense<0xFF800000> : vector<128xf32>
    %124 = vector.multi_reduction <maximumf>, %123, %cst_39 [1] : vector<128x128xf32> to vector<128xf32>
    %125 = vector.shape_cast %124 : vector<128xf32> to vector<128x1xf32>
    %126 = vector.broadcast %125 : vector<128x1xf32> to vector<128x128xf32>
    %127 = arith.subf %123, %126 : vector<128x128xf32>
    %128 = math.exp %127 : vector<128x128xf32>
    %cst_40 = arith.constant dense<0.000000e+00> : vector<128xf32>
    %129 = vector.multi_reduction <add>, %128, %cst_40 [1] : vector<128x128xf32> to vector<128xf32>
    %130 = vector.shape_cast %129 : vector<128xf32> to vector<128x1xf32>
    %131 = vector.broadcast %130 : vector<128x1xf32> to vector<128x128xf32>
    %132 = arith.divf %128, %131 : vector<128x128xf32>
    %cst_41 = arith.constant dense<0.000000e+00> : vector<8x128xf32>
    %133 = tpu.matmul %121, %132, %cst_41 {dimension_numbers = #tpu.dot_dimension_numbers<[1], [1], [0], [0], [0, 0, 1, 0], [], []>} : vector<8x128xf32>, vector<128x128xf32>, vector<8x128xf32> -> vector<8x128xf32>
    %134 = vector.extract_strided_slice %114 {offsets = [0, 128], sizes = [8, 128], strides = [1, 1]} : vector<8x256xf32> to vector<8x128xf32>
    %135 = vector.extract_strided_slice %115 {offsets = [0, 128], sizes = [8, 128], strides = [1, 1]} : vector<8x256xf32> to vector<8x128xf32>
    %136 = vector.extract_strided_slice %116 {offsets = [0, 128], sizes = [8, 128], strides = [1, 1]} : vector<8x256xf32> to vector<8x128xf32>
    %cst_42 = arith.constant dense<0.000000e+00> : vector<128x128xf32>
    %137 = tpu.matmul %134, %135, %cst_42 {dimension_numbers = #tpu.dot_dimension_numbers<[0], [0], [1], [1], [0, 1, 1, 1], [], []>} : vector<8x128xf32>, vector<8x128xf32>, vector<128x128xf32> -> vector<128x128xf32>
    %138 = arith.addf %137, %118 : vector<128x128xf32>
    %cst_43 = arith.constant dense<0xFF800000> : vector<128xf32>
    %139 = vector.multi_reduction <maximumf>, %138, %cst_43 [1] : vector<128x128xf32> to vector<128xf32>
    %140 = vector.shape_cast %139 : vector<128xf32> to vector<128x1xf32>
    %141 = vector.broadcast %140 : vector<128x1xf32> to vector<128x128xf32>
    %142 = arith.subf %138, %141 : vector<128x128xf32>
    %143 = math.exp %142 : vector<128x128xf32>
    %cst_44 = arith.constant dense<0.000000e+00> : vector<128xf32>
    %144 = vector.multi_reduction <add>, %143, %cst_44 [1] : vector<128x128xf32> to vector<128xf32>
    %145 = vector.shape_cast %144 : vector<128xf32> to vector<128x1xf32>
    %146 = vector.broadcast %145 : vector<128x1xf32> to vector<128x128xf32>
    %147 = arith.divf %143, %146 : vector<128x128xf32>
    %cst_45 = arith.constant dense<0.000000e+00> : vector<8x128xf32>
    %148 = tpu.matmul %136, %147, %cst_45 {dimension_numbers = #tpu.dot_dimension_numbers<[1], [1], [0], [0], [0, 0, 1, 0], [], []>} : vector<8x128xf32>, vector<128x128xf32>, vector<8x128xf32> -> vector<8x128xf32>
    %149 = tpu.concatenate %133, %148 in 1 : vector<8x128xf32>, vector<8x128xf32> -> vector<8x256xf32>
    %150 = tpu.concatenate %41, %77, %113, %149 in 0 : vector<8x256xf32>, vector<8x256xf32>, vector<8x256xf32>, vector<8x256xf32> -> vector<32x256xf32>
    %c0_46 = arith.constant 0 : index
    %c0_47 = arith.constant 0 : index
    %151 = vector.load %arg4[%c0_46, %c0_47] : memref<32x32xf32, #tpu.memory_space<vmem>>, vector<32x32xf32>
    %cst_48 = arith.constant dense<0.000000e+00> : vector<32x256xf32>
    %152 = tpu.matmul %151, %150, %cst_48 {dimension_numbers = #tpu.dot_dimension_numbers<[1], [0], [0], [1], [0, 0, 1, 1], [], []>} : vector<32x32xf32>, vector<32x256xf32>, vector<32x256xf32> -> vector<32x256xf32>
    %c0_49 = arith.constant 0 : index
    %c0_50 = arith.constant 0 : index
    %153 = vector.load %arg5[%c0_49, %c0_50] : memref<32x1xf32, #tpu.memory_space<vmem>>, vector<32x1xf32>
    %154 = vector.broadcast %153 : vector<32x1xf32> to vector<32x256xf32>
    %155 = arith.addf %152, %154 : vector<32x256xf32>
    %c0_51 = arith.constant 0 : index
    %c0_52 = arith.constant 0 : index
    %156 = vector.load %arg7[%c0_51, %c0_52] : memref<32x256xf32, #tpu.memory_space<vmem>>, vector<32x256xf32>
    tpu.vector_store %arg7[%c0_51, %c0_52], %155 {strides = array<i32>} : memref<32x256xf32, #tpu.memory_space<vmem>>, vector<32x256xf32>,
    return
  }
  func.func @transform_0(%arg0: i32) -> (i32, i32) {
    %c0_i32 = arith.constant 0 : i32
    %c0_i32_0 = arith.constant 0 : i32
    return %c0_i32, %arg0 : i32, i32
  }
  func.func @transform_1(%arg0: i32) -> (i32, i32) {
    %c0_i32 = arith.constant 0 : i32
    %c0_i32_0 = arith.constant 0 : i32
    %c0_i32_1 = arith.constant 0 : i32
    return %c0_i32, %c0_i32_0 : i32, i32
  }
  func.func @transform_2(%arg0: i32) -> (i32, i32) {
    %c0_i32 = arith.constant 0 : i32
    %c0_i32_0 = arith.constant 0 : i32
    %c0_i32_1 = arith.constant 0 : i32
    return %c0_i32, %c0_i32_0 : i32, i32
  }
  func.func @transform_3(%arg0: i32) -> (i32, i32) {
    %c0_i32 = arith.constant 0 : i32
    %c0_i32_0 = arith.constant 0 : i32
    %c0_i32_1 = arith.constant 0 : i32
    return %c0_i32, %c0_i32_0 : i32, i32
  }
  func.func @transform_4(%arg0: i32) -> (i32, i32) {
    %c0_i32 = arith.constant 0 : i32
    %c0_i32_0 = arith.constant 0 : i32
    %c0_i32_1 = arith.constant 0 : i32
    return %c0_i32, %c0_i32_0 : i32, i32
  }
  func.func @transform_5(%arg0: i32) -> (i32, i32, i32) {
    %c0_i32 = arith.constant 0 : i32
    %c0_i32_0 = arith.constant 0 : i32
    %c0_i32_1 = arith.constant 0 : i32
    %c0_i32_2 = arith.constant 0 : i32
    return %c0_i32, %c0_i32_0, %c0_i32_1 : i32, i32, i32
  }
  func.func @transform_6(%arg0: i32) -> (i32, i32) {
    %c0_i32 = arith.constant 0 : i32
    %c0_i32_0 = arith.constant 0 : i32
    return %c0_i32, %arg0 : i32, i32
  }
}

</mosaic_0001>

<llo_original>
// kernel: tpu_custom_call.1
$region0: #{tpu_custom_call.1}
  #allocation0 [shape = 'u32[]', space=smem, size = 0x4, offset = 0x4, fixed_abs, tag = 'smem constant byte address 0x4 - core index']
  #allocation1 [shape = 'u32[144,128]{1,0:T(1,128)}', space=vmem, size = 0x12000, scoped, tag = 'internal scratch']
  %s0 = inlined_call_operand.vmem [shape: f32[32,256], index: 0, kind: input, shape index: {}]
  %s1 = inlined_call_operand.vmem [shape: f32[96,32], index: 1, kind: input, shape index: {}]
  %s2 = inlined_call_operand.vmem [shape: f32[96,1], index: 2, kind: input, shape index: {}]
  %s3 = inlined_call_operand.vmem [shape: f32[32,32], index: 3, kind: input, shape index: {}]
  %s4 = inlined_call_operand.vmem [shape: f32[32,1], index: 4, kind: input, shape index: {}]
  %s5 = inlined_call_operand.hbm [shape: f32[4,128,128], index: 5, kind: input, shape index: {}]
  %s6 = inlined_call_operand.hbm [shape: f32[32,256], index: 6, kind: output, shape index: {}]
  %s7 = sld [smem:[#allocation0]]
  $region38: #{tpu_custom_call.1} parent=0
    _
  %s9 = ssub.s32 1, %s7
  %s10 = scalar_select 0, %s9, %s7
  $region1: #{tpu_custom_call.1} parent=0
    #allocation2 [shape = 'u8[262144]{0}', space=vmem, size = 0x40000, scoped, tag = 'input window, operand 5, single buffered']
    #allocation3 [shape = 's32[1]{0}', space=sflag, size = 0x4, scoped, tag = 'scoped memory for tpu_custom_call.1']
    #allocation4 [shape = 's32[1]{0}', space=sflag, size = 0x4, scoped, tag = 'scoped memory for tpu_custom_call.1']
    #allocation5 [shape = 'u8[32768]{0}', space=vmem, size = 0x8000, scoped, tag = 'output window, operand 0, single buffered']
    %11 = vsyncpa [#allocation3], 0
    %12 = vsyncpa [#allocation4], 0
    // Predicated region
    $region2: #{tpu_custom_call.1} parent=1 // pred_check
      _
    $region3: #{tpu_custom_call.1} parent=1 // pred_check_branch
      %14 = sbr.rel (0) target = $region5
    $region4: #{tpu_custom_call.1} parent=1 // pred_region
      _
    $region5: #{tpu_custom_call.1} parent=1 // pred_fallthru
      _
    // Predicated region
    $region6: #{tpu_custom_call.1} parent=1 // pred_check
      _
    $region7: #{tpu_custom_call.1} parent=1 // pred_check_branch
      %16 = sbr.rel (0) target = $region9
    $region8: #{tpu_custom_call.1} parent=1 // pred_region
      _
    $region9: #{tpu_custom_call.1} parent=1 // pred_fallthru
      _
    // Predicated region
    $region10: #{tpu_custom_call.1} parent=1 // pred_check
      _
    $region11: #{tpu_custom_call.1} parent=1 // pred_check_branch
      %18 = sbr.rel (0) target = $region13
    $region12: #{tpu_custom_call.1} parent=1 // pred_region
      _
    $region13: #{tpu_custom_call.1} parent=1 // pred_fallthru
      _
    // Predicated region
    $region14: #{tpu_custom_call.1} parent=1 // pred_check
      _
    $region15: #{tpu_custom_call.1} parent=1 // pred_check_branch
      %20 = sbr.rel (0) target = $region17
    $region16: #{tpu_custom_call.1} parent=1 // pred_region
      _
    $region17: #{tpu_custom_call.1} parent=1 // pred_fallthru
      _
    // Predicated region
    $region18: #{tpu_custom_call.1} parent=1 // pred_check
      _
    $region19: #{tpu_custom_call.1} parent=1 // pred_check_branch
      %22 = sbr.rel (0) target = $region21
    $region20: #{tpu_custom_call.1} parent=1 // pred_region
      _
    $region21: #{tpu_custom_call.1} parent=1 // pred_fallthru
      _
    // Predicated region
    $region22: #{tpu_custom_call.1} parent=1 // pred_check
      _
    $region23: #{tpu_custom_call.1} parent=1 // pred_check_branch
      %24 = sbr.rel (0) target = $region25
    $region24: #{tpu_custom_call.1} parent=1 // pred_region
      %s26 = ssub.s32 8192, 8192
      %27 = vsyncadd [#allocation3], %s26
      %s28 = sshll.u32 [#allocation2], 4
      %s29 = int_to_ptr.vmem [resolvable:$true] %s28
      %34 = dma.hbm_to_vmem [thread:$0]  %s5, 8192, %s29, [#allocation3], 128, 128, 8
    $region25: #{tpu_custom_call.1} parent=1 // pred_fallthru
      _
    // Predicated region
    $region26: #{tpu_custom_call.1} parent=1 // pred_check
      _
    $region27: #{tpu_custom_call.1} parent=1 // pred_check_branch
      %36 = sbr.rel (0) target = $region29
    $region28: #{tpu_custom_call.1} parent=1 // pred_region
      %37 = dma.done [#allocation3], 8192
    $region29: #{tpu_custom_call.1} parent=1 // pred_fallthru
      _
    %v38 = vld [vmem:[%s1] sm:$0xff]
    %v39 = vld [vmem:[%s1 + $0x8] sm:$0xff]
    %v40 = vld [vmem:[%s1 + $0x10] sm:$0xff]
    %v41 = vld [vmem:[%s1 + $0x18] sm:$0xff]
    %v42 = vld [vmem:[%s1 + $0x20] sm:$0xff]
    %v43 = vld [vmem:[%s1 + $0x28] sm:$0xff]
    %v44 = vld [vmem:[%s1 + $0x30] sm:$0xff]
    %v45 = vld [vmem:[%s1 + $0x38] sm:$0xff]
    %v46 = vld [vmem:[%s1 + $0x40] sm:$0xff]
    %v47 = vld [vmem:[%s1 + $0x48] sm:$0xff]
    %v48 = vld [vmem:[%s1 + $0x50] sm:$0xff]
    %v49 = vld [vmem:[%s1 + $0x58] sm:$0xff]
    %v50 = vld [vmem:[%s0] sm:$0xff]
    %v51 = vld [vmem:[%s0 + $0x8] sm:$0xff]
    %v52 = vld [vmem:[%s0 + $0x10] sm:$0xff]
    %v53 = vld [vmem:[%s0 + $0x18] sm:$0xff]
    %v54 = vld [vmem:[%s0 + $0x20] sm:$0xff]
    %v55 = vld [vmem:[%s0 + $0x28] sm:$0xff]
    %v56 = vld [vmem:[%s0 + $0x30] sm:$0xff]
    %v57 = vld [vmem:[%s0 + $0x38] sm:$0xff]
    %v58 = vld [vmem:[%s2] sm:$0xff]
    %v59 = vld [vmem:[%s2 + $0x8] sm:$0xff]
    %v60 = vld [vmem:[%s2 + $0x10] sm:$0xff]
    %v61 = vld [vmem:[%s2 + $0x18] sm:$0xff]
    %v62 = vld [vmem:[%s2 + $0x20] sm:$0xff]
    %v63 = vld [vmem:[%s2 + $0x28] sm:$0xff]
    %v64 = vld [vmem:[%s2 + $0x30] sm:$0xff]
    %v65 = vld [vmem:[%s2 + $0x38] sm:$0xff]
    %v66 = vld [vmem:[%s2 + $0x40] sm:$0xff]
    %v67 = vld [vmem:[%s2 + $0x48] sm:$0xff]
    %v68 = vld [vmem:[%s2 + $0x50] sm:$0xff]
    %v69 = vld [vmem:[%s2 + $0x58] sm:$0xff]
    %71 = vset.pattern.permute.xlu0 0
    %72 = vperm.xlu0 %71, %v58
    %v73 = vpop.permute.xlu0 %72
    %76 = vset.pattern.permute.xlu0 0
    %77 = vperm.xlu0 %76, %v59
    %v78 = vpop.permute.xlu0 %77
    %81 = vset.pattern.permute.xlu0 0
    %82 = vperm.xlu0 %81, %v60
    %v83 = vpop.permute.xlu0 %82
    %86 = vset.pattern.permute.xlu0 0
    %87 = vperm.xlu0 %86, %v61
    %v88 = vpop.permute.xlu0 %87
    %91 = vset.pattern.permute.xlu0 0
    %92 = vperm.xlu0 %91, %v62
    %v93 = vpop.permute.xlu0 %92
    %96 = vset.pattern.permute.xlu0 0
    %97 = vperm.xlu0 %96, %v63
    %v98 = vpop.permute.xlu0 %97
    %101 = vset.pattern.permute.xlu0 0
    %102 = vperm.xlu0 %101, %v64
    %v103 = vpop.permute.xlu0 %102
    %106 = vset.pattern.permute.xlu0 0
    %107 = vperm.xlu0 %106, %v65
    %v108 = vpop.permute.xlu0 %107
    %111 = vset.pattern.permute.xlu0 0
    %112 = vperm.xlu0 %111, %v66
    %v113 = vpop.permute.xlu0 %112
    %116 = vset.pattern.permute.xlu0 0
    %117 = vperm.xlu0 %116, %v67
    %v118 = vpop.permute.xlu0 %117
    %121 = vset.pattern.permute.xlu0 0
    %122 = vperm.xlu0 %121, %v68
    %v123 = vpop.permute.xlu0 %122
    %126 = vset.pattern.permute.xlu0 0
    %127 = vperm.xlu0 %126, %v69
    %v128 = vpop.permute.xlu0 %127
    %vm130 = vcmask 261120
    %v132 = vsel %vm130, %v38, 0
    %v135 = vsel %vm130, %v39, 0
    %v138 = vsel %vm130, %v40, 0
    %v141 = vsel %vm130, %v41, 0
    %v144 = vsel %vm130, %v42, 0
    %v147 = vsel %vm130, %v43, 0
    %v150 = vsel %vm130, %v44, 0
    %v153 = vsel %vm130, %v45, 0
    %v156 = vsel %vm130, %v46, 0
    %v159 = vsel %vm130, %v47, 0
    %v162 = vsel %vm130, %v48, 0
    %v165 = vsel %vm130, %v49, 0
    %167 = vmatprep.subr.mxu0 0.0
    %168 = vmatpush1.msra.mxu0 0.0
    %169 = vmatprep.subr.mxu0 0.0
    %170 = vmatpush1.msra.mxu0 0.0
    %171 = vmatprep.subr.mxu0 0.0
    %172 = vmatpush1.msra.mxu0 0.0
    %173 = vmatprep.subr.mxu0 0.0
    %174 = vmatpush1.msra.mxu0 0.0
    %175 = vmatprep.subr.mxu0 0.0
    %176 = vmatpush1.msra.mxu0 0.0
    %177 = vmatprep.subr.mxu0 0.0
    %178 = vmatpush1.msra.mxu0 0.0
    %179 = vmatprep.subr.mxu0 0.0
    %180 = vmatpush1.msra.mxu0 0.0
    %181 = vmatprep.subr.mxu0 0.0
    %182 = vmatpush1.msra.mxu0 0.0
    %183 = vmatprep.subr.mxu0 0.0
    %184 = vmatpush1.msra.mxu0 0.0
    %185 = vmatprep.subr.mxu0 0.0
    %186 = vmatpush1.msra.mxu0 0.0
    %187 = vmatprep.subr.mxu0 0.0
    %188 = vmatpush1.msra.mxu0 0.0
    %189 = vmatprep.subr.mxu0 0.0
    %190 = vmatpush1.msra.mxu0 0.0
    %191 = vmatprep.subr.mxu0 %v57
    %192 = vmatpush1.msra.mxu0 %v56
    %193 = vmatprep.subr.mxu0 %v55
    %194 = vmatpush1.msra.mxu0 %v54
    %195 = vmatprep.subr.mxu0 %v53
    %196 = vmatpush1.msra.mxu0 %v52
    %197 = vmatprep.subr.mxu0 %v51
    %198 = vmatpush1.msra.mxu0 %v50
    %199 = vmatprep.subr.mxu0 0.0
    %200 = vmatpush2.msra.mxu0 0.0
    %201 = vmatprep.subr.mxu0 0.0
    %202 = vmatpush2.msra.mxu0 0.0
    %203 = vmatprep.subr.mxu0 0.0
    %204 = vmatpush2.msra.mxu0 0.0
    %205 = vmatprep.subr.mxu0 0.0
    %206 = vmatpush2.msra.mxu0 0.0
    %207 = vmatprep.subr.mxu0 0.0
    %208 = vmatpush2.msra.mxu0 0.0
    %209 = vmatprep.subr.mxu0 0.0
    %210 = vmatpush2.msra.mxu0 0.0
    %211 = vmatprep.subr.mxu0 0.0
    %212 = vmatpush2.msra.mxu0 0.0
    %213 = vmatprep.subr.mxu0 0.0
    %214 = vmatpush2.msra.mxu0 0.0
    %215 = vmatprep.subr.mxu0 0.0
    %216 = vmatpush2.msra.mxu0 0.0
    %217 = vmatprep.subr.mxu0 0.0
    %218 = vmatpush2.msra.mxu0 0.0
    %219 = vmatprep.subr.mxu0 0.0
    %220 = vmatpush2.msra.mxu0 0.0
    %221 = vmatprep.subr.mxu0 0.0
    %222 = vmatpush2.msra.mxu0 0.0
    %223 = vmatprep.subr.mxu0 0.0
    %224 = vmatpush2.msra.mxu0 0.0
    %225 = vmatprep.subr.mxu0 0.0
    %226 = vmatpush2.msra.mxu0 0.0
    %227 = vmatprep.subr.mxu0 0.0
    %228 = vmatpush2.msra.mxu0 0.0
    %229 = vmatprep.subr.mxu0 0.0
    %230 = vmatpush2.msra.mxu0 0.0
    %231 = vmatprep.mubr.f32.mxu0 0.0
    %232 = vmatmul.mubr.f32.gmra.mxu0 %v132
    %v233 = vpop.f32.mrf.mxu0
    %v234 = vadd.f32 %v73, %v233
    %v235 = vpop.f32.mrf.mxu0
    %v236 = vadd.f32 %v73, %v235
    %237 = vmatprep.mubr.f32.mxu0 0.0
    %238 = vmatmul.mubr.f32.gmra.mxu0 %v135
    %v239 = vpop.f32.mrf.mxu0
    %v240 = vadd.f32 %v78, %v239
    %v241 = vpop.f32.mrf.mxu0
    %v242 = vadd.f32 %v78, %v241
    %243 = vmatprep.mubr.f32.mxu0 0.0
    %244 = vmatmul.mubr.f32.gmra.mxu0 %v138
    %v245 = vpop.f32.mrf.mxu0
    %v246 = vadd.f32 %v83, %v245
    %v247 = vpop.f32.mrf.mxu0
    %v248 = vadd.f32 %v83, %v247
    %249 = vmatprep.mubr.f32.mxu0 0.0
    %250 = vmatmul.mubr.f32.gmra.mxu0 %v141
    %v251 = vpop.f32.mrf.mxu0
    %v252 = vadd.f32 %v88, %v251
    %v253 = vpop.f32.mrf.mxu0
    %v254 = vadd.f32 %v88, %v253
    %255 = vmatprep.mubr.f32.mxu0 0.0
    %256 = vmatmul.mubr.f32.gmra.mxu0 %v144
    %v257 = vpop.f32.mrf.mxu0
    %v258 = vadd.f32 %v93, %v257
    %v259 = vpop.f32.mrf.mxu0
    %v260 = vadd.f32 %v93, %v259
    %261 = vmatprep.mubr.f32.mxu0 0.0
    %262 = vmatmul.mubr.f32.gmra.mxu0 %v147
    %v263 = vpop.f32.mrf.mxu0
    %v264 = vadd.f32 %v98, %v263
    %v265 = vpop.f32.mrf.mxu0
    %v266 = vadd.f32 %v98, %v265
    %267 = vmatprep.mubr.f32.mxu0 0.0
    %268 = vmatmul.mubr.f32.gmra.mxu0 %v150
    %v269 = vpop.f32.mrf.mxu0
    %v270 = vadd.f32 %v103, %v269
    %v271 = vpop.f32.mrf.mxu0
    %v272 = vadd.f32 %v103, %v271
    %273 = vmatprep.mubr.f32.mxu0 0.0
    %274 = vmatmul.mubr.f32.gmra.mxu0 %v153
    %v275 = vpop.f32.mrf.mxu0
    %v276 = vadd.f32 %v108, %v275
    %v277 = vpop.f32.mrf.mxu0
    %v278 = vadd.f32 %v108, %v277
    %279 = vmatprep.mubr.f32.mxu0 0.0
    %280 = vmatmul.mubr.f32.gmra.mxu0 %v156
    %v281 = vpop.f32.mrf.mxu0
    %v282 = vadd.f32 %v113, %v281
    %v283 = vpop.f32.mrf.mxu0
    %v284 = vadd.f32 %v113, %v283
    %285 = vmatprep.mubr.f32.mxu0 0.0
    %286 = vmatmul.mubr.f32.gmra.mxu0 %v159
    %v287 = vpop.f32.mrf.mxu0
    %v288 = vadd.f32 %v118, %v287
    %v289 = vpop.f32.mrf.mxu0
    %v290 = vadd.f32 %v118, %v289
    %291 = vmatprep.mubr.f32.mxu0 0.0
    %292 = vmatmul.mubr.f32.gmra.mxu0 %v162
    %v293 = vpop.f32.mrf.mxu0
    %v294 = vadd.f32 %v123, %v293
    %v295 = vpop.f32.mrf.mxu0
    %v296 = vadd.f32 %v123, %v295
    %297 = vmatprep.mubr.f32.mxu0 0.0
    %298 = vmatmul.mubr.f32.gmra.mxu0 %v165
    %v299 = vpop.f32.mrf.mxu0
    %v300 = vadd.f32 %v128, %v299
    %v301 = vpop.f32.mrf.mxu0
    %v302 = vadd.f32 %v128, %v301
    %303 = vdwg.mxu0
    %v304 = vld [vmem:[#allocation2] sm:$0xff]
    %v305 = vld [vmem:[#allocation2 + $0x8] sm:$0xff]
    %v306 = vld [vmem:[#allocation2 + $0x10] sm:$0xff]
    %v307 = vld [vmem:[#allocation2 + $0x18] sm:$0xff]
    %v308 = vld [vmem:[#allocation2 + $0x20] sm:$0xff]
    %v309 = vld [vmem:[#allocation2 + $0x28] sm:$0xff]
    %v310 = vld [vmem:[#allocation2 + $0x30] sm:$0xff]
    %v311 = vld [vmem:[#allocation2 + $0x38] sm:$0xff]
    %v312 = vld [vmem:[#allocation2 + $0x40] sm:$0xff]
    %v313 = vld [vmem:[#allocation2 + $0x48] sm:$0xff]
    %v314 = vld [vmem:[#allocation2 + $0x50] sm:$0xff]
    %v315 = vld [vmem:[#allocation2 + $0x58] sm:$0xff]
    %v316 = vld [vmem:[#allocation2 + $0x60] sm:$0xff]
    %v317 = vld [vmem:[#allocation2 + $0x68] sm:$0xff]
    %v318 = vld [vmem:[#allocation2 + $0x70] sm:$0xff]
    %v319 = vld [vmem:[#allocation2 + $0x78] sm:$0xff]
    %320 = vxpose.xlu0.b32.start [1/16] %v234, 128
    %321 = vxpose.xlu0.b32.cont [2/16] 0.0, 128
    %322 = vxpose.xlu0.b32.cont [3/16] 0.0, 128
    %323 = vxpose.xlu0.b32.cont [4/16] 0.0, 128
    %324 = vxpose.xlu0.b32.cont [5/16] 0.0, 128
    %325 = vxpose.xlu0.b32.cont [6/16] 0.0, 128
    %326 = vxpose.xlu0.b32.cont [7/16] 0.0, 128
    %327 = vxpose.xlu0.b32.cont [8/16] 0.0, 128
    %328 = vxpose.xlu0.b32.cont [9/16] 0.0, 128
    %329 = vxpose.xlu0.b32.cont [10/16] 0.0, 128
    %330 = vxpose.xlu0.b32.cont [11/16] 0.0, 128
    %331 = vxpose.xlu0.b32.cont [12/16] 0.0, 128
    %332 = vxpose.xlu0.b32.cont [13/16] 0.0, 128
    %333 = vxpose.xlu0.b32.cont [14/16] 0.0, 128
    %334 = vxpose.xlu0.b32.cont [15/16] 0.0, 128
    %335 = vxpose.xlu0.b32.end [16/16] 0.0, 128
    %v336 = vpop.trf.xlu0
    %v337 = vpop.trf.xlu0
    %v338 = vpop.trf.xlu0
    %v339 = vpop.trf.xlu0
    %v340 = vpop.trf.xlu0
    %v341 = vpop.trf.xlu0
    %v342 = vpop.trf.xlu0
    %v343 = vpop.trf.xlu0
    %v344 = vpop.trf.xlu0
    %v345 = vpop.trf.xlu0
    %v346 = vpop.trf.xlu0
    %v347 = vpop.trf.xlu0
    %v348 = vpop.trf.xlu0
    %v349 = vpop.trf.xlu0
    %v350 = vpop.trf.xlu0
    %v351 = vpop.trf.xlu0
    %vm352 = vcmask 64512
    %v354 = vsel %vm352, %v336, 0
    %v357 = vsel %vm352, %v337, 0
    %v360 = vsel %vm352, %v338, 0
    %v363 = vsel %vm352, %v339, 0
    %v366 = vsel %vm352, %v340, 0
    %v369 = vsel %vm352, %v341, 0
    %v372 = vsel %vm352, %v342, 0
    %v375 = vsel %vm352, %v343, 0
    %v378 = vsel %vm352, %v344, 0
    %v381 = vsel %vm352, %v345, 0
    %v384 = vsel %vm352, %v346, 0
    %v387 = vsel %vm352, %v347, 0
    %v390 = vsel %vm352, %v348, 0
    %v393 = vsel %vm352, %v349, 0
    %v396 = vsel %vm352, %v350, 0
    %v399 = vsel %vm352, %v351, 0
    %401 = vmatprep.subr.mxu0 0.0
    %402 = vmatpush1.msra.mxu0 0.0
    %403 = vmatprep.subr.mxu0 0.0
    %404 = vmatpush1.msra.mxu0 0.0
    %405 = vmatprep.subr.mxu0 0.0
    %406 = vmatpush1.msra.mxu0 0.0
    %407 = vmatprep.subr.mxu0 0.0
    %408 = vmatpush1.msra.mxu0 0.0
    %409 = vmatprep.subr.mxu0 0.0
    %410 = vmatpush1.msra.mxu0 0.0
    %411 = vmatprep.subr.mxu0 0.0
    %412 = vmatpush1.msra.mxu0 0.0
    %413 = vmatprep.subr.mxu0 0.0
    %414 = vmatpush1.msra.mxu0 0.0
    %415 = vmatprep.subr.mxu0 0.0
    %416 = vmatpush1.msra.mxu0 0.0
    %417 = vmatprep.subr.mxu0 0.0
    %418 = vmatpush1.msra.mxu0 0.0
    %419 = vmatprep.subr.mxu0 0.0
    %420 = vmatpush1.msra.mxu0 0.0
    %421 = vmatprep.subr.mxu0 0.0
    %422 = vmatpush1.msra.mxu0 0.0
    %423 = vmatprep.subr.mxu0 0.0
    %424 = vmatpush1.msra.mxu0 0.0
    %425 = vmatprep.subr.mxu0 0.0
    %426 = vmatpush1.msra.mxu0 0.0
    %427 = vmatprep.subr.mxu0 0.0
    %428 = vmatpush1.msra.mxu0 0.0
    %429 = vmatprep.subr.mxu0 0.0
    %430 = vmatpush1.msra.mxu0 0.0
    %431 = vmatprep.subr.mxu0 0.0
    %432 = vmatpush1.msra.mxu0 %v258
    %433 = vmatprep.subr.mxu0 0.0
    %434 = vmatpush2.msra.mxu0 0.0
    %435 = vmatprep.subr.mxu0 0.0
    %436 = vmatpush2.msra.mxu0 0.0
    %437 = vmatprep.subr.mxu0 0.0
    %438 = vmatpush2.msra.mxu0 0.0
    %439 = vmatprep.subr.mxu0 0.0
    %440 = vmatpush2.msra.mxu0 0.0
    %441 = vmatprep.subr.mxu0 0.0
    %442 = vmatpush2.msra.mxu0 0.0
    %443 = vmatprep.subr.mxu0 0.0
    %444 = vmatpush2.msra.mxu0 0.0
    %445 = vmatprep.subr.mxu0 0.0
    %446 = vmatpush2.msra.mxu0 0.0
    %447 = vmatprep.subr.mxu0 0.0
    %448 = vmatpush2.msra.mxu0 0.0
    %449 = vmatprep.subr.mxu0 0.0
    %450 = vmatpush2.msra.mxu0 0.0
    %451 = vmatprep.subr.mxu0 0.0
    %452 = vmatpush2.msra.mxu0 0.0
    %453 = vmatprep.subr.mxu0 0.0
    %454 = vmatpush2.msra.mxu0 0.0
    %455 = vmatprep.subr.mxu0 0.0
    %456 = vmatpush2.msra.mxu0 0.0
    %457 = vmatprep.subr.mxu0 0.0
    %458 = vmatpush2.msra.mxu0 0.0
    %459 = vmatprep.subr.mxu0 0.0
    %460 = vmatpush2.msra.mxu0 0.0
    %461 = vmatprep.subr.mxu0 0.0
    %462 = vmatpush2.msra.mxu0 0.0
    %463 = vmatprep.subr.mxu0 0.0
    %464 = vmatpush2.msra.mxu0 0.0
    %465 = vmatprep.mubr.f32.mxu0 0.0
    %466 = vmatmul.mubr.f32.gmra.mxu0 %v354
    %v467 = vpop.f32.mrf.mxu0
    %v468 = vadd.f32 %v304, %v467
    %v469 = vpop.f32.mrf.mxu0
    %470 = vmatprep.mubr.f32.mxu0 0.0
    %471 = vmatmul.mubr.f32.gmra.mxu0 %v357
    %v472 = vpop.f32.mrf.mxu0
    %v473 = vadd.f32 %v305, %v472
    %v474 = vpop.f32.mrf.mxu0
    %475 = vmatprep.mubr.f32.mxu0 0.0
    %476 = vmatmul.mubr.f32.gmra.mxu0 %v360
    %v477 = vpop.f32.mrf.mxu0
    %v478 = vadd.f32 %v306, %v477
    %v479 = vpop.f32.mrf.mxu0
    %480 = vmatprep.mubr.f32.mxu0 0.0
    %481 = vmatmul.mubr.f32.gmra.mxu0 %v363
    %v482 = vpop.f32.mrf.mxu0
    %v483 = vadd.f32 %v307, %v482
    %v484 = vpop.f32.mrf.mxu0
    %485 = vmatprep.mubr.f32.mxu0 0.0
    %486 = vmatmul.mubr.f32.gmra.mxu0 %v366
    %v487 = vpop.f32.mrf.mxu0
    %v488 = vadd.f32 %v308, %v487
    %v489 = vpop.f32.mrf.mxu0
    %490 = vmatprep.mubr.f32.mxu0 0.0
    %491 = vmatmul.mubr.f32.gmra.mxu0 %v369
    %v492 = vpop.f32.mrf.mxu0
    %v493 = vadd.f32 %v309, %v492
    %v494 = vpop.f32.mrf.mxu0
    %495 = vmatprep.mubr.f32.mxu0 0.0
    %496 = vmatmul.mubr.f32.gmra.mxu0 %v372
    %v497 = vpop.f32.mrf.mxu0
    %v498 = vadd.f32 %v310, %v497
    %v499 = vpop.f32.mrf.mxu0
    %500 = vmatprep.mubr.f32.mxu0 0.0
    %501 = vmatmul.mubr.f32.gmra.mxu0 %v375
    %v502 = vpop.f32.mrf.mxu0
    %v503 = vadd.f32 %v311, %v502
    %v504 = vpop.f32.mrf.mxu0
    %505 = vmatprep.mubr.f32.mxu0 0.0
    %506 = vmatmul.mubr.f32.gmra.mxu0 %v378
    %v507 = vpop.f32.mrf.mxu0
    %v508 = vadd.f32 %v312, %v507
    %v509 = vpop.f32.mrf.mxu0
    %510 = vmatprep.mubr.f32.mxu0 0.0
    %511 = vmatmul.mubr.f32.gmra.mxu0 %v381
    %v512 = vpop.f32.mrf.mxu0
    %v513 = vadd.f32 %v313, %v512
    %v514 = vpop.f32.mrf.mxu0
    %515 = vmatprep.mubr.f32.mxu0 0.0
    %516 = vmatmul.mubr.f32.gmra.mxu0 %v384
    %v517 = vpop.f32.mrf.mxu0
    %v518 = vadd.f32 %v314, %v517
    %v519 = vpop.f32.mrf.mxu0
    %520 = vmatprep.mubr.f32.mxu0 0.0
    %521 = vmatmul.mubr.f32.gmra.mxu0 %v387
    %v522 = vpop.f32.mrf.mxu0
    %v523 = vadd.f32 %v315, %v522
    %v524 = vpop.f32.mrf.mxu0
    %525 = vmatprep.mubr.f32.mxu0 0.0
    %526 = vmatmul.mubr.f32.gmra.mxu0 %v390
    %v527 = vpop.f32.mrf.mxu0
    %v528 = vadd.f32 %v316, %v527
    %v529 = vpop.f32.mrf.mxu0
    %530 = vmatprep.mubr.f32.mxu0 0.0
    %531 = vmatmul.mubr.f32.gmra.mxu0 %v393
    %v532 = vpop.f32.mrf.mxu0
    %v533 = vadd.f32 %v317, %v532
    %v534 = vpop.f32.mrf.mxu0
    %535 = vmatprep.mubr.f32.mxu0 0.0
    %536 = vmatmul.mubr.f32.gmra.mxu0 %v396
    %v537 = vpop.f32.mrf.mxu0
    %v538 = vadd.f32 %v318, %v537
    %v539 = vpop.f32.mrf.mxu0
    %540 = vmatprep.mubr.f32.mxu0 0.0
    %541 = vmatmul.mubr.f32.gmra.mxu0 %v399
    %v542 = vpop.f32.mrf.mxu0
    %v543 = vadd.f32 %v319, %v542
    %v544 = vpop.f32.mrf.mxu0
    %545 = vdwg.mxu0
    %546 = vmax.xlane.f32.xlu0 %v468
    %v547 = vpop.xlane.xlu0 %546
    %548 = vmax.xlane.f32.xlu0 %v473
    %v549 = vpop.xlane.xlu0 %548
    %550 = vmax.xlane.f32.xlu0 %v478
    %v551 = vpop.xlane.xlu0 %550
    %552 = vmax.xlane.f32.xlu0 %v483
    %v553 = vpop.xlane.xlu0 %552
    %554 = vmax.xlane.f32.xlu0 %v488
    %v555 = vpop.xlane.xlu0 %554
    %556 = vmax.xlane.f32.xlu0 %v493
    %v557 = vpop.xlane.xlu0 %556
    %558 = vmax.xlane.f32.xlu0 %v498
    %v559 = vpop.xlane.xlu0 %558
    %560 = vmax.xlane.f32.xlu0 %v503
    %v561 = vpop.xlane.xlu0 %560
    %562 = vmax.xlane.f32.xlu0 %v508
    %v563 = vpop.xlane.xlu0 %562
    %564 = vmax.xlane.f32.xlu0 %v513
    %v565 = vpop.xlane.xlu0 %564
    %566 = vmax.xlane.f32.xlu0 %v518
    %v567 = vpop.xlane.xlu0 %566
    %568 = vmax.xlane.f32.xlu0 %v523
    %v569 = vpop.xlane.xlu0 %568
    %570 = vmax.xlane.f32.xlu0 %v528
    %v571 = vpop.xlane.xlu0 %570
    %572 = vmax.xlane.f32.xlu0 %v533
    %v573 = vpop.xlane.xlu0 %572
    %574 = vmax.xlane.f32.xlu0 %v538
    %v575 = vpop.xlane.xlu0 %574
    %576 = vmax.xlane.f32.xlu0 %v543
    %v577 = vpop.xlane.xlu0 %576
    %v578 = vsub.f32 %v468, %v547
    %v579 = vsub.f32 %v473, %v549
    %v580 = vsub.f32 %v478, %v551
    %v581 = vsub.f32 %v483, %v553
    %v582 = vsub.f32 %v488, %v555
    %v583 = vsub.f32 %v493, %v557
    %v584 = vsub.f32 %v498, %v559
    %v585 = vsub.f32 %v503, %v561
    %v586 = vsub.f32 %v508, %v563
    %v587 = vsub.f32 %v513, %v565
    %v588 = vsub.f32 %v518, %v567
    %v589 = vsub.f32 %v523, %v569
    %v590 = vsub.f32 %v528, %v571
    %v591 = vsub.f32 %v533, %v573
    %v592 = vsub.f32 %v538, %v575
    %v593 = vsub.f32 %v543, %v577
    %v594 = vmul.f32 %v578, 1.442695
    %v595 = vpow.pop %v594
    %v596 = vmul.f32 %v579, 1.442695
    %v597 = vpow.pop %v596
    %v598 = vmul.f32 %v580, 1.442695
    %v599 = vpow.pop %v598
    %v600 = vmul.f32 %v581, 1.442695
    %v601 = vpow.pop %v600
    %v602 = vmul.f32 %v582, 1.442695
    %v603 = vpow.pop %v602
    %v604 = vmul.f32 %v583, 1.442695
    %v605 = vpow.pop %v604
    %v606 = vmul.f32 %v584, 1.442695
    %v607 = vpow.pop %v606
    %v608 = vmul.f32 %v585, 1.442695
    %v609 = vpow.pop %v608
    %v610 = vmul.f32 %v586, 1.442695
    %v611 = vpow.pop %v610
    %v612 = vmul.f32 %v587, 1.442695
    %v613 = vpow.pop %v612
    %v614 = vmul.f32 %v588, 1.442695
    %v615 = vpow.pop %v614
    %v616 = vmul.f32 %v589, 1.442695
    %v617 = vpow.pop %v616
    %v618 = vmul.f32 %v590, 1.442695
    %v619 = vpow.pop %v618
    %v620 = vmul.f32 %v591, 1.442695
    %v621 = vpow.pop %v620
    %v622 = vmul.f32 %v592, 1.442695
    %v623 = vpow.pop %v622
    %v624 = vmul.f32 %v593, 1.442695
    %v625 = vpow.pop %v624
    %626 = vadd.xlane.f32.xlu0 %v595
    %v627 = vpop.xlane.xlu0 %626
    %628 = vadd.xlane.f32.xlu0 %v597
    %v629 = vpop.xlane.xlu0 %628
    %630 = vadd.xlane.f32.xlu0 %v599
    %v631 = vpop.xlane.xlu0 %630
    %632 = vadd.xlane.f32.xlu0 %v601
    %v633 = vpop.xlane.xlu0 %632
    %634 = vadd.xlane.f32.xlu0 %v603
    %v635 = vpop.xlane.xlu0 %634
    %636 = vadd.xlane.f32.xlu0 %v605
    %v637 = vpop.xlane.xlu0 %636
    %638 = vadd.xlane.f32.xlu0 %v607
    %v639 = vpop.xlane.xlu0 %638
    %640 = vadd.xlane.f32.xlu0 %v609
    %v641 = vpop.xlane.xlu0 %640
    %642 = vadd.xlane.f32.xlu0 %v611
    %v643 = vpop.xlane.xlu0 %642
    %644 = vadd.xlane.f32.xlu0 %v613
    %v645 = vpop.xlane.xlu0 %644
    %646 = vadd.xlane.f32.xlu0 %v615
    %v647 = vpop.xlane.xlu0 %646
    %648 = vadd.xlane.f32.xlu0 %v617
    %v649 = vpop.xlane.xlu0 %648
    %650 = vadd.xlane.f32.xlu0 %v619
    %v651 = vpop.xlane.xlu0 %650
    %652 = vadd.xlane.f32.xlu0 %v621
    %v653 = vpop.xlane.xlu0 %652
    %654 = vadd.xlane.f32.xlu0 %v623
    %v655 = vpop.xlane.xlu0 %654
    %656 = vadd.xlane.f32.xlu0 %v625
    %v657 = vpop.xlane.xlu0 %656
    %v658 = vrcp.pop %v627
    %v659 = vmul.f32 %v595, %v658
    %v660 = vrcp.pop %v629
    %v661 = vmul.f32 %v597, %v660
    %v662 = vrcp.pop %v631
    %v663 = vmul.f32 %v599, %v662
    %v664 = vrcp.pop %v633
    %v665 = vmul.f32 %v601, %v664
    %v666 = vrcp.pop %v635
    %v667 = vmul.f32 %v603, %v666
    %v668 = vrcp.pop %v637
    %v669 = vmul.f32 %v605, %v668
    %v670 = vrcp.pop %v639
    %v671 = vmul.f32 %v607, %v670
    %v672 = vrcp.pop %v641
    %v673 = vmul.f32 %v609, %v672
    %v674 = vrcp.pop %v643
    %v675 = vmul.f32 %v611, %v674
    %v676 = vrcp.pop %v645
    %v677 = vmul.f32 %v613, %v676
    %v678 = vrcp.pop %v647
    %v679 = vmul.f32 %v615, %v678
    %v680 = vrcp.pop %v649
    %v681 = vmul.f32 %v617, %v680
    %v682 = vrcp.pop %v651
    %v683 = vmul.f32 %v619, %v682
    %v684 = vrcp.pop %v653
    %v685 = vmul.f32 %v621, %v684
    %v686 = vrcp.pop %v655
    %v687 = vmul.f32 %v623, %v686
    %v688 = vrcp.pop %v657
    %v689 = vmul.f32 %v625, %v688
    %690 = vmatprep.subr.mxu0 0.0
    %691 = vmatpush1.xpose.msra.mxu0 %v689
    %692 = vmatprep.subr.mxu0 0.0
    %693 = vmatpush1.xpose.msra.mxu0 %v687
    %694 = vmatprep.subr.mxu0 0.0
    %695 = vmatpush1.xpose.msra.mxu0 %v685
    %696 = vmatprep.subr.mxu0 0.0
    %697 = vmatpush1.xpose.msra.mxu0 %v683
    %698 = vmatprep.subr.mxu0 0.0
    %699 = vmatpush1.xpose.msra.mxu0 %v681
    %700 = vmatprep.subr.mxu0 0.0
    %701 = vmatpush1.xpose.msra.mxu0 %v679
    %702 = vmatprep.subr.mxu0 0.0
    %703 = vmatpush1.xpose.msra.mxu0 %v677
    %704 = vmatprep.subr.mxu0 0.0
    %705 = vmatpush1.xpose.msra.mxu0 %v675
    %706 = vmatprep.subr.mxu0 0.0
    %707 = vmatpush1.xpose.msra.mxu0 %v673
    %708 = vmatprep.subr.mxu0 0.0
    %709 = vmatpush1.xpose.msra.mxu0 %v671
    %710 = vmatprep.subr.mxu0 0.0
    %711 = vmatpush1.xpose.msra.mxu0 %v669
    %712 = vmatprep.subr.mxu0 0.0
    %713 = vmatpush1.xpose.msra.mxu0 %v667
    %714 = vmatprep.subr.mxu0 0.0
    %715 = vmatpush1.xpose.msra.mxu0 %v665
    %716 = vmatprep.subr.mxu0 0.0
    %717 = vmatpush1.xpose.msra.mxu0 %v663
    %718 = vmatprep.subr.mxu0 0.0
    %719 = vmatpush1.xpose.msra.mxu0 %v661
    %720 = vmatprep.subr.mxu0 0.0
    %721 = vmatpush1.xpose.msra.mxu0 %v659
    %722 = vmatprep.subr.mxu0 0.0
    %723 = vmatpush2.xpose.msra.mxu0 0.0
    %724 = vmatprep.subr.mxu0 0.0
    %725 = vmatpush2.xpose.msra.mxu0 0.0
    %726 = vmatprep.subr.mxu0 0.0
    %727 = vmatpush2.xpose.msra.mxu0 0.0
    %728 = vmatprep.subr.mxu0 0.0
    %729 = vmatpush2.xpose.msra.mxu0 0.0
    %730 = vmatprep.subr.mxu0 0.0
    %731 = vmatpush2.xpose.msra.mxu0 0.0
    %732 = vmatprep.subr.mxu0 0.0
    %733 = vmatpush2.xpose.msra.mxu0 0.0
    %734 = vmatprep.subr.mxu0 0.0
    %735 = vmatpush2.xpose.msra.mxu0 0.0
    %736 = vmatprep.subr.mxu0 0.0
    %737 = vmatpush2.xpose.msra.mxu0 0.0
    %738 = vmatprep.subr.mxu0 0.0
    %739 = vmatpush2.xpose.msra.mxu0 0.0
    %740 = vmatprep.subr.mxu0 0.0
    %741 = vmatpush2.xpose.msra.mxu0 0.0
    %742 = vmatprep.subr.mxu0 0.0
    %743 = vmatpush2.xpose.msra.mxu0 0.0
    %744 = vmatprep.subr.mxu0 0.0
    %745 = vmatpush2.xpose.msra.mxu0 0.0
    %746 = vmatprep.subr.mxu0 0.0
    %747 = vmatpush2.xpose.msra.mxu0 0.0
    %748 = vmatprep.subr.mxu0 0.0
    %749 = vmatpush2.xpose.msra.mxu0 0.0
    %750 = vmatprep.subr.mxu0 0.0
    %751 = vmatpush2.xpose.msra.mxu0 0.0
    %752 = vmatprep.subr.mxu0 0.0
    %753 = vmatpush2.xpose.msra.mxu0 0.0
    %754 = vmatprep.mubr.f32.mxu0 0.0
    %755 = vmatmul.mubr.f32.gmra.mxu0 %v282
    %v756 = vpop.f32.mrf.mxu0
    %v757 = vadd.f32 0.0, %v756
    %v758 = vpop.f32.mrf.mxu0
    %759 = vdwg.mxu0
    %760 = vxpose.xlu0.b32.start [1/16] %v236, 128
    %761 = vxpose.xlu0.b32.cont [2/16] 0.0, 128
    %762 = vxpose.xlu0.b32.cont [3/16] 0.0, 128
    %763 = vxpose.xlu0.b32.cont [4/16] 0.0, 128
    %764 = vxpose.xlu0.b32.cont [5/16] 0.0, 128
    %765 = vxpose.xlu0.b32.cont [6/16] 0.0, 128
    %766 = vxpose.xlu0.b32.cont [7/16] 0.0, 128
    %767 = vxpose.xlu0.b32.cont [8/16] 0.0, 128
    %768 = vxpose.xlu0.b32.cont [9/16] 0.0, 128
    %769 = vxpose.xlu0.b32.cont [10/16] 0.0, 128
    %770 = vxpose.xlu0.b32.cont [11/16] 0.0, 128
    %771 = vxpose.xlu0.b32.cont [12/16] 0.0, 128
    %772 = vxpose.xlu0.b32.cont [13/16] 0.0, 128
    %773 = vxpose.xlu0.b32.cont [14/16] 0.0, 128
    %774 = vxpose.xlu0.b32.cont [15/16] 0.0, 128
    %775 = vxpose.xlu0.b32.end [16/16] 0.0, 128
    %v776 = vpop.trf.xlu0
    %v777 = vpop.trf.xlu0
    %v778 = vpop.trf.xlu0
    %v779 = vpop.trf.xlu0
    %v780 = vpop.trf.xlu0
    %v781 = vpop.trf.xlu0
    %v782 = vpop.trf.xlu0
    %v783 = vpop.trf.xlu0
    %v784 = vpop.trf.xlu0
    %v785 = vpop.trf.xlu0
    %v786 = vpop.trf.xlu0
    %v787 = vpop.trf.xlu0
    %v788 = vpop.trf.xlu0
    %v789 = vpop.trf.xlu0
    %v790 = vpop.trf.xlu0
    %v791 = vpop.trf.xlu0
    %v793 = vsel %vm352, %v776, 0
    %v796 = vsel %vm352, %v777, 0
    %v799 = vsel %vm352, %v778, 0
    %v802 = vsel %vm352, %v779, 0
    %v805 = vsel %vm352, %v780, 0
    %v808 = vsel %vm352, %v781, 0
    %v811 = vsel %vm352, %v782, 0
    %v814 = vsel %vm352, %v783, 0
    %v817 = vsel %vm352, %v784, 0
    %v820 = vsel %vm352, %v785, 0
    %v823 = vsel %vm352, %v786, 0
    %v826 = vsel %vm352, %v787, 0
    %v829 = vsel %vm352, %v788, 0
    %v832 = vsel %vm352, %v789, 0
    %v835 = vsel %vm352, %v790, 0
    %v838 = vsel %vm352, %v791, 0
    %840 = vmatprep.subr.mxu0 0.0
    %841 = vmatpush1.msra.mxu0 0.0
    %842 = vmatprep.subr.mxu0 0.0
    %843 = vmatpush1.msra.mxu0 0.0
    %844 = vmatprep.subr.mxu0 0.0
    %845 = vmatpush1.msra.mxu0 0.0
    %846 = vmatprep.subr.mxu0 0.0
    %847 = vmatpush1.msra.mxu0 0.0
    %848 = vmatprep.subr.mxu0 0.0
    %849 = vmatpush1.msra.mxu0 0.0
    %850 = vmatprep.subr.mxu0 0.0
    %851 = vmatpush1.msra.mxu0 0.0
    %852 = vmatprep.subr.mxu0 0.0
    %853 = vmatpush1.msra.mxu0 0.0
    %854 = vmatprep.subr.mxu0 0.0
    %855 = vmatpush1.msra.mxu0 0.0
    %856 = vmatprep.subr.mxu0 0.0
    %857 = vmatpush1.msra.mxu0 0.0
    %858 = vmatprep.subr.mxu0 0.0
    %859 = vmatpush1.msra.mxu0 0.0
    %860 = vmatprep.subr.mxu0 0.0
    %861 = vmatpush1.msra.mxu0 0.0
    %862 = vmatprep.subr.mxu0 0.0
    %863 = vmatpush1.msra.mxu0 0.0
    %864 = vmatprep.subr.mxu0 0.0
    %865 = vmatpush1.msra.mxu0 0.0
    %866 = vmatprep.subr.mxu0 0.0
    %867 = vmatpush1.msra.mxu0 0.0
    %868 = vmatprep.subr.mxu0 0.0
    %869 = vmatpush1.msra.mxu0 0.0
    %870 = vmatprep.subr.mxu0 0.0
    %871 = vmatpush1.msra.mxu0 %v260
    %872 = vmatprep.subr.mxu0 0.0
    %873 = vmatpush2.msra.mxu0 0.0
    %874 = vmatprep.subr.mxu0 0.0
    %875 = vmatpush2.msra.mxu0 0.0
    %876 = vmatprep.subr.mxu0 0.0
    %877 = vmatpush2.msra.mxu0 0.0
    %878 = vmatprep.subr.mxu0 0.0
    %879 = vmatpush2.msra.mxu0 0.0
    %880 = vmatprep.subr.mxu0 0.0
    %881 = vmatpush2.msra.mxu0 0.0
    %882 = vmatprep.subr.mxu0 0.0
    %883 = vmatpush2.msra.mxu0 0.0
    %884 = vmatprep.subr.mxu0 0.0
    %885 = vmatpush2.msra.mxu0 0.0
    %886 = vmatprep.subr.mxu0 0.0
    %887 = vmatpush2.msra.mxu0 0.0
    %888 = vmatprep.subr.mxu0 0.0
    %889 = vmatpush2.msra.mxu0 0.0
    %890 = vmatprep.subr.mxu0 0.0
    %891 = vmatpush2.msra.mxu0 0.0
    %892 = vmatprep.subr.mxu0 0.0
    %893 = vmatpush2.msra.mxu0 0.0
    %894 = vmatprep.subr.mxu0 0.0
    %895 = vmatpush2.msra.mxu0 0.0
    %896 = vmatprep.subr.mxu0 0.0
    %897 = vmatpush2.msra.mxu0 0.0
    %898 = vmatprep.subr.mxu0 0.0
    %899 = vmatpush2.msra.mxu0 0.0
    %900 = vmatprep.subr.mxu0 0.0
    %901 = vmatpush2.msra.mxu0 0.0
    %902 = vmatprep.subr.mxu0 0.0
    %903 = vmatpush2.msra.mxu0 0.0
    %904 = vmatprep.mubr.f32.mxu0 0.0
    %905 = vmatmul.mubr.f32.gmra.mxu0 %v793
    %v906 = vpop.f32.mrf.mxu0
    %v907 = vadd.f32 %v304, %v906
    %v908 = vpop.f32.mrf.mxu0
    %909 = vmatprep.mubr.f32.mxu0 0.0
    %910 = vmatmul.mubr.f32.gmra.mxu0 %v796
    %v911 = vpop.f32.mrf.mxu0
    %v912 = vadd.f32 %v305, %v911
    %v913 = vpop.f32.mrf.mxu0
    %914 = vmatprep.mubr.f32.mxu0 0.0
    %915 = vmatmul.mubr.f32.gmra.mxu0 %v799
    %v916 = vpop.f32.mrf.mxu0
    %v917 = vadd.f32 %v306, %v916
    %v918 = vpop.f32.mrf.mxu0
    %919 = vmatprep.mubr.f32.mxu0 0.0
    %920 = vmatmul.mubr.f32.gmra.mxu0 %v802
    %v921 = vpop.f32.mrf.mxu0
    %v922 = vadd.f32 %v307, %v921
    %v923 = vpop.f32.mrf.mxu0
    %924 = vmatprep.mubr.f32.mxu0 0.0
    %925 = vmatmul.mubr.f32.gmra.mxu0 %v805
    %v926 = vpop.f32.mrf.mxu0
    %v927 = vadd.f32 %v308, %v926
    %v928 = vpop.f32.mrf.mxu0
    %929 = vmatprep.mubr.f32.mxu0 0.0
    %930 = vmatmul.mubr.f32.gmra.mxu0 %v808
    %v931 = vpop.f32.mrf.mxu0
    %v932 = vadd.f32 %v309, %v931
    %v933 = vpop.f32.mrf.mxu0
    %934 = vmatprep.mubr.f32.mxu0 0.0
    %935 = vmatmul.mubr.f32.gmra.mxu0 %v811
    %v936 = vpop.f32.mrf.mxu0
    %v937 = vadd.f32 %v310, %v936
    %v938 = vpop.f32.mrf.mxu0
    %939 = vmatprep.mubr.f32.mxu0 0.0
    %940 = vmatmul.mubr.f32.gmra.mxu0 %v814
    %v941 = vpop.f32.mrf.mxu0
    %v942 = vadd.f32 %v311, %v941
    %v943 = vpop.f32.mrf.mxu0
    %944 = vmatprep.mubr.f32.mxu0 0.0
    %945 = vmatmul.mubr.f32.gmra.mxu0 %v817
    %v946 = vpop.f32.mrf.mxu0
    %v947 = vadd.f32 %v312, %v946
    %v948 = vpop.f32.mrf.mxu0
    %949 = vmatprep.mubr.f32.mxu0 0.0
    %950 = vmatmul.mubr.f32.gmra.mxu0 %v820
    %v951 = vpop.f32.mrf.mxu0
    %v952 = vadd.f32 %v313, %v951
    %v953 = vpop.f32.mrf.mxu0
    %954 = vmatprep.mubr.f32.mxu0 0.0
    %955 = vmatmul.mubr.f32.gmra.mxu0 %v823
    %v956 = vpop.f32.mrf.mxu0
    %v957 = vadd.f32 %v314, %v956
    %v958 = vpop.f32.mrf.mxu0
    %959 = vmatprep.mubr.f32.mxu0 0.0
    %960 = vmatmul.mubr.f32.gmra.mxu0 %v826
    %v961 = vpop.f32.mrf.mxu0
    %v962 = vadd.f32 %v315, %v961
    %v963 = vpop.f32.mrf.mxu0
    %964 = vmatprep.mubr.f32.mxu0 0.0
    %965 = vmatmul.mubr.f32.gmra.mxu0 %v829
    %v966 = vpop.f32.mrf.mxu0
    %v967 = vadd.f32 %v316, %v966
    %v968 = vpop.f32.mrf.mxu0
    %969 = vmatprep.mubr.f32.mxu0 0.0
    %970 = vmatmul.mubr.f32.gmra.mxu0 %v832
    %v971 = vpop.f32.mrf.mxu0
    %v972 = vadd.f32 %v317, %v971
    %v973 = vpop.f32.mrf.mxu0
    %974 = vmatprep.mubr.f32.mxu0 0.0
    %975 = vmatmul.mubr.f32.gmra.mxu0 %v835
    %v976 = vpop.f32.mrf.mxu0
    %v977 = vadd.f32 %v318, %v976
    %v978 = vpop.f32.mrf.mxu0
    %979 = vmatprep.mubr.f32.mxu0 0.0
    %980 = vmatmul.mubr.f32.gmra.mxu0 %v838
    %v981 = vpop.f32.mrf.mxu0
    %v982 = vadd.f32 %v319, %v981
    %v983 = vpop.f32.mrf.mxu0
    %984 = vdwg.mxu0
    %985 = vmax.xlane.f32.xlu0 %v907
    %v986 = vpop.xlane.xlu0 %985
    %987 = vmax.xlane.f32.xlu0 %v912
    %v988 = vpop.xlane.xlu0 %987
    %989 = vmax.xlane.f32.xlu0 %v917
    %v990 = vpop.xlane.xlu0 %989
    %991 = vmax.xlane.f32.xlu0 %v922
    %v992 = vpop.xlane.xlu0 %991
    %993 = vmax.xlane.f32.xlu0 %v927
    %v994 = vpop.xlane.xlu0 %993
    %995 = vmax.xlane.f32.xlu0 %v932
    %v996 = vpop.xlane.xlu0 %995
    %997 = vmax.xlane.f32.xlu0 %v937
    %v998 = vpop.xlane.xlu0 %997
    %999 = vmax.xlane.f32.xlu0 %v942
    %v1000 = vpop.xlane.xlu0 %999
    %1001 = vmax.xlane.f32.xlu0 %v947
    %v1002 = vpop.xlane.xlu0 %1001
    %1003 = vmax.xlane.f32.xlu0 %v952
    %v1004 = vpop.xlane.xlu0 %1003
    %1005 = vmax.xlane.f32.xlu0 %v957
    %v1006 = vpop.xlane.xlu0 %1005
    %1007 = vmax.xlane.f32.xlu0 %v962
    %v1008 = vpop.xlane.xlu0 %1007
    %1009 = vmax.xlane.f32.xlu0 %v967
    %v1010 = vpop.xlane.xlu0 %1009
    %1011 = vmax.xlane.f32.xlu0 %v972
    %v1012 = vpop.xlane.xlu0 %1011
    %1013 = vmax.xlane.f32.xlu0 %v977
    %v1014 = vpop.xlane.xlu0 %1013
    %1015 = vmax.xlane.f32.xlu0 %v982
    %v1016 = vpop.xlane.xlu0 %1015
    %v1017 = vsub.f32 %v907, %v986
    %v1018 = vsub.f32 %v912, %v988
    %v1019 = vsub.f32 %v917, %v990
    %v1020 = vsub.f32 %v922, %v992
    %v1021 = vsub.f32 %v927, %v994
    %v1022 = vsub.f32 %v932, %v996
    %v1023 = vsub.f32 %v937, %v998
    %v1024 = vsub.f32 %v942, %v1000
    %v1025 = vsub.f32 %v947, %v1002
    %v1026 = vsub.f32 %v952, %v1004
    %v1027 = vsub.f32 %v957, %v1006
    %v1028 = vsub.f32 %v962, %v1008
    %v1029 = vsub.f32 %v967, %v1010
    %v1030 = vsub.f32 %v972, %v1012
    %v1031 = vsub.f32 %v977, %v1014
    %v1032 = vsub.f32 %v982, %v1016
    %v1033 = vmul.f32 %v1017, 1.442695
    %v1034 = vpow.pop %v1033
    %v1035 = vmul.f32 %v1018, 1.442695
    %v1036 = vpow.pop %v1035
    %v1037 = vmul.f32 %v1019, 1.442695
    %v1038 = vpow.pop %v1037
    %v1039 = vmul.f32 %v1020, 1.442695
    %v1040 = vpow.pop %v1039
    %v1041 = vmul.f32 %v1021, 1.442695
    %v1042 = vpow.pop %v1041
    %v1043 = vmul.f32 %v1022, 1.442695
    %v1044 = vpow.pop %v1043
    %v1045 = vmul.f32 %v1023, 1.442695
    %v1046 = vpow.pop %v1045
    %v1047 = vmul.f32 %v1024, 1.442695
    %v1048 = vpow.pop %v1047
    %v1049 = vmul.f32 %v1025, 1.442695
    %v1050 = vpow.pop %v1049
    %v1051 = vmul.f32 %v1026, 1.442695
    %v1052 = vpow.pop %v1051
    %v1053 = vmul.f32 %v1027, 1.442695
    %v1054 = vpow.pop %v1053
    %v1055 = vmul.f32 %v1028, 1.442695
    %v1056 = vpow.pop %v1055
    %v1057 = vmul.f32 %v1029, 1.442695
    %v1058 = vpow.pop %v1057
    %v1059 = vmul.f32 %v1030, 1.442695
    %v1060 = vpow.pop %v1059
    %v1061 = vmul.f32 %v1031, 1.442695
    %v1062 = vpow.pop %v1061
    %v1063 = vmul.f32 %v1032, 1.442695
    %v1064 = vpow.pop %v1063
    %1065 = vadd.xlane.f32.xlu0 %v1034
    %v1066 = vpop.xlane.xlu0 %1065
    %1067 = vadd.xlane.f32.xlu0 %v1036
    %v1068 = vpop.xlane.xlu0 %1067
    %1069 = vadd.xlane.f32.xlu0 %v1038
    %v1070 = vpop.xlane.xlu0 %1069
    %1071 = vadd.xlane.f32.xlu0 %v1040
    %v1072 = vpop.xlane.xlu0 %1071
    %1073 = vadd.xlane.f32.xlu0 %v1042
    %v1074 = vpop.xlane.xlu0 %1073
    %1075 = vadd.xlane.f32.xlu0 %v1044
    %v1076 = vpop.xlane.xlu0 %1075
    %1077 = vadd.xlane.f32.xlu0 %v1046
    %v1078 = vpop.xlane.xlu0 %1077
    %1079 = vadd.xlane.f32.xlu0 %v1048
    %v1080 = vpop.xlane.xlu0 %1079
    %1081 = vadd.xlane.f32.xlu0 %v1050
    %v1082 = vpop.xlane.xlu0 %1081
    %1083 = vadd.xlane.f32.xlu0 %v1052
    %v1084 = vpop.xlane.xlu0 %1083
    %1085 = vadd.xlane.f32.xlu0 %v1054
    %v1086 = vpop.xlane.xlu0 %1085
    %1087 = vadd.xlane.f32.xlu0 %v1056
    %v1088 = vpop.xlane.xlu0 %1087
    %1089 = vadd.xlane.f32.xlu0 %v1058
    %v1090 = vpop.xlane.xlu0 %1089
    %1091 = vadd.xlane.f32.xlu0 %v1060
    %v1092 = vpop.xlane.xlu0 %1091
    %1093 = vadd.xlane.f32.xlu0 %v1062
    %v1094 = vpop.xlane.xlu0 %1093
    %1095 = vadd.xlane.f32.xlu0 %v1064
    %v1096 = vpop.xlane.xlu0 %1095
    %v1097 = vrcp.pop %v1066
    %v1098 = vmul.f32 %v1034, %v1097
    %v1099 = vrcp.pop %v1068
    %v1100 = vmul.f32 %v1036, %v1099
    %v1101 = vrcp.pop %v1070
    %v1102 = vmul.f32 %v1038, %v1101
    %v1103 = vrcp.pop %v1072
    %v1104 = vmul.f32 %v1040, %v1103
    %v1105 = vrcp.pop %v1074
    %v1106 = vmul.f32 %v1042, %v1105
    %v1107 = vrcp.pop %v1076
    %v1108 = vmul.f32 %v1044, %v1107
    %v1109 = vrcp.pop %v1078
    %v1110 = vmul.f32 %v1046, %v1109
    %v1111 = vrcp.pop %v1080
    %v1112 = vmul.f32 %v1048, %v1111
    %v1113 = vrcp.pop %v1082
    %v1114 = vmul.f32 %v1050, %v1113
    %v1115 = vrcp.pop %v1084
    %v1116 = vmul.f32 %v1052, %v1115
    %v1117 = vrcp.pop %v1086
    %v1118 = vmul.f32 %v1054, %v1117
    %v1119 = vrcp.pop %v1088
    %v1120 = vmul.f32 %v1056, %v1119
    %v1121 = vrcp.pop %v1090
    %v1122 = vmul.f32 %v1058, %v1121
    %v1123 = vrcp.pop %v1092
    %v1124 = vmul.f32 %v1060, %v1123
    %v1125 = vrcp.pop %v1094
    %v1126 = vmul.f32 %v1062, %v1125
    %v1127 = vrcp.pop %v1096
    %v1128 = vmul.f32 %v1064, %v1127
    %1129 = vmatprep.subr.mxu0 0.0
    %1130 = vmatpush1.xpose.msra.mxu0 %v1128
    %1131 = vmatprep.subr.mxu0 0.0
    %1132 = vmatpush1.xpose.msra.mxu0 %v1126
    %1133 = vmatprep.subr.mxu0 0.0
    %1134 = vmatpush1.xpose.msra.mxu0 %v1124
    %1135 = vmatprep.subr.mxu0 0.0
    %1136 = vmatpush1.xpose.msra.mxu0 %v1122
    %1137 = vmatprep.subr.mxu0 0.0
    %1138 = vmatpush1.xpose.msra.mxu0 %v1120
    %1139 = vmatprep.subr.mxu0 0.0
    %1140 = vmatpush1.xpose.msra.mxu0 %v1118
    %1141 = vmatprep.subr.mxu0 0.0
    %1142 = vmatpush1.xpose.msra.mxu0 %v1116
    %1143 = vmatprep.subr.mxu0 0.0
    %1144 = vmatpush1.xpose.msra.mxu0 %v1114
    %1145 = vmatprep.subr.mxu0 0.0
    %1146 = vmatpush1.xpose.msra.mxu0 %v1112
    %1147 = vmatprep.subr.mxu0 0.0
    %1148 = vmatpush1.xpose.msra.mxu0 %v1110
    %1149 = vmatprep.subr.mxu0 0.0
    %1150 = vmatpush1.xpose.msra.mxu0 %v1108
    %1151 = vmatprep.subr.mxu0 0.0
    %1152 = vmatpush1.xpose.msra.mxu0 %v1106
    %1153 = vmatprep.subr.mxu0 0.0
    %1154 = vmatpush1.xpose.msra.mxu0 %v1104
    %1155 = vmatprep.subr.mxu0 0.0
    %1156 = vmatpush1.xpose.msra.mxu0 %v1102
    %1157 = vmatprep.subr.mxu0 0.0
    %1158 = vmatpush1.xpose.msra.mxu0 %v1100
    %1159 = vmatprep.subr.mxu0 0.0
    %1160 = vmatpush1.xpose.msra.mxu0 %v1098
    %1161 = vmatprep.subr.mxu0 0.0
    %1162 = vmatpush2.xpose.msra.mxu0 0.0
    %1163 = vmatprep.subr.mxu0 0.0
    %1164 = vmatpush2.xpose.msra.mxu0 0.0
    %1165 = vmatprep.subr.mxu0 0.0
    %1166 = vmatpush2.xpose.msra.mxu0 0.0
    %1167 = vmatprep.subr.mxu0 0.0
    %1168 = vmatpush2.xpose.msra.mxu0 0.0
    %1169 = vmatprep.subr.mxu0 0.0
    %1170 = vmatpush2.xpose.msra.mxu0 0.0
    %1171 = vmatprep.subr.mxu0 0.0
    %1172 = vmatpush2.xpose.msra.mxu0 0.0
    %1173 = vmatprep.subr.mxu0 0.0
    %1174 = vmatpush2.xpose.msra.mxu0 0.0
    %1175 = vmatprep.subr.mxu0 0.0
    %1176 = vmatpush2.xpose.msra.mxu0 0.0
    %1177 = vmatprep.subr.mxu0 0.0
    %1178 = vmatpush2.xpose.msra.mxu0 0.0
    %1179 = vmatprep.subr.mxu0 0.0
    %1180 = vmatpush2.xpose.msra.mxu0 0.0
    %1181 = vmatprep.subr.mxu0 0.0
    %1182 = vmatpush2.xpose.msra.mxu0 0.0
    %1183 = vmatprep.subr.mxu0 0.0
    %1184 = vmatpush2.xpose.msra.mxu0 0.0
    %1185 = vmatprep.subr.mxu0 0.0
    %1186 = vmatpush2.xpose.msra.mxu0 0.0
    %1187 = vmatprep.subr.mxu0 0.0
    %1188 = vmatpush2.xpose.msra.mxu0 0.0
    %1189 = vmatprep.subr.mxu0 0.0
    %1190 = vmatpush2.xpose.msra.mxu0 0.0
    %1191 = vmatprep.subr.mxu0 0.0
    %1192 = vmatpush2.xpose.msra.mxu0 0.0
    %1193 = vmatprep.mubr.f32.mxu0 0.0
    %1194 = vmatmul.mubr.f32.gmra.mxu0 %v284
    %v1195 = vpop.f32.mrf.mxu0
    %v1196 = vadd.f32 0.0, %v1195
    %v1197 = vpop.f32.mrf.mxu0
    %1198 = vdwg.mxu0
    %s1199 = scalar_lea.vmem [#allocation2], 128
    %v1200 = vld [vmem:[%s1199] sm:$0xff]
    %v1201 = vld [vmem:[%s1199 + $0x8] sm:$0xff]
    %v1202 = vld [vmem:[%s1199 + $0x10] sm:$0xff]
    %v1203 = vld [vmem:[%s1199 + $0x18] sm:$0xff]
    %v1204 = vld [vmem:[%s1199 + $0x20] sm:$0xff]
    %v1205 = vld [vmem:[%s1199 + $0x28] sm:$0xff]
    %v1206 = vld [vmem:[%s1199 + $0x30] sm:$0xff]
    %v1207 = vld [vmem:[%s1199 + $0x38] sm:$0xff]
    %v1208 = vld [vmem:[%s1199 + $0x40] sm:$0xff]
    %v1209 = vld [vmem:[%s1199 + $0x48] sm:$0xff]
    %v1210 = vld [vmem:[%s1199 + $0x50] sm:$0xff]
    %v1211 = vld [vmem:[%s1199 + $0x58] sm:$0xff]
    %v1212 = vld [vmem:[%s1199 + $0x60] sm:$0xff]
    %v1213 = vld [vmem:[%s1199 + $0x68] sm:$0xff]
    %v1214 = vld [vmem:[%s1199 + $0x70] sm:$0xff]
    %v1215 = vld [vmem:[%s1199 + $0x78] sm:$0xff]
    %1216 = vxpose.xlu0.b32.start [1/16] %v240, 128
    %1217 = vxpose.xlu0.b32.cont [2/16] 0.0, 128
    %1218 = vxpose.xlu0.b32.cont [3/16] 0.0, 128
    %1219 = vxpose.xlu0.b32.cont [4/16] 0.0, 128
    %1220 = vxpose.xlu0.b32.cont [5/16] 0.0, 128
    %1221 = vxpose.xlu0.b32.cont [6/16] 0.0, 128
    %1222 = vxpose.xlu0.b32.cont [7/16] 0.0, 128
    %1223 = vxpose.xlu0.b32.cont [8/16] 0.0, 128
    %1224 = vxpose.xlu0.b32.cont [9/16] 0.0, 128
    %1225 = vxpose.xlu0.b32.cont [10/16] 0.0, 128
    %1226 = vxpose.xlu0.b32.cont [11/16] 0.0, 128
    %1227 = vxpose.xlu0.b32.cont [12/16] 0.0, 128
    %1228 = vxpose.xlu0.b32.cont [13/16] 0.0, 128
    %1229 = vxpose.xlu0.b32.cont [14/16] 0.0, 128
    %1230 = vxpose.xlu0.b32.cont [15/16] 0.0, 128
    %1231 = vxpose.xlu0.b32.end [16/16] 0.0, 128
    %v1232 = vpop.trf.xlu0
    %v1233 = vpop.trf.xlu0
    %v1234 = vpop.trf.xlu0
    %v1235 = vpop.trf.xlu0
    %v1236 = vpop.trf.xlu0
    %v1237 = vpop.trf.xlu0
    %v1238 = vpop.trf.xlu0
    %v1239 = vpop.trf.xlu0
    %v1240 = vpop.trf.xlu0
    %v1241 = vpop.trf.xlu0
    %v1242 = vpop.trf.xlu0
    %v1243 = vpop.trf.xlu0
    %v1244 = vpop.trf.xlu0
    %v1245 = vpop.trf.xlu0
    %v1246 = vpop.trf.xlu0
    %v1247 = vpop.trf.xlu0
    %v1249 = vsel %vm352, %v1232, 0
    %v1252 = vsel %vm352, %v1233, 0
    %v1255 = vsel %vm352, %v1234, 0
    %v1258 = vsel %vm352, %v1235, 0
    %v1261 = vsel %vm352, %v1236, 0
    %v1264 = vsel %vm352, %v1237, 0
    %v1267 = vsel %vm352, %v1238, 0
    %v1270 = vsel %vm352, %v1239, 0
    %v1273 = vsel %vm352, %v1240, 0
    %v1276 = vsel %vm352, %v1241, 0
    %v1279 = vsel %vm352, %v1242, 0
    %v1282 = vsel %vm352, %v1243, 0
    %v1285 = vsel %vm352, %v1244, 0
    %v1288 = vsel %vm352, %v1245, 0
    %v1291 = vsel %vm352, %v1246, 0
    %v1294 = vsel %vm352, %v1247, 0
    %1296 = vmatprep.subr.mxu0 0.0
    %1297 = vmatpush1.msra.mxu0 0.0
    %1298 = vmatprep.subr.mxu0 0.0
    %1299 = vmatpush1.msra.mxu0 0.0
    %1300 = vmatprep.subr.mxu0 0.0
    %1301 = vmatpush1.msra.mxu0 0.0
    %1302 = vmatprep.subr.mxu0 0.0
    %1303 = vmatpush1.msra.mxu0 0.0
    %1304 = vmatprep.subr.mxu0 0.0
    %1305 = vmatpush1.msra.mxu0 0.0
    %1306 = vmatprep.subr.mxu0 0.0
    %1307 = vmatpush1.msra.mxu0 0.0
    %1308 = vmatprep.subr.mxu0 0.0
    %1309 = vmatpush1.msra.mxu0 0.0
    %1310 = vmatprep.subr.mxu0 0.0
    %1311 = vmatpush1.msra.mxu0 0.0
    %1312 = vmatprep.subr.mxu0 0.0
    %1313 = vmatpush1.msra.mxu0 0.0
    %1314 = vmatprep.subr.mxu0 0.0
    %1315 = vmatpush1.msra.mxu0 0.0
    %1316 = vmatprep.subr.mxu0 0.0
    %1317 = vmatpush1.msra.mxu0 0.0
    %1318 = vmatprep.subr.mxu0 0.0
    %1319 = vmatpush1.msra.mxu0 0.0
    %1320 = vmatprep.subr.mxu0 0.0
    %1321 = vmatpush1.msra.mxu0 0.0
    %1322 = vmatprep.subr.mxu0 0.0
    %1323 = vmatpush1.msra.mxu0 0.0
    %1324 = vmatprep.subr.mxu0 0.0
    %1325 = vmatpush1.msra.mxu0 0.0
    %1326 = vmatprep.subr.mxu0 0.0
    %1327 = vmatpush1.msra.mxu0 %v264
    %1328 = vmatprep.subr.mxu0 0.0
    %1329 = vmatpush2.msra.mxu0 0.0
    %1330 = vmatprep.subr.mxu0 0.0
    %1331 = vmatpush2.msra.mxu0 0.0
    %1332 = vmatprep.subr.mxu0 0.0
    %1333 = vmatpush2.msra.mxu0 0.0
    %1334 = vmatprep.subr.mxu0 0.0
    %1335 = vmatpush2.msra.mxu0 0.0
    %1336 = vmatprep.subr.mxu0 0.0
    %1337 = vmatpush2.msra.mxu0 0.0
    %1338 = vmatprep.subr.mxu0 0.0
    %1339 = vmatpush2.msra.mxu0 0.0
    %1340 = vmatprep.subr.mxu0 0.0
    %1341 = vmatpush2.msra.mxu0 0.0
    %1342 = vmatprep.subr.mxu0 0.0
    %1343 = vmatpush2.msra.mxu0 0.0
    %1344 = vmatprep.subr.mxu0 0.0
    %1345 = vmatpush2.msra.mxu0 0.0
    %1346 = vmatprep.subr.mxu0 0.0
    %1347 = vmatpush2.msra.mxu0 0.0
    %1348 = vmatprep.subr.mxu0 0.0
    %1349 = vmatpush2.msra.mxu0 0.0
    %1350 = vmatprep.subr.mxu0 0.0
    %1351 = vmatpush2.msra.mxu0 0.0
    %1352 = vmatprep.subr.mxu0 0.0
    %1353 = vmatpush2.msra.mxu0 0.0
    %1354 = vmatprep.subr.mxu0 0.0
    %1355 = vmatpush2.msra.mxu0 0.0
    %1356 = vmatprep.subr.mxu0 0.0
    %1357 = vmatpush2.msra.mxu0 0.0
    %1358 = vmatprep.subr.mxu0 0.0
    %1359 = vmatpush2.msra.mxu0 0.0
    %1360 = vmatprep.mubr.f32.mxu0 0.0
    %1361 = vmatmul.mubr.f32.gmra.mxu0 %v1249
    %v1362 = vpop.f32.mrf.mxu0
    %v1363 = vadd.f32 %v1200, %v1362
    %v1364 = vpop.f32.mrf.mxu0
    %1365 = vmatprep.mubr.f32.mxu0 0.0
    %1366 = vmatmul.mubr.f32.gmra.mxu0 %v1252
    %v1367 = vpop.f32.mrf.mxu0
    %v1368 = vadd.f32 %v1201, %v1367
    %v1369 = vpop.f32.mrf.mxu0
    %1370 = vmatprep.mubr.f32.mxu0 0.0
    %1371 = vmatmul.mubr.f32.gmra.mxu0 %v1255
    %v1372 = vpop.f32.mrf.mxu0
    %v1373 = vadd.f32 %v1202, %v1372
    %v1374 = vpop.f32.mrf.mxu0
    %1375 = vmatprep.mubr.f32.mxu0 0.0
    %1376 = vmatmul.mubr.f32.gmra.mxu0 %v1258
    %v1377 = vpop.f32.mrf.mxu0
    %v1378 = vadd.f32 %v1203, %v1377
    %v1379 = vpop.f32.mrf.mxu0
    %1380 = vmatprep.mubr.f32.mxu0 0.0
    %1381 = vmatmul.mubr.f32.gmra.mxu0 %v1261
    %v1382 = vpop.f32.mrf.mxu0
    %v1383 = vadd.f32 %v1204, %v1382
    %v1384 = vpop.f32.mrf.mxu0
    %1385 = vmatprep.mubr.f32.mxu0 0.0
    %1386 = vmatmul.mubr.f32.gmra.mxu0 %v1264
    %v1387 = vpop.f32.mrf.mxu0
    %v1388 = vadd.f32 %v1205, %v1387
    %v1389 = vpop.f32.mrf.mxu0
    %1390 = vmatprep.mubr.f32.mxu0 0.0
    %1391 = vmatmul.mubr.f32.gmra.mxu0 %v1267
    %v1392 = vpop.f32.mrf.mxu0
    %v1393 = vadd.f32 %v1206, %v1392
    %v1394 = vpop.f32.mrf.mxu0
    %1395 = vmatprep.mubr.f32.mxu0 0.0
    %1396 = vmatmul.mubr.f32.gmra.mxu0 %v1270
    %v1397 = vpop.f32.mrf.mxu0
    %v1398 = vadd.f32 %v1207, %v1397
    %v1399 = vpop.f32.mrf.mxu0
    %1400 = vmatprep.mubr.f32.mxu0 0.0
    %1401 = vmatmul.mubr.f32.gmra.mxu0 %v1273
    %v1402 = vpop.f32.mrf.mxu0
    %v1403 = vadd.f32 %v1208, %v1402
    %v1404 = vpop.f32.mrf.mxu0
    %1405 = vmatprep.mubr.f32.mxu0 0.0
    %1406 = vmatmul.mubr.f32.gmra.mxu0 %v1276
    %v1407 = vpop.f32.mrf.mxu0
    %v1408 = vadd.f32 %v1209, %v1407
    %v1409 = vpop.f32.mrf.mxu0
    %1410 = vmatprep.mubr.f32.mxu0 0.0
    %1411 = vmatmul.mubr.f32.gmra.mxu0 %v1279
    %v1412 = vpop.f32.mrf.mxu0
    %v1413 = vadd.f32 %v1210, %v1412
    %v1414 = vpop.f32.mrf.mxu0
    %1415 = vmatprep.mubr.f32.mxu0 0.0
    %1416 = vmatmul.mubr.f32.gmra.mxu0 %v1282
    %v1417 = vpop.f32.mrf.mxu0
    %v1418 = vadd.f32 %v1211, %v1417
    %v1419 = vpop.f32.mrf.mxu0
    %1420 = vmatprep.mubr.f32.mxu0 0.0
    %1421 = vmatmul.mubr.f32.gmra.mxu0 %v1285
    %v1422 = vpop.f32.mrf.mxu0
    %v1423 = vadd.f32 %v1212, %v1422
    %v1424 = vpop.f32.mrf.mxu0
    %1425 = vmatprep.mubr.f32.mxu0 0.0
    %1426 = vmatmul.mubr.f32.gmra.mxu0 %v1288
    %v1427 = vpop.f32.mrf.mxu0
    %v1428 = vadd.f32 %v1213, %v1427
    %v1429 = vpop.f32.mrf.mxu0
    %1430 = vmatprep.mubr.f32.mxu0 0.0
    %1431 = vmatmul.mubr.f32.gmra.mxu0 %v1291
    %v1432 = vpop.f32.mrf.mxu0
    %v1433 = vadd.f32 %v1214, %v1432
    %v1434 = vpop.f32.mrf.mxu0
    %1435 = vmatprep.mubr.f32.mxu0 0.0
    %1436 = vmatmul.mubr.f32.gmra.mxu0 %v1294
    %v1437 = vpop.f32.mrf.mxu0
    %v1438 = vadd.f32 %v1215, %v1437
    %v1439 = vpop.f32.mrf.mxu0
    %1440 = vdwg.mxu0
    %1441 = vmax.xlane.f32.xlu0 %v1363
    %v1442 = vpop.xlane.xlu0 %1441
    %1443 = vmax.xlane.f32.xlu0 %v1368
    %v1444 = vpop.xlane.xlu0 %1443
    %1445 = vmax.xlane.f32.xlu0 %v1373
    %v1446 = vpop.xlane.xlu0 %1445
    %1447 = vmax.xlane.f32.xlu0 %v1378
    %v1448 = vpop.xlane.xlu0 %1447
    %1449 = vmax.xlane.f32.xlu0 %v1383
    %v1450 = vpop.xlane.xlu0 %1449
    %1451 = vmax.xlane.f32.xlu0 %v1388
    %v1452 = vpop.xlane.xlu0 %1451
    %1453 = vmax.xlane.f32.xlu0 %v1393
    %v1454 = vpop.xlane.xlu0 %1453
    %1455 = vmax.xlane.f32.xlu0 %v1398
    %v1456 = vpop.xlane.xlu0 %1455
    %1457 = vmax.xlane.f32.xlu0 %v1403
    %v1458 = vpop.xlane.xlu0 %1457
    %1459 = vmax.xlane.f32.xlu0 %v1408
    %v1460 = vpop.xlane.xlu0 %1459
    %1461 = vmax.xlane.f32.xlu0 %v1413
    %v1462 = vpop.xlane.xlu0 %1461
    %1463 = vmax.xlane.f32.xlu0 %v1418
    %v1464 = vpop.xlane.xlu0 %1463
    %1465 = vmax.xlane.f32.xlu0 %v1423
    %v1466 = vpop.xlane.xlu0 %1465
    %1467 = vmax.xlane.f32.xlu0 %v1428
    %v1468 = vpop.xlane.xlu0 %1467
    %1469 = vmax.xlane.f32.xlu0 %v1433
    %v1470 = vpop.xlane.xlu0 %1469
    %1471 = vmax.xlane.f32.xlu0 %v1438
    %v1472 = vpop.xlane.xlu0 %1471
    %v1473 = vsub.f32 %v1363, %v1442
    %v1474 = vsub.f32 %v1368, %v1444
    %v1475 = vsub.f32 %v1373, %v1446
    %v1476 = vsub.f32 %v1378, %v1448
    %v1477 = vsub.f32 %v1383, %v1450
    %v1478 = vsub.f32 %v1388, %v1452
    %v1479 = vsub.f32 %v1393, %v1454
    %v1480 = vsub.f32 %v1398, %v1456
    %v1481 = vsub.f32 %v1403, %v1458
    %v1482 = vsub.f32 %v1408, %v1460
    %v1483 = vsub.f32 %v1413, %v1462
    %v1484 = vsub.f32 %v1418, %v1464
    %v1485 = vsub.f32 %v1423, %v1466
    %v1486 = vsub.f32 %v1428, %v1468
    %v1487 = vsub.f32 %v1433, %v1470
    %v1488 = vsub.f32 %v1438, %v1472
    %v1489 = vmul.f32 %v1473, 1.442695
    %v1490 = vpow.pop %v1489
    %v1491 = vmul.f32 %v1474, 1.442695
    %v1492 = vpow.pop %v1491
    %v1493 = vmul.f32 %v1475, 1.442695
    %v1494 = vpow.pop %v1493
    %v1495 = vmul.f32 %v1476, 1.442695
    %v1496 = vpow.pop %v1495
    %v1497 = vmul.f32 %v1477, 1.442695
    %v1498 = vpow.pop %v1497
    %v1499 = vmul.f32 %v1478, 1.442695
    %v1500 = vpow.pop %v1499
    %v1501 = vmul.f32 %v1479, 1.442695
    %v1502 = vpow.pop %v1501
    %v1503 = vmul.f32 %v1480, 1.442695
    %v1504 = vpow.pop %v1503
    %v1505 = vmul.f32 %v1481, 1.442695
    %v1506 = vpow.pop %v1505
    %v1507 = vmul.f32 %v1482, 1.442695
    %v1508 = vpow.pop %v1507
    %v1509 = vmul.f32 %v1483, 1.442695
    %v1510 = vpow.pop %v1509
    %v1511 = vmul.f32 %v1484, 1.442695
    %v1512 = vpow.pop %v1511
    %v1513 = vmul.f32 %v1485, 1.442695
    %v1514 = vpow.pop %v1513
    %v1515 = vmul.f32 %v1486, 1.442695
    %v1516 = vpow.pop %v1515
    %v1517 = vmul.f32 %v1487, 1.442695
    %v1518 = vpow.pop %v1517
    %v1519 = vmul.f32 %v1488, 1.442695
    %v1520 = vpow.pop %v1519
    %1521 = vadd.xlane.f32.xlu0 %v1490
    %v1522 = vpop.xlane.xlu0 %1521
    %1523 = vadd.xlane.f32.xlu0 %v1492
    %v1524 = vpop.xlane.xlu0 %1523
    %1525 = vadd.xlane.f32.xlu0 %v1494
    %v1526 = vpop.xlane.xlu0 %1525
    %1527 = vadd.xlane.f32.xlu0 %v1496
    %v1528 = vpop.xlane.xlu0 %1527
    %1529 = vadd.xlane.f32.xlu0 %v1498
    %v1530 = vpop.xlane.xlu0 %1529
    %1531 = vadd.xlane.f32.xlu0 %v1500
    %v1532 = vpop.xlane.xlu0 %1531
    %1533 = vadd.xlane.f32.xlu0 %v1502
    %v1534 = vpop.xlane.xlu0 %1533
    %1535 = vadd.xlane.f32.xlu0 %v1504
    %v1536 = vpop.xlane.xlu0 %1535
    %1537 = vadd.xlane.f32.xlu0 %v1506
    %v1538 = vpop.xlane.xlu0 %1537
    %1539 = vadd.xlane.f32.xlu0 %v1508
    %v1540 = vpop.xlane.xlu0 %1539
    %1541 = vadd.xlane.f32.xlu0 %v1510
    %v1542 = vpop.xlane.xlu0 %1541
    %1543 = vadd.xlane.f32.xlu0 %v1512
    %v1544 = vpop.xlane.xlu0 %1543
    %1545 = vadd.xlane.f32.xlu0 %v1514
    %v1546 = vpop.xlane.xlu0 %1545
    %1547 = vadd.xlane.f32.xlu0 %v1516
    %v1548 = vpop.xlane.xlu0 %1547
    %1549 = vadd.xlane.f32.xlu0 %v1518
    %v1550 = vpop.xlane.xlu0 %1549
    %1551 = vadd.xlane.f32.xlu0 %v1520
    %v1552 = vpop.xlane.xlu0 %1551
    %v1553 = vrcp.pop %v1522
    %v1554 = vmul.f32 %v1490, %v1553
    %v1555 = vrcp.pop %v1524
    %v1556 = vmul.f32 %v1492, %v1555
    %v1557 = vrcp.pop %v1526
    %v1558 = vmul.f32 %v1494, %v1557
    %v1559 = vrcp.pop %v1528
    %v1560 = vmul.f32 %v1496, %v1559
    %v1561 = vrcp.pop %v1530
    %v1562 = vmul.f32 %v1498, %v1561
    %v1563 = vrcp.pop %v1532
    %v1564 = vmul.f32 %v1500, %v1563
    %v1565 = vrcp.pop %v1534
    %v1566 = vmul.f32 %v1502, %v1565
    %v1567 = vrcp.pop %v1536
    %v1568 = vmul.f32 %v1504, %v1567
    %v1569 = vrcp.pop %v1538
    %v1570 = vmul.f32 %v1506, %v1569
    %v1571 = vrcp.pop %v1540
    %v1572 = vmul.f32 %v1508, %v1571
    %v1573 = vrcp.pop %v1542
    %v1574 = vmul.f32 %v1510, %v1573
    %v1575 = vrcp.pop %v1544
    %v1576 = vmul.f32 %v1512, %v1575
    %v1577 = vrcp.pop %v1546
    %v1578 = vmul.f32 %v1514, %v1577
    %v1579 = vrcp.pop %v1548
    %v1580 = vmul.f32 %v1516, %v1579
    %v1581 = vrcp.pop %v1550
    %v1582 = vmul.f32 %v1518, %v1581
    %v1583 = vrcp.pop %v1552
    %v1584 = vmul.f32 %v1520, %v1583
    %1585 = vmatprep.subr.mxu0 0.0
    %1586 = vmatpush1.xpose.msra.mxu0 %v1584
    %1587 = vmatprep.subr.mxu0 0.0
    %1588 = vmatpush1.xpose.msra.mxu0 %v1582
    %1589 = vmatprep.subr.mxu0 0.0
    %1590 = vmatpush1.xpose.msra.mxu0 %v1580
    %1591 = vmatprep.subr.mxu0 0.0
    %1592 = vmatpush1.xpose.msra.mxu0 %v1578
    %1593 = vmatprep.subr.mxu0 0.0
    %1594 = vmatpush1.xpose.msra.mxu0 %v1576
    %1595 = vmatprep.subr.mxu0 0.0
    %1596 = vmatpush1.xpose.msra.mxu0 %v1574
    %1597 = vmatprep.subr.mxu0 0.0
    %1598 = vmatpush1.xpose.msra.mxu0 %v1572
    %1599 = vmatprep.subr.mxu0 0.0
    %1600 = vmatpush1.xpose.msra.mxu0 %v1570
    %1601 = vmatprep.subr.mxu0 0.0
    %1602 = vmatpush1.xpose.msra.mxu0 %v1568
    %1603 = vmatprep.subr.mxu0 0.0
    %1604 = vmatpush1.xpose.msra.mxu0 %v1566
    %1605 = vmatprep.subr.mxu0 0.0
    %1606 = vmatpush1.xpose.msra.mxu0 %v1564
    %1607 = vmatprep.subr.mxu0 0.0
    %1608 = vmatpush1.xpose.msra.mxu0 %v1562
    %1609 = vmatprep.subr.mxu0 0.0
    %1610 = vmatpush1.xpose.msra.mxu0 %v1560
    %1611 = vmatprep.subr.mxu0 0.0
    %1612 = vmatpush1.xpose.msra.mxu0 %v1558
    %1613 = vmatprep.subr.mxu0 0.0
    %1614 = vmatpush1.xpose.msra.mxu0 %v1556
    %1615 = vmatprep.subr.mxu0 0.0
    %1616 = vmatpush1.xpose.msra.mxu0 %v1554
    %1617 = vmatprep.subr.mxu0 0.0
    %1618 = vmatpush2.xpose.msra.mxu0 0.0
    %1619 = vmatprep.subr.mxu0 0.0
    %1620 = vmatpush2.xpose.msra.mxu0 0.0
    %1621 = vmatprep.subr.mxu0 0.0
    %1622 = vmatpush2.xpose.msra.mxu0 0.0
    %1623 = vmatprep.subr.mxu0 0.0
    %1624 = vmatpush2.xpose.msra.mxu0 0.0
    %1625 = vmatprep.subr.mxu0 0.0
    %1626 = vmatpush2.xpose.msra.mxu0 0.0
    %1627 = vmatprep.subr.mxu0 0.0
    %1628 = vmatpush2.xpose.msra.mxu0 0.0
    %1629 = vmatprep.subr.mxu0 0.0
    %1630 = vmatpush2.xpose.msra.mxu0 0.0
    %1631 = vmatprep.subr.mxu0 0.0
    %1632 = vmatpush2.xpose.msra.mxu0 0.0
    %1633 = vmatprep.subr.mxu0 0.0
    %1634 = vmatpush2.xpose.msra.mxu0 0.0
    %1635 = vmatprep.subr.mxu0 0.0
    %1636 = vmatpush2.xpose.msra.mxu0 0.0
    %1637 = vmatprep.subr.mxu0 0.0
    %1638 = vmatpush2.xpose.msra.mxu0 0.0
    %1639 = vmatprep.subr.mxu0 0.0
    %1640 = vmatpush2.xpose.msra.mxu0 0.0
    %1641 = vmatprep.subr.mxu0 0.0
    %1642 = vmatpush2.xpose.msra.mxu0 0.0
    %1643 = vmatprep.subr.mxu0 0.0
    %1644 = vmatpush2.xpose.msra.mxu0 0.0
    %1645 = vmatprep.subr.mxu0 0.0
    %1646 = vmatpush2.xpose.msra.mxu0 0.0
    %1647 = vmatprep.subr.mxu0 0.0
    %1648 = vmatpush2.xpose.msra.mxu0 0.0
    %1649 = vmatprep.mubr.f32.mxu0 0.0
    %1650 = vmatmul.mubr.f32.gmra.mxu0 %v288
    %v1651 = vpop.f32.mrf.mxu0
    %v1652 = vadd.f32 0.0, %v1651
    %v1653 = vpop.f32.mrf.mxu0
    %1654 = vdwg.mxu0
    %1655 = vxpose.xlu0.b32.start [1/16] %v242, 128
    %1656 = vxpose.xlu0.b32.cont [2/16] 0.0, 128
    %1657 = vxpose.xlu0.b32.cont [3/16] 0.0, 128
    %1658 = vxpose.xlu0.b32.cont [4/16] 0.0, 128
    %1659 = vxpose.xlu0.b32.cont [5/16] 0.0, 128
    %1660 = vxpose.xlu0.b32.cont [6/16] 0.0, 128
    %1661 = vxpose.xlu0.b32.cont [7/16] 0.0, 128
    %1662 = vxpose.xlu0.b32.cont [8/16] 0.0, 128
    %1663 = vxpose.xlu0.b32.cont [9/16] 0.0, 128
    %1664 = vxpose.xlu0.b32.cont [10/16] 0.0, 128
    %1665 = vxpose.xlu0.b32.cont [11/16] 0.0, 128
    %1666 = vxpose.xlu0.b32.cont [12/16] 0.0, 128
    %1667 = vxpose.xlu0.b32.cont [13/16] 0.0, 128
    %1668 = vxpose.xlu0.b32.cont [14/16] 0.0, 128
    %1669 = vxpose.xlu0.b32.cont [15/16] 0.0, 128
    %1670 = vxpose.xlu0.b32.end [16/16] 0.0, 128
    %v1671 = vpop.trf.xlu0
    %v1672 = vpop.trf.xlu0
    %v1673 = vpop.trf.xlu0
    %v1674 = vpop.trf.xlu0
    %v1675 = vpop.trf.xlu0
    %v1676 = vpop.trf.xlu0
    %v1677 = vpop.trf.xlu0
    %v1678 = vpop.trf.xlu0
    %v1679 = vpop.trf.xlu0
    %v1680 = vpop.trf.xlu0
    %v1681 = vpop.trf.xlu0
    %v1682 = vpop.trf.xlu0
    %v1683 = vpop.trf.xlu0
    %v1684 = vpop.trf.xlu0
    %v1685 = vpop.trf.xlu0
    %v1686 = vpop.trf.xlu0
    %v1688 = vsel %vm352, %v1671, 0
    %v1691 = vsel %vm352, %v1672, 0
    %v1694 = vsel %vm352, %v1673, 0
    %v1697 = vsel %vm352, %v1674, 0
    %v1700 = vsel %vm352, %v1675, 0
    %v1703 = vsel %vm352, %v1676, 0
    %v1706 = vsel %vm352, %v1677, 0
    %v1709 = vsel %vm352, %v1678, 0
    %v1712 = vsel %vm352, %v1679, 0
    %v1715 = vsel %vm352, %v1680, 0
    %v1718 = vsel %vm352, %v1681, 0
    %v1721 = vsel %vm352, %v1682, 0
    %v1724 = vsel %vm352, %v1683, 0
    %v1727 = vsel %vm352, %v1684, 0
    %v1730 = vsel %vm352, %v1685, 0
    %v1733 = vsel %vm352, %v1686, 0
    %1735 = vmatprep.subr.mxu0 0.0
    %1736 = vmatpush1.msra.mxu0 0.0
    %1737 = vmatprep.subr.mxu0 0.0
    %1738 = vmatpush1.msra.mxu0 0.0
    %1739 = vmatprep.subr.mxu0 0.0
    %1740 = vmatpush1.msra.mxu0 0.0
    %1741 = vmatprep.subr.mxu0 0.0
    %1742 = vmatpush1.msra.mxu0 0.0
    %1743 = vmatprep.subr.mxu0 0.0
    %1744 = vmatpush1.msra.mxu0 0.0
    %1745 = vmatprep.subr.mxu0 0.0
    %1746 = vmatpush1.msra.mxu0 0.0
    %1747 = vmatprep.subr.mxu0 0.0
    %1748 = vmatpush1.msra.mxu0 0.0
    %1749 = vmatprep.subr.mxu0 0.0
    %1750 = vmatpush1.msra.mxu0 0.0
    %1751 = vmatprep.subr.mxu0 0.0
    %1752 = vmatpush1.msra.mxu0 0.0
    %1753 = vmatprep.subr.mxu0 0.0
    %1754 = vmatpush1.msra.mxu0 0.0
    %1755 = vmatprep.subr.mxu0 0.0
    %1756 = vmatpush1.msra.mxu0 0.0
    %1757 = vmatprep.subr.mxu0 0.0
    %1758 = vmatpush1.msra.mxu0 0.0
    %1759 = vmatprep.subr.mxu0 0.0
    %1760 = vmatpush1.msra.mxu0 0.0
    %1761 = vmatprep.subr.mxu0 0.0
    %1762 = vmatpush1.msra.mxu0 0.0
    %1763 = vmatprep.subr.mxu0 0.0
    %1764 = vmatpush1.msra.mxu0 0.0
    %1765 = vmatprep.subr.mxu0 0.0
    %1766 = vmatpush1.msra.mxu0 %v266
    %1767 = vmatprep.subr.mxu0 0.0
    %1768 = vmatpush2.msra.mxu0 0.0
    %1769 = vmatprep.subr.mxu0 0.0
    %1770 = vmatpush2.msra.mxu0 0.0
    %1771 = vmatprep.subr.mxu0 0.0
    %1772 = vmatpush2.msra.mxu0 0.0
    %1773 = vmatprep.subr.mxu0 0.0
    %1774 = vmatpush2.msra.mxu0 0.0
    %1775 = vmatprep.subr.mxu0 0.0
    %1776 = vmatpush2.msra.mxu0 0.0
    %1777 = vmatprep.subr.mxu0 0.0
    %1778 = vmatpush2.msra.mxu0 0.0
    %1779 = vmatprep.subr.mxu0 0.0
    %1780 = vmatpush2.msra.mxu0 0.0
    %1781 = vmatprep.subr.mxu0 0.0
    %1782 = vmatpush2.msra.mxu0 0.0
    %1783 = vmatprep.subr.mxu0 0.0
    %1784 = vmatpush2.msra.mxu0 0.0
    %1785 = vmatprep.subr.mxu0 0.0
    %1786 = vmatpush2.msra.mxu0 0.0
    %1787 = vmatprep.subr.mxu0 0.0
    %1788 = vmatpush2.msra.mxu0 0.0
    %1789 = vmatprep.subr.mxu0 0.0
    %1790 = vmatpush2.msra.mxu0 0.0
    %1791 = vmatprep.subr.mxu0 0.0
    %1792 = vmatpush2.msra.mxu0 0.0
    %1793 = vmatprep.subr.mxu0 0.0
    %1794 = vmatpush2.msra.mxu0 0.0
    %1795 = vmatprep.subr.mxu0 0.0
    %1796 = vmatpush2.msra.mxu0 0.0
    %1797 = vmatprep.subr.mxu0 0.0
    %1798 = vmatpush2.msra.mxu0 0.0
    %1799 = vmatprep.mubr.f32.mxu0 0.0
    %1800 = vmatmul.mubr.f32.gmra.mxu0 %v1688
    %v1801 = vpop.f32.mrf.mxu0
    %v1802 = vadd.f32 %v1200, %v1801
    %v1803 = vpop.f32.mrf.mxu0
    %1804 = vmatprep.mubr.f32.mxu0 0.0
    %1805 = vmatmul.mubr.f32.gmra.mxu0 %v1691
    %v1806 = vpop.f32.mrf.mxu0
    %v1807 = vadd.f32 %v1201, %v1806
    %v1808 = vpop.f32.mrf.mxu0
    %1809 = vmatprep.mubr.f32.mxu0 0.0
    %1810 = vmatmul.mubr.f32.gmra.mxu0 %v1694
    %v1811 = vpop.f32.mrf.mxu0
    %v1812 = vadd.f32 %v1202, %v1811
    %v1813 = vpop.f32.mrf.mxu0
    %1814 = vmatprep.mubr.f32.mxu0 0.0
    %1815 = vmatmul.mubr.f32.gmra.mxu0 %v1697
    %v1816 = vpop.f32.mrf.mxu0
    %v1817 = vadd.f32 %v1203, %v1816
    %v1818 = vpop.f32.mrf.mxu0
    %1819 = vmatprep.mubr.f32.mxu0 0.0
    %1820 = vmatmul.mubr.f32.gmra.mxu0 %v1700
    %v1821 = vpop.f32.mrf.mxu0
    %v1822 = vadd.f32 %v1204, %v1821
    %v1823 = vpop.f32.mrf.mxu0
    %1824 = vmatprep.mubr.f32.mxu0 0.0
    %1825 = vmatmul.mubr.f32.gmra.mxu0 %v1703
    %v1826 = vpop.f32.mrf.mxu0
    %v1827 = vadd.f32 %v1205, %v1826
    %v1828 = vpop.f32.mrf.mxu0
    %1829 = vmatprep.mubr.f32.mxu0 0.0
    %1830 = vmatmul.mubr.f32.gmra.mxu0 %v1706
    %v1831 = vpop.f32.mrf.mxu0
    %v1832 = vadd.f32 %v1206, %v1831
    %v1833 = vpop.f32.mrf.mxu0
    %1834 = vmatprep.mubr.f32.mxu0 0.0
    %1835 = vmatmul.mubr.f32.gmra.mxu0 %v1709
    %v1836 = vpop.f32.mrf.mxu0
    %v1837 = vadd.f32 %v1207, %v1836
    %v1838 = vpop.f32.mrf.mxu0
    %1839 = vmatprep.mubr.f32.mxu0 0.0
    %1840 = vmatmul.mubr.f32.gmra.mxu0 %v1712
    %v1841 = vpop.f32.mrf.mxu0
    %v1842 = vadd.f32 %v1208, %v1841
    %v1843 = vpop.f32.mrf.mxu0
    %1844 = vmatprep.mubr.f32.mxu0 0.0
    %1845 = vmatmul.mubr.f32.gmra.mxu0 %v1715
    %v1846 = vpop.f32.mrf.mxu0
    %v1847 = vadd.f32 %v1209, %v1846
    %v1848 = vpop.f32.mrf.mxu0
    %1849 = vmatprep.mubr.f32.mxu0 0.0
    %1850 = vmatmul.mubr.f32.gmra.mxu0 %v1718
    %v1851 = vpop.f32.mrf.mxu0
    %v1852 = vadd.f32 %v1210, %v1851
    %v1853 = vpop.f32.mrf.mxu0
    %1854 = vmatprep.mubr.f32.mxu0 0.0
    %1855 = vmatmul.mubr.f32.gmra.mxu0 %v1721
    %v1856 = vpop.f32.mrf.mxu0
    %v1857 = vadd.f32 %v1211, %v1856
    %v1858 = vpop.f32.mrf.mxu0
    %1859 = vmatprep.mubr.f32.mxu0 0.0
    %1860 = vmatmul.mubr.f32.gmra.mxu0 %v1724
    %v1861 = vpop.f32.mrf.mxu0
    %v1862 = vadd.f32 %v1212, %v1861
    %v1863 = vpop.f32.mrf.mxu0
    %1864 = vmatprep.mubr.f32.mxu0 0.0
    %1865 = vmatmul.mubr.f32.gmra.mxu0 %v1727
    %v1866 = vpop.f32.mrf.mxu0
    %v1867 = vadd.f32 %v1213, %v1866
    %v1868 = vpop.f32.mrf.mxu0
    %1869 = vmatprep.mubr.f32.mxu0 0.0
    %1870 = vmatmul.mubr.f32.gmra.mxu0 %v1730
    %v1871 = vpop.f32.mrf.mxu0
    %v1872 = vadd.f32 %v1214, %v1871
    %v1873 = vpop.f32.mrf.mxu0
    %1874 = vmatprep.mubr.f32.mxu0 0.0
    %1875 = vmatmul.mubr.f32.gmra.mxu0 %v1733
    %v1876 = vpop.f32.mrf.mxu0
    %v1877 = vadd.f32 %v1215, %v1876
    %v1878 = vpop.f32.mrf.mxu0
    %1879 = vdwg.mxu0
    %1880 = vmax.xlane.f32.xlu0 %v1802
    %v1881 = vpop.xlane.xlu0 %1880
    %1882 = vmax.xlane.f32.xlu0 %v1807
    %v1883 = vpop.xlane.xlu0 %1882
    %1884 = vmax.xlane.f32.xlu0 %v1812
    %v1885 = vpop.xlane.xlu0 %1884
    %1886 = vmax.xlane.f32.xlu0 %v1817
    %v1887 = vpop.xlane.xlu0 %1886
    %1888 = vmax.xlane.f32.xlu0 %v1822
    %v1889 = vpop.xlane.xlu0 %1888
    %1890 = vmax.xlane.f32.xlu0 %v1827
    %v1891 = vpop.xlane.xlu0 %1890
    %1892 = vmax.xlane.f32.xlu0 %v1832
    %v1893 = vpop.xlane.xlu0 %1892
    %1894 = vmax.xlane.f32.xlu0 %v1837
    %v1895 = vpop.xlane.xlu0 %1894
    %1896 = vmax.xlane.f32.xlu0 %v1842
    %v1897 = vpop.xlane.xlu0 %1896
    %1898 = vmax.xlane.f32.xlu0 %v1847
    %v1899 = vpop.xlane.xlu0 %1898
    %1900 = vmax.xlane.f32.xlu0 %v1852
    %v1901 = vpop.xlane.xlu0 %1900
    %1902 = vmax.xlane.f32.xlu0 %v1857
    %v1903 = vpop.xlane.xlu0 %1902
    %1904 = vmax.xlane.f32.xlu0 %v1862
    %v1905 = vpop.xlane.xlu0 %1904
    %1906 = vmax.xlane.f32.xlu0 %v1867
    %v1907 = vpop.xlane.xlu0 %1906
    %1908 = vmax.xlane.f32.xlu0 %v1872
    %v1909 = vpop.xlane.xlu0 %1908
    %1910 = vmax.xlane.f32.xlu0 %v1877
    %v1911 = vpop.xlane.xlu0 %1910
    %v1912 = vsub.f32 %v1802, %v1881
    %v1913 = vsub.f32 %v1807, %v1883
    %v1914 = vsub.f32 %v1812, %v1885
    %v1915 = vsub.f32 %v1817, %v1887
    %v1916 = vsub.f32 %v1822, %v1889
    %v1917 = vsub.f32 %v1827, %v1891
    %v1918 = vsub.f32 %v1832, %v1893
    %v1919 = vsub.f32 %v1837, %v1895
    %v1920 = vsub.f32 %v1842, %v1897
    %v1921 = vsub.f32 %v1847, %v1899
    %v1922 = vsub.f32 %v1852, %v1901
    %v1923 = vsub.f32 %v1857, %v1903
    %v1924 = vsub.f32 %v1862, %v1905
    %v1925 = vsub.f32 %v1867, %v1907
    %v1926 = vsub.f32 %v1872, %v1909
    %v1927 = vsub.f32 %v1877, %v1911
    %v1928 = vmul.f32 %v1912, 1.442695
    %v1929 = vpow.pop %v1928
    %v1930 = vmul.f32 %v1913, 1.442695
    %v1931 = vpow.pop %v1930
    %v1932 = vmul.f32 %v1914, 1.442695
    %v1933 = vpow.pop %v1932
    %v1934 = vmul.f32 %v1915, 1.442695
    %v1935 = vpow.pop %v1934
    %v1936 = vmul.f32 %v1916, 1.442695
    %v1937 = vpow.pop %v1936
    %v1938 = vmul.f32 %v1917, 1.442695
    %v1939 = vpow.pop %v1938
    %v1940 = vmul.f32 %v1918, 1.442695
    %v1941 = vpow.pop %v1940
    %v1942 = vmul.f32 %v1919, 1.442695
    %v1943 = vpow.pop %v1942
    %v1944 = vmul.f32 %v1920, 1.442695
    %v1945 = vpow.pop %v1944
    %v1946 = vmul.f32 %v1921, 1.442695
    %v1947 = vpow.pop %v1946
    %v1948 = vmul.f32 %v1922, 1.442695
    %v1949 = vpow.pop %v1948
    %v1950 = vmul.f32 %v1923, 1.442695
    %v1951 = vpow.pop %v1950
    %v1952 = vmul.f32 %v1924, 1.442695
    %v1953 = vpow.pop %v1952
    %v1954 = vmul.f32 %v1925, 1.442695
    %v1955 = vpow.pop %v1954
    %v1956 = vmul.f32 %v1926, 1.442695
    %v1957 = vpow.pop %v1956
    %v1958 = vmul.f32 %v1927, 1.442695
    %v1959 = vpow.pop %v1958
    %1960 = vadd.xlane.f32.xlu0 %v1929
    %v1961 = vpop.xlane.xlu0 %1960
    %1962 = vadd.xlane.f32.xlu0 %v1931
    %v1963 = vpop.xlane.xlu0 %1962
    %1964 = vadd.xlane.f32.xlu0 %v1933
    %v1965 = vpop.xlane.xlu0 %1964
    %1966 = vadd.xlane.f32.xlu0 %v1935
    %v1967 = vpop.xlane.xlu0 %1966
    %1968 = vadd.xlane.f32.xlu0 %v1937
    %v1969 = vpop.xlane.xlu0 %1968
    %1970 = vadd.xlane.f32.xlu0 %v1939
    %v1971 = vpop.xlane.xlu0 %1970
    %1972 = vadd.xlane.f32.xlu0 %v1941
    %v1973 = vpop.xlane.xlu0 %1972
    %1974 = vadd.xlane.f32.xlu0 %v1943
    %v1975 = vpop.xlane.xlu0 %1974
    %1976 = vadd.xlane.f32.xlu0 %v1945
    %v1977 = vpop.xlane.xlu0 %1976
    %1978 = vadd.xlane.f32.xlu0 %v1947
    %v1979 = vpop.xlane.xlu0 %1978
    %1980 = vadd.xlane.f32.xlu0 %v1949
    %v1981 = vpop.xlane.xlu0 %1980
    %1982 = vadd.xlane.f32.xlu0 %v1951
    %v1983 = vpop.xlane.xlu0 %1982
    %1984 = vadd.xlane.f32.xlu0 %v1953
    %v1985 = vpop.xlane.xlu0 %1984
    %1986 = vadd.xlane.f32.xlu0 %v1955
    %v1987 = vpop.xlane.xlu0 %1986
    %1988 = vadd.xlane.f32.xlu0 %v1957
    %v1989 = vpop.xlane.xlu0 %1988
    %1990 = vadd.xlane.f32.xlu0 %v1959
    %v1991 = vpop.xlane.xlu0 %1990
    %v1992 = vrcp.pop %v1961
    %v1993 = vmul.f32 %v1929, %v1992
    %v1994 = vrcp.pop %v1963
    %v1995 = vmul.f32 %v1931, %v1994
    %v1996 = vrcp.pop %v1965
    %v1997 = vmul.f32 %v1933, %v1996
    %v1998 = vrcp.pop %v1967
    %v1999 = vmul.f32 %v1935, %v1998
    %v2000 = vrcp.pop %v1969
    %v2001 = vmul.f32 %v1937, %v2000
    %v2002 = vrcp.pop %v1971
    %v2003 = vmul.f32 %v1939, %v2002
    %v2004 = vrcp.pop %v1973
    %v2005 = vmul.f32 %v1941, %v2004
    %v2006 = vrcp.pop %v1975
    %v2007 = vmul.f32 %v1943, %v2006
    %v2008 = vrcp.pop %v1977
    %v2009 = vmul.f32 %v1945, %v2008
    %v2010 = vrcp.pop %v1979
    %v2011 = vmul.f32 %v1947, %v2010
    %v2012 = vrcp.pop %v1981
    %v2013 = vmul.f32 %v1949, %v2012
    %v2014 = vrcp.pop %v1983
    %v2015 = vmul.f32 %v1951, %v2014
    %v2016 = vrcp.pop %v1985
    %v2017 = vmul.f32 %v1953, %v2016
    %v2018 = vrcp.pop %v1987
    %v2019 = vmul.f32 %v1955, %v2018
    %v2020 = vrcp.pop %v1989
    %v2021 = vmul.f32 %v1957, %v2020
    %v2022 = vrcp.pop %v1991
    %v2023 = vmul.f32 %v1959, %v2022
    %2024 = vmatprep.subr.mxu0 0.0
    %2025 = vmatpush1.xpose.msra.mxu0 %v2023
    %2026 = vmatprep.subr.mxu0 0.0
    %2027 = vmatpush1.xpose.msra.mxu0 %v2021
    %2028 = vmatprep.subr.mxu0 0.0
    %2029 = vmatpush1.xpose.msra.mxu0 %v2019
    %2030 = vmatprep.subr.mxu0 0.0
    %2031 = vmatpush1.xpose.msra.mxu0 %v2017
    %2032 = vmatprep.subr.mxu0 0.0
    %2033 = vmatpush1.xpose.msra.mxu0 %v2015
    %2034 = vmatprep.subr.mxu0 0.0
    %2035 = vmatpush1.xpose.msra.mxu0 %v2013
    %2036 = vmatprep.subr.mxu0 0.0
    %2037 = vmatpush1.xpose.msra.mxu0 %v2011
    %2038 = vmatprep.subr.mxu0 0.0
    %2039 = vmatpush1.xpose.msra.mxu0 %v2009
    %2040 = vmatprep.subr.mxu0 0.0
    %2041 = vmatpush1.xpose.msra.mxu0 %v2007
    %2042 = vmatprep.subr.mxu0 0.0
    %2043 = vmatpush1.xpose.msra.mxu0 %v2005
    %2044 = vmatprep.subr.mxu0 0.0
    %2045 = vmatpush1.xpose.msra.mxu0 %v2003
    %2046 = vmatprep.subr.mxu0 0.0
    %2047 = vmatpush1.xpose.msra.mxu0 %v2001
    %2048 = vmatprep.subr.mxu0 0.0
    %2049 = vmatpush1.xpose.msra.mxu0 %v1999
    %2050 = vmatprep.subr.mxu0 0.0
    %2051 = vmatpush1.xpose.msra.mxu0 %v1997
    %2052 = vmatprep.subr.mxu0 0.0
    %2053 = vmatpush1.xpose.msra.mxu0 %v1995
    %2054 = vmatprep.subr.mxu0 0.0
    %2055 = vmatpush1.xpose.msra.mxu0 %v1993
    %2056 = vmatprep.subr.mxu0 0.0
    %2057 = vmatpush2.xpose.msra.mxu0 0.0
    %2058 = vmatprep.subr.mxu0 0.0
    %2059 = vmatpush2.xpose.msra.mxu0 0.0
    %2060 = vmatprep.subr.mxu0 0.0
    %2061 = vmatpush2.xpose.msra.mxu0 0.0
    %2062 = vmatprep.subr.mxu0 0.0
    %2063 = vmatpush2.xpose.msra.mxu0 0.0
    %2064 = vmatprep.subr.mxu0 0.0
    %2065 = vmatpush2.xpose.msra.mxu0 0.0
    %2066 = vmatprep.subr.mxu0 0.0
    %2067 = vmatpush2.xpose.msra.mxu0 0.0
    %2068 = vmatprep.subr.mxu0 0.0
    %2069 = vmatpush2.xpose.msra.mxu0 0.0
    %2070 = vmatprep.subr.mxu0 0.0
    %2071 = vmatpush2.xpose.msra.mxu0 0.0
    %2072 = vmatprep.subr.mxu0 0.0
    %2073 = vmatpush2.xpose.msra.mxu0 0.0
    %2074 = vmatprep.subr.mxu0 0.0
    %2075 = vmatpush2.xpose.msra.mxu0 0.0
    %2076 = vmatprep.subr.mxu0 0.0
    %2077 = vmatpush2.xpose.msra.mxu0 0.0
    %2078 = vmatprep.subr.mxu0 0.0
    %2079 = vmatpush2.xpose.msra.mxu0 0.0
    %2080 = vmatprep.subr.mxu0 0.0
    %2081 = vmatpush2.xpose.msra.mxu0 0.0
    %2082 = vmatprep.subr.mxu0 0.0
    %2083 = vmatpush2.xpose.msra.mxu0 0.0
    %2084 = vmatprep.subr.mxu0 0.0
    %2085 = vmatpush2.xpose.msra.mxu0 0.0
    %2086 = vmatprep.subr.mxu0 0.0
    %2087 = vmatpush2.xpose.msra.mxu0 0.0
    %2088 = vmatprep.mubr.f32.mxu0 0.0
    %2089 = vmatmul.mubr.f32.gmra.mxu0 %v290
    %v2090 = vpop.f32.mrf.mxu0
    %v2091 = vadd.f32 0.0, %v2090
    %v2092 = vpop.f32.mrf.mxu0
    %2093 = vdwg.mxu0
    %s2094 = scalar_lea.vmem [#allocation2], 256
    %v2095 = vld [vmem:[%s2094] sm:$0xff]
    %v2096 = vld [vmem:[%s2094 + $0x8] sm:$0xff]
    %v2097 = vld [vmem:[%s2094 + $0x10] sm:$0xff]
    %v2098 = vld [vmem:[%s2094 + $0x18] sm:$0xff]
    %v2099 = vld [vmem:[%s2094 + $0x20] sm:$0xff]
    %v2100 = vld [vmem:[%s2094 + $0x28] sm:$0xff]
    %v2101 = vld [vmem:[%s2094 + $0x30] sm:$0xff]
    %v2102 = vld [vmem:[%s2094 + $0x38] sm:$0xff]
    %v2103 = vld [vmem:[%s2094 + $0x40] sm:$0xff]
    %v2104 = vld [vmem:[%s2094 + $0x48] sm:$0xff]
    %v2105 = vld [vmem:[%s2094 + $0x50] sm:$0xff]
    %v2106 = vld [vmem:[%s2094 + $0x58] sm:$0xff]
    %v2107 = vld [vmem:[%s2094 + $0x60] sm:$0xff]
    %v2108 = vld [vmem:[%s2094 + $0x68] sm:$0xff]
    %v2109 = vld [vmem:[%s2094 + $0x70] sm:$0xff]
    %v2110 = vld [vmem:[%s2094 + $0x78] sm:$0xff]
    %2111 = vxpose.xlu0.b32.start [1/16] %v246, 128
    %2112 = vxpose.xlu0.b32.cont [2/16] 0.0, 128
    %2113 = vxpose.xlu0.b32.cont [3/16] 0.0, 128
    %2114 = vxpose.xlu0.b32.cont [4/16] 0.0, 128
    %2115 = vxpose.xlu0.b32.cont [5/16] 0.0, 128
    %2116 = vxpose.xlu0.b32.cont [6/16] 0.0, 128
    %2117 = vxpose.xlu0.b32.cont [7/16] 0.0, 128
    %2118 = vxpose.xlu0.b32.cont [8/16] 0.0, 128
    %2119 = vxpose.xlu0.b32.cont [9/16] 0.0, 128
    %2120 = vxpose.xlu0.b32.cont [10/16] 0.0, 128
    %2121 = vxpose.xlu0.b32.cont [11/16] 0.0, 128
    %2122 = vxpose.xlu0.b32.cont [12/16] 0.0, 128
    %2123 = vxpose.xlu0.b32.cont [13/16] 0.0, 128
    %2124 = vxpose.xlu0.b32.cont [14/16] 0.0, 128
    %2125 = vxpose.xlu0.b32.cont [15/16] 0.0, 128
    %2126 = vxpose.xlu0.b32.end [16/16] 0.0, 128
    %v2127 = vpop.trf.xlu0
    %v2128 = vpop.trf.xlu0
    %v2129 = vpop.trf.xlu0
    %v2130 = vpop.trf.xlu0
    %v2131 = vpop.trf.xlu0
    %v2132 = vpop.trf.xlu0
    %v2133 = vpop.trf.xlu0
    %v2134 = vpop.trf.xlu0
    %v2135 = vpop.trf.xlu0
    %v2136 = vpop.trf.xlu0
    %v2137 = vpop.trf.xlu0
    %v2138 = vpop.trf.xlu0
    %v2139 = vpop.trf.xlu0
    %v2140 = vpop.trf.xlu0
    %v2141 = vpop.trf.xlu0
    %v2142 = vpop.trf.xlu0
    %v2144 = vsel %vm352, %v2127, 0
    %v2147 = vsel %vm352, %v2128, 0
    %v2150 = vsel %vm352, %v2129, 0
    %v2153 = vsel %vm352, %v2130, 0
    %v2156 = vsel %vm352, %v2131, 0
    %v2159 = vsel %vm352, %v2132, 0
    %v2162 = vsel %vm352, %v2133, 0
    %v2165 = vsel %vm352, %v2134, 0
    %v2168 = vsel %vm352, %v2135, 0
    %v2171 = vsel %vm352, %v2136, 0
    %v2174 = vsel %vm352, %v2137, 0
    %v2177 = vsel %vm352, %v2138, 0
    %v2180 = vsel %vm352, %v2139, 0
    %v2183 = vsel %vm352, %v2140, 0
    %v2186 = vsel %vm352, %v2141, 0
    %v2189 = vsel %vm352, %v2142, 0
    %2191 = vmatprep.subr.mxu0 0.0
    %2192 = vmatpush1.msra.mxu0 0.0
    %2193 = vmatprep.subr.mxu0 0.0
    %2194 = vmatpush1.msra.mxu0 0.0
    %2195 = vmatprep.subr.mxu0 0.0
    %2196 = vmatpush1.msra.mxu0 0.0
    %2197 = vmatprep.subr.mxu0 0.0
    %2198 = vmatpush1.msra.mxu0 0.0
    %2199 = vmatprep.subr.mxu0 0.0
    %2200 = vmatpush1.msra.mxu0 0.0
    %2201 = vmatprep.subr.mxu0 0.0
    %2202 = vmatpush1.msra.mxu0 0.0
    %2203 = vmatprep.subr.mxu0 0.0
    %2204 = vmatpush1.msra.mxu0 0.0
    %2205 = vmatprep.subr.mxu0 0.0
    %2206 = vmatpush1.msra.mxu0 0.0
    %2207 = vmatprep.subr.mxu0 0.0
    %2208 = vmatpush1.msra.mxu0 0.0
    %2209 = vmatprep.subr.mxu0 0.0
    %2210 = vmatpush1.msra.mxu0 0.0
    %2211 = vmatprep.subr.mxu0 0.0
    %2212 = vmatpush1.msra.mxu0 0.0
    %2213 = vmatprep.subr.mxu0 0.0
    %2214 = vmatpush1.msra.mxu0 0.0
    %2215 = vmatprep.subr.mxu0 0.0
    %2216 = vmatpush1.msra.mxu0 0.0
    %2217 = vmatprep.subr.mxu0 0.0
    %2218 = vmatpush1.msra.mxu0 0.0
    %2219 = vmatprep.subr.mxu0 0.0
    %2220 = vmatpush1.msra.mxu0 0.0
    %2221 = vmatprep.subr.mxu0 0.0
    %2222 = vmatpush1.msra.mxu0 %v270
    %2223 = vmatprep.subr.mxu0 0.0
    %2224 = vmatpush2.msra.mxu0 0.0
    %2225 = vmatprep.subr.mxu0 0.0
    %2226 = vmatpush2.msra.mxu0 0.0
    %2227 = vmatprep.subr.mxu0 0.0
    %2228 = vmatpush2.msra.mxu0 0.0
    %2229 = vmatprep.subr.mxu0 0.0
    %2230 = vmatpush2.msra.mxu0 0.0
    %2231 = vmatprep.subr.mxu0 0.0
    %2232 = vmatpush2.msra.mxu0 0.0
    %2233 = vmatprep.subr.mxu0 0.0
    %2234 = vmatpush2.msra.mxu0 0.0
    %2235 = vmatprep.subr.mxu0 0.0
    %2236 = vmatpush2.msra.mxu0 0.0
    %2237 = vmatprep.subr.mxu0 0.0
    %2238 = vmatpush2.msra.mxu0 0.0
    %2239 = vmatprep.subr.mxu0 0.0
    %2240 = vmatpush2.msra.mxu0 0.0
    %2241 = vmatprep.subr.mxu0 0.0
    %2242 = vmatpush2.msra.mxu0 0.0
    %2243 = vmatprep.subr.mxu0 0.0
    %2244 = vmatpush2.msra.mxu0 0.0
    %2245 = vmatprep.subr.mxu0 0.0
    %2246 = vmatpush2.msra.mxu0 0.0
    %2247 = vmatprep.subr.mxu0 0.0
    %2248 = vmatpush2.msra.mxu0 0.0
    %2249 = vmatprep.subr.mxu0 0.0
    %2250 = vmatpush2.msra.mxu0 0.0
    %2251 = vmatprep.subr.mxu0 0.0
    %2252 = vmatpush2.msra.mxu0 0.0
    %2253 = vmatprep.subr.mxu0 0.0
    %2254 = vmatpush2.msra.mxu0 0.0
    %2255 = vmatprep.mubr.f32.mxu0 0.0
    %2256 = vmatmul.mubr.f32.gmra.mxu0 %v2144
    %v2257 = vpop.f32.mrf.mxu0
    %v2258 = vadd.f32 %v2095, %v2257
    %v2259 = vpop.f32.mrf.mxu0
    %2260 = vmatprep.mubr.f32.mxu0 0.0
    %2261 = vmatmul.mubr.f32.gmra.mxu0 %v2147
    %v2262 = vpop.f32.mrf.mxu0
    %v2263 = vadd.f32 %v2096, %v2262
    %v2264 = vpop.f32.mrf.mxu0
    %2265 = vmatprep.mubr.f32.mxu0 0.0
    %2266 = vmatmul.mubr.f32.gmra.mxu0 %v2150
    %v2267 = vpop.f32.mrf.mxu0
    %v2268 = vadd.f32 %v2097, %v2267
    %v2269 = vpop.f32.mrf.mxu0
    %2270 = vmatprep.mubr.f32.mxu0 0.0
    %2271 = vmatmul.mubr.f32.gmra.mxu0 %v2153
    %v2272 = vpop.f32.mrf.mxu0
    %v2273 = vadd.f32 %v2098, %v2272
    %v2274 = vpop.f32.mrf.mxu0
    %2275 = vmatprep.mubr.f32.mxu0 0.0
    %2276 = vmatmul.mubr.f32.gmra.mxu0 %v2156
    %v2277 = vpop.f32.mrf.mxu0
    %v2278 = vadd.f32 %v2099, %v2277
    %v2279 = vpop.f32.mrf.mxu0
    %2280 = vmatprep.mubr.f32.mxu0 0.0
    %2281 = vmatmul.mubr.f32.gmra.mxu0 %v2159
    %v2282 = vpop.f32.mrf.mxu0
    %v2283 = vadd.f32 %v2100, %v2282
    %v2284 = vpop.f32.mrf.mxu0
    %2285 = vmatprep.mubr.f32.mxu0 0.0
    %2286 = vmatmul.mubr.f32.gmra.mxu0 %v2162
    %v2287 = vpop.f32.mrf.mxu0
    %v2288 = vadd.f32 %v2101, %v2287
    %v2289 = vpop.f32.mrf.mxu0
    %2290 = vmatprep.mubr.f32.mxu0 0.0
    %2291 = vmatmul.mubr.f32.gmra.mxu0 %v2165
    %v2292 = vpop.f32.mrf.mxu0
    %v2293 = vadd.f32 %v2102, %v2292
    %v2294 = vpop.f32.mrf.mxu0
    %2295 = vmatprep.mubr.f32.mxu0 0.0
    %2296 = vmatmul.mubr.f32.gmra.mxu0 %v2168
    %v2297 = vpop.f32.mrf.mxu0
    %v2298 = vadd.f32 %v2103, %v2297
    %v2299 = vpop.f32.mrf.mxu0
    %2300 = vmatprep.mubr.f32.mxu0 0.0
    %2301 = vmatmul.mubr.f32.gmra.mxu0 %v2171
    %v2302 = vpop.f32.mrf.mxu0
    %v2303 = vadd.f32 %v2104, %v2302
    %v2304 = vpop.f32.mrf.mxu0
    %2305 = vmatprep.mubr.f32.mxu0 0.0
    %2306 = vmatmul.mubr.f32.gmra.mxu0 %v2174
    %v2307 = vpop.f32.mrf.mxu0
    %v2308 = vadd.f32 %v2105, %v2307
    %v2309 = vpop.f32.mrf.mxu0
    %2310 = vmatprep.mubr.f32.mxu0 0.0
    %2311 = vmatmul.mubr.f32.gmra.mxu0 %v2177
    %v2312 = vpop.f32.mrf.mxu0
    %v2313 = vadd.f32 %v2106, %v2312
    %v2314 = vpop.f32.mrf.mxu0
    %2315 = vmatprep.mubr.f32.mxu0 0.0
    %2316 = vmatmul.mubr.f32.gmra.mxu0 %v2180
    %v2317 = vpop.f32.mrf.mxu0
    %v2318 = vadd.f32 %v2107, %v2317
    %v2319 = vpop.f32.mrf.mxu0
    %2320 = vmatprep.mubr.f32.mxu0 0.0
    %2321 = vmatmul.mubr.f32.gmra.mxu0 %v2183
    %v2322 = vpop.f32.mrf.mxu0
    %v2323 = vadd.f32 %v2108, %v2322
    %v2324 = vpop.f32.mrf.mxu0
    %2325 = vmatprep.mubr.f32.mxu0 0.0
    %2326 = vmatmul.mubr.f32.gmra.mxu0 %v2186
    %v2327 = vpop.f32.mrf.mxu0
    %v2328 = vadd.f32 %v2109, %v2327
    %v2329 = vpop.f32.mrf.mxu0
    %2330 = vmatprep.mubr.f32.mxu0 0.0
    %2331 = vmatmul.mubr.f32.gmra.mxu0 %v2189
    %v2332 = vpop.f32.mrf.mxu0
    %v2333 = vadd.f32 %v2110, %v2332
    %v2334 = vpop.f32.mrf.mxu0
    %2335 = vdwg.mxu0
    %2336 = vmax.xlane.f32.xlu0 %v2258
    %v2337 = vpop.xlane.xlu0 %2336
    %2338 = vmax.xlane.f32.xlu0 %v2263
    %v2339 = vpop.xlane.xlu0 %2338
    %2340 = vmax.xlane.f32.xlu0 %v2268
    %v2341 = vpop.xlane.xlu0 %2340
    %2342 = vmax.xlane.f32.xlu0 %v2273
    %v2343 = vpop.xlane.xlu0 %2342
    %2344 = vmax.xlane.f32.xlu0 %v2278
    %v2345 = vpop.xlane.xlu0 %2344
    %2346 = vmax.xlane.f32.xlu0 %v2283
    %v2347 = vpop.xlane.xlu0 %2346
    %2348 = vmax.xlane.f32.xlu0 %v2288
    %v2349 = vpop.xlane.xlu0 %2348
    %2350 = vmax.xlane.f32.xlu0 %v2293
    %v2351 = vpop.xlane.xlu0 %2350
    %2352 = vmax.xlane.f32.xlu0 %v2298
    %v2353 = vpop.xlane.xlu0 %2352
    %2354 = vmax.xlane.f32.xlu0 %v2303
    %v2355 = vpop.xlane.xlu0 %2354
    %2356 = vmax.xlane.f32.xlu0 %v2308
    %v2357 = vpop.xlane.xlu0 %2356
    %2358 = vmax.xlane.f32.xlu0 %v2313
    %v2359 = vpop.xlane.xlu0 %2358
    %2360 = vmax.xlane.f32.xlu0 %v2318
    %v2361 = vpop.xlane.xlu0 %2360
    %2362 = vmax.xlane.f32.xlu0 %v2323
    %v2363 = vpop.xlane.xlu0 %2362
    %2364 = vmax.xlane.f32.xlu0 %v2328
    %v2365 = vpop.xlane.xlu0 %2364
    %2366 = vmax.xlane.f32.xlu0 %v2333
    %v2367 = vpop.xlane.xlu0 %2366
    %v2368 = vsub.f32 %v2258, %v2337
    %v2369 = vsub.f32 %v2263, %v2339
    %v2370 = vsub.f32 %v2268, %v2341
    %v2371 = vsub.f32 %v2273, %v2343
    %v2372 = vsub.f32 %v2278, %v2345
    %v2373 = vsub.f32 %v2283, %v2347
    %v2374 = vsub.f32 %v2288, %v2349
    %v2375 = vsub.f32 %v2293, %v2351
    %v2376 = vsub.f32 %v2298, %v2353
    %v2377 = vsub.f32 %v2303, %v2355
    %v2378 = vsub.f32 %v2308, %v2357
    %v2379 = vsub.f32 %v2313, %v2359
    %v2380 = vsub.f32 %v2318, %v2361
    %v2381 = vsub.f32 %v2323, %v2363
    %v2382 = vsub.f32 %v2328, %v2365
    %v2383 = vsub.f32 %v2333, %v2367
    %v2384 = vmul.f32 %v2368, 1.442695
    %v2385 = vpow.pop %v2384
    %v2386 = vmul.f32 %v2369, 1.442695
    %v2387 = vpow.pop %v2386
    %v2388 = vmul.f32 %v2370, 1.442695
    %v2389 = vpow.pop %v2388
    %v2390 = vmul.f32 %v2371, 1.442695
    %v2391 = vpow.pop %v2390
    %v2392 = vmul.f32 %v2372, 1.442695
    %v2393 = vpow.pop %v2392
    %v2394 = vmul.f32 %v2373, 1.442695
    %v2395 = vpow.pop %v2394
    %v2396 = vmul.f32 %v2374, 1.442695
    %v2397 = vpow.pop %v2396
    %v2398 = vmul.f32 %v2375, 1.442695
    %v2399 = vpow.pop %v2398
    %v2400 = vmul.f32 %v2376, 1.442695
    %v2401 = vpow.pop %v2400
    %v2402 = vmul.f32 %v2377, 1.442695
    %v2403 = vpow.pop %v2402
    %v2404 = vmul.f32 %v2378, 1.442695
    %v2405 = vpow.pop %v2404
    %v2406 = vmul.f32 %v2379, 1.442695
    %v2407 = vpow.pop %v2406
    %v2408 = vmul.f32 %v2380, 1.442695
    %v2409 = vpow.pop %v2408
    %v2410 = vmul.f32 %v2381, 1.442695
    %v2411 = vpow.pop %v2410
    %v2412 = vmul.f32 %v2382, 1.442695
    %v2413 = vpow.pop %v2412
    %v2414 = vmul.f32 %v2383, 1.442695
    %v2415 = vpow.pop %v2414
    %2416 = vadd.xlane.f32.xlu0 %v2385
    %v2417 = vpop.xlane.xlu0 %2416
    %2418 = vadd.xlane.f32.xlu0 %v2387
    %v2419 = vpop.xlane.xlu0 %2418
    %2420 = vadd.xlane.f32.xlu0 %v2389
    %v2421 = vpop.xlane.xlu0 %2420
    %2422 = vadd.xlane.f32.xlu0 %v2391
    %v2423 = vpop.xlane.xlu0 %2422
    %2424 = vadd.xlane.f32.xlu0 %v2393
    %v2425 = vpop.xlane.xlu0 %2424
    %2426 = vadd.xlane.f32.xlu0 %v2395
    %v2427 = vpop.xlane.xlu0 %2426
    %2428 = vadd.xlane.f32.xlu0 %v2397
    %v2429 = vpop.xlane.xlu0 %2428
    %2430 = vadd.xlane.f32.xlu0 %v2399
    %v2431 = vpop.xlane.xlu0 %2430
    %2432 = vadd.xlane.f32.xlu0 %v2401
    %v2433 = vpop.xlane.xlu0 %2432
    %2434 = vadd.xlane.f32.xlu0 %v2403
    %v2435 = vpop.xlane.xlu0 %2434
    %2436 = vadd.xlane.f32.xlu0 %v2405
    %v2437 = vpop.xlane.xlu0 %2436
    %2438 = vadd.xlane.f32.xlu0 %v2407
    %v2439 = vpop.xlane.xlu0 %2438
    %2440 = vadd.xlane.f32.xlu0 %v2409
    %v2441 = vpop.xlane.xlu0 %2440
    %2442 = vadd.xlane.f32.xlu0 %v2411
    %v2443 = vpop.xlane.xlu0 %2442
    %2444 = vadd.xlane.f32.xlu0 %v2413
    %v2445 = vpop.xlane.xlu0 %2444
    %2446 = vadd.xlane.f32.xlu0 %v2415
    %v2447 = vpop.xlane.xlu0 %2446
    %v2448 = vrcp.pop %v2417
    %v2449 = vmul.f32 %v2385, %v2448
    %v2450 = vrcp.pop %v2419
    %v2451 = vmul.f32 %v2387, %v2450
    %v2452 = vrcp.pop %v2421
    %v2453 = vmul.f32 %v2389, %v2452
    %v2454 = vrcp.pop %v2423
    %v2455 = vmul.f32 %v2391, %v2454
    %v2456 = vrcp.pop %v2425
    %v2457 = vmul.f32 %v2393, %v2456
    %v2458 = vrcp.pop %v2427
    %v2459 = vmul.f32 %v2395, %v2458
    %v2460 = vrcp.pop %v2429
    %v2461 = vmul.f32 %v2397, %v2460
    %v2462 = vrcp.pop %v2431
    %v2463 = vmul.f32 %v2399, %v2462
    %v2464 = vrcp.pop %v2433
    %v2465 = vmul.f32 %v2401, %v2464
    %v2466 = vrcp.pop %v2435
    %v2467 = vmul.f32 %v2403, %v2466
    %v2468 = vrcp.pop %v2437
    %v2469 = vmul.f32 %v2405, %v2468
    %v2470 = vrcp.pop %v2439
    %v2471 = vmul.f32 %v2407, %v2470
    %v2472 = vrcp.pop %v2441
    %v2473 = vmul.f32 %v2409, %v2472
    %v2474 = vrcp.pop %v2443
    %v2475 = vmul.f32 %v2411, %v2474
    %v2476 = vrcp.pop %v2445
    %v2477 = vmul.f32 %v2413, %v2476
    %v2478 = vrcp.pop %v2447
    %v2479 = vmul.f32 %v2415, %v2478
    %2480 = vmatprep.subr.mxu0 0.0
    %2481 = vmatpush1.xpose.msra.mxu0 %v2479
    %2482 = vmatprep.subr.mxu0 0.0
    %2483 = vmatpush1.xpose.msra.mxu0 %v2477
    %2484 = vmatprep.subr.mxu0 0.0
    %2485 = vmatpush1.xpose.msra.mxu0 %v2475
    %2486 = vmatprep.subr.mxu0 0.0
    %2487 = vmatpush1.xpose.msra.mxu0 %v2473
    %2488 = vmatprep.subr.mxu0 0.0
    %2489 = vmatpush1.xpose.msra.mxu0 %v2471
    %2490 = vmatprep.subr.mxu0 0.0
    %2491 = vmatpush1.xpose.msra.mxu0 %v2469
    %2492 = vmatprep.subr.mxu0 0.0
    %2493 = vmatpush1.xpose.msra.mxu0 %v2467
    %2494 = vmatprep.subr.mxu0 0.0
    %2495 = vmatpush1.xpose.msra.mxu0 %v2465
    %2496 = vmatprep.subr.mxu0 0.0
    %2497 = vmatpush1.xpose.msra.mxu0 %v2463
    %2498 = vmatprep.subr.mxu0 0.0
    %2499 = vmatpush1.xpose.msra.mxu0 %v2461
    %2500 = vmatprep.subr.mxu0 0.0
    %2501 = vmatpush1.xpose.msra.mxu0 %v2459
    %2502 = vmatprep.subr.mxu0 0.0
    %2503 = vmatpush1.xpose.msra.mxu0 %v2457
    %2504 = vmatprep.subr.mxu0 0.0
    %2505 = vmatpush1.xpose.msra.mxu0 %v2455
    %2506 = vmatprep.subr.mxu0 0.0
    %2507 = vmatpush1.xpose.msra.mxu0 %v2453
    %2508 = vmatprep.subr.mxu0 0.0
    %2509 = vmatpush1.xpose.msra.mxu0 %v2451
    %2510 = vmatprep.subr.mxu0 0.0
    %2511 = vmatpush1.xpose.msra.mxu0 %v2449
    %2512 = vmatprep.subr.mxu0 0.0
    %2513 = vmatpush2.xpose.msra.mxu0 0.0
    %2514 = vmatprep.subr.mxu0 0.0
    %2515 = vmatpush2.xpose.msra.mxu0 0.0
    %2516 = vmatprep.subr.mxu0 0.0
    %2517 = vmatpush2.xpose.msra.mxu0 0.0
    %2518 = vmatprep.subr.mxu0 0.0
    %2519 = vmatpush2.xpose.msra.mxu0 0.0
    %2520 = vmatprep.subr.mxu0 0.0
    %2521 = vmatpush2.xpose.msra.mxu0 0.0
    %2522 = vmatprep.subr.mxu0 0.0
    %2523 = vmatpush2.xpose.msra.mxu0 0.0
    %2524 = vmatprep.subr.mxu0 0.0
    %2525 = vmatpush2.xpose.msra.mxu0 0.0
    %2526 = vmatprep.subr.mxu0 0.0
    %2527 = vmatpush2.xpose.msra.mxu0 0.0
    %2528 = vmatprep.subr.mxu0 0.0
    %2529 = vmatpush2.xpose.msra.mxu0 0.0
    %2530 = vmatprep.subr.mxu0 0.0
    %2531 = vmatpush2.xpose.msra.mxu0 0.0
    %2532 = vmatprep.subr.mxu0 0.0
    %2533 = vmatpush2.xpose.msra.mxu0 0.0
    %2534 = vmatprep.subr.mxu0 0.0
    %2535 = vmatpush2.xpose.msra.mxu0 0.0
    %2536 = vmatprep.subr.mxu0 0.0
    %2537 = vmatpush2.xpose.msra.mxu0 0.0
    %2538 = vmatprep.subr.mxu0 0.0
    %2539 = vmatpush2.xpose.msra.mxu0 0.0
    %2540 = vmatprep.subr.mxu0 0.0
    %2541 = vmatpush2.xpose.msra.mxu0 0.0
    %2542 = vmatprep.subr.mxu0 0.0
    %2543 = vmatpush2.xpose.msra.mxu0 0.0
    %2544 = vmatprep.mubr.f32.mxu0 0.0
    %2545 = vmatmul.mubr.f32.gmra.mxu0 %v294
    %v2546 = vpop.f32.mrf.mxu0
    %v2547 = vadd.f32 0.0, %v2546
    %v2548 = vpop.f32.mrf.mxu0
    %2549 = vdwg.mxu0
    %2550 = vxpose.xlu0.b32.start [1/16] %v248, 128
    %2551 = vxpose.xlu0.b32.cont [2/16] 0.0, 128
    %2552 = vxpose.xlu0.b32.cont [3/16] 0.0, 128
    %2553 = vxpose.xlu0.b32.cont [4/16] 0.0, 128
    %2554 = vxpose.xlu0.b32.cont [5/16] 0.0, 128
    %2555 = vxpose.xlu0.b32.cont [6/16] 0.0, 128
    %2556 = vxpose.xlu0.b32.cont [7/16] 0.0, 128
    %2557 = vxpose.xlu0.b32.cont [8/16] 0.0, 128
    %2558 = vxpose.xlu0.b32.cont [9/16] 0.0, 128
    %2559 = vxpose.xlu0.b32.cont [10/16] 0.0, 128
    %2560 = vxpose.xlu0.b32.cont [11/16] 0.0, 128
    %2561 = vxpose.xlu0.b32.cont [12/16] 0.0, 128
    %2562 = vxpose.xlu0.b32.cont [13/16] 0.0, 128
    %2563 = vxpose.xlu0.b32.cont [14/16] 0.0, 128
    %2564 = vxpose.xlu0.b32.cont [15/16] 0.0, 128
    %2565 = vxpose.xlu0.b32.end [16/16] 0.0, 128
    %v2566 = vpop.trf.xlu0
    %v2567 = vpop.trf.xlu0
    %v2568 = vpop.trf.xlu0
    %v2569 = vpop.trf.xlu0
    %v2570 = vpop.trf.xlu0
    %v2571 = vpop.trf.xlu0
    %v2572 = vpop.trf.xlu0
    %v2573 = vpop.trf.xlu0
    %v2574 = vpop.trf.xlu0
    %v2575 = vpop.trf.xlu0
    %v2576 = vpop.trf.xlu0
    %v2577 = vpop.trf.xlu0
    %v2578 = vpop.trf.xlu0
    %v2579 = vpop.trf.xlu0
    %v2580 = vpop.trf.xlu0
    %v2581 = vpop.trf.xlu0
    %v2583 = vsel %vm352, %v2566, 0
    %v2586 = vsel %vm352, %v2567, 0
    %v2589 = vsel %vm352, %v2568, 0
    %v2592 = vsel %vm352, %v2569, 0
    %v2595 = vsel %vm352, %v2570, 0
    %v2598 = vsel %vm352, %v2571, 0
    %v2601 = vsel %vm352, %v2572, 0
    %v2604 = vsel %vm352, %v2573, 0
    %v2607 = vsel %vm352, %v2574, 0
    %v2610 = vsel %vm352, %v2575, 0
    %v2613 = vsel %vm352, %v2576, 0
    %v2616 = vsel %vm352, %v2577, 0
    %v2619 = vsel %vm352, %v2578, 0
    %v2622 = vsel %vm352, %v2579, 0
    %v2625 = vsel %vm352, %v2580, 0
    %v2628 = vsel %vm352, %v2581, 0
    %2630 = vmatprep.subr.mxu0 0.0
    %2631 = vmatpush1.msra.mxu0 0.0
    %2632 = vmatprep.subr.mxu0 0.0
    %2633 = vmatpush1.msra.mxu0 0.0
    %2634 = vmatprep.subr.mxu0 0.0
    %2635 = vmatpush1.msra.mxu0 0.0
    %2636 = vmatprep.subr.mxu0 0.0
    %2637 = vmatpush1.msra.mxu0 0.0
    %2638 = vmatprep.subr.mxu0 0.0
    %2639 = vmatpush1.msra.mxu0 0.0
    %2640 = vmatprep.subr.mxu0 0.0
    %2641 = vmatpush1.msra.mxu0 0.0
    %2642 = vmatprep.subr.mxu0 0.0
    %2643 = vmatpush1.msra.mxu0 0.0
    %2644 = vmatprep.subr.mxu0 0.0
    %2645 = vmatpush1.msra.mxu0 0.0
    %2646 = vmatprep.subr.mxu0 0.0
    %2647 = vmatpush1.msra.mxu0 0.0
    %2648 = vmatprep.subr.mxu0 0.0
    %2649 = vmatpush1.msra.mxu0 0.0
    %2650 = vmatprep.subr.mxu0 0.0
    %2651 = vmatpush1.msra.mxu0 0.0
    %2652 = vmatprep.subr.mxu0 0.0
    %2653 = vmatpush1.msra.mxu0 0.0
    %2654 = vmatprep.subr.mxu0 0.0
    %2655 = vmatpush1.msra.mxu0 0.0
    %2656 = vmatprep.subr.mxu0 0.0
    %2657 = vmatpush1.msra.mxu0 0.0
    %2658 = vmatprep.subr.mxu0 0.0
    %2659 = vmatpush1.msra.mxu0 0.0
    %2660 = vmatprep.subr.mxu0 0.0
    %2661 = vmatpush1.msra.mxu0 %v272
    %2662 = vmatprep.subr.mxu0 0.0
    %2663 = vmatpush2.msra.mxu0 0.0
    %2664 = vmatprep.subr.mxu0 0.0
    %2665 = vmatpush2.msra.mxu0 0.0
    %2666 = vmatprep.subr.mxu0 0.0
    %2667 = vmatpush2.msra.mxu0 0.0
    %2668 = vmatprep.subr.mxu0 0.0
    %2669 = vmatpush2.msra.mxu0 0.0
    %2670 = vmatprep.subr.mxu0 0.0
    %2671 = vmatpush2.msra.mxu0 0.0
    %2672 = vmatprep.subr.mxu0 0.0
    %2673 = vmatpush2.msra.mxu0 0.0
    %2674 = vmatprep.subr.mxu0 0.0
    %2675 = vmatpush2.msra.mxu0 0.0
    %2676 = vmatprep.subr.mxu0 0.0
    %2677 = vmatpush2.msra.mxu0 0.0
    %2678 = vmatprep.subr.mxu0 0.0
    %2679 = vmatpush2.msra.mxu0 0.0
    %2680 = vmatprep.subr.mxu0 0.0
    %2681 = vmatpush2.msra.mxu0 0.0
    %2682 = vmatprep.subr.mxu0 0.0
    %2683 = vmatpush2.msra.mxu0 0.0
    %2684 = vmatprep.subr.mxu0 0.0
    %2685 = vmatpush2.msra.mxu0 0.0
    %2686 = vmatprep.subr.mxu0 0.0
    %2687 = vmatpush2.msra.mxu0 0.0
    %2688 = vmatprep.subr.mxu0 0.0
    %2689 = vmatpush2.msra.mxu0 0.0
    %2690 = vmatprep.subr.mxu0 0.0
    %2691 = vmatpush2.msra.mxu0 0.0
    %2692 = vmatprep.subr.mxu0 0.0
    %2693 = vmatpush2.msra.mxu0 0.0
    %2694 = vmatprep.mubr.f32.mxu0 0.0
    %2695 = vmatmul.mubr.f32.gmra.mxu0 %v2583
    %v2696 = vpop.f32.mrf.mxu0
    %v2697 = vadd.f32 %v2095, %v2696
    %v2698 = vpop.f32.mrf.mxu0
    %2699 = vmatprep.mubr.f32.mxu0 0.0
    %2700 = vmatmul.mubr.f32.gmra.mxu0 %v2586
    %v2701 = vpop.f32.mrf.mxu0
    %v2702 = vadd.f32 %v2096, %v2701
    %v2703 = vpop.f32.mrf.mxu0
    %2704 = vmatprep.mubr.f32.mxu0 0.0
    %2705 = vmatmul.mubr.f32.gmra.mxu0 %v2589
    %v2706 = vpop.f32.mrf.mxu0
    %v2707 = vadd.f32 %v2097, %v2706
    %v2708 = vpop.f32.mrf.mxu0
    %2709 = vmatprep.mubr.f32.mxu0 0.0
    %2710 = vmatmul.mubr.f32.gmra.mxu0 %v2592
    %v2711 = vpop.f32.mrf.mxu0
    %v2712 = vadd.f32 %v2098, %v2711
    %v2713 = vpop.f32.mrf.mxu0
    %2714 = vmatprep.mubr.f32.mxu0 0.0
    %2715 = vmatmul.mubr.f32.gmra.mxu0 %v2595
    %v2716 = vpop.f32.mrf.mxu0
    %v2717 = vadd.f32 %v2099, %v2716
    %v2718 = vpop.f32.mrf.mxu0
    %2719 = vmatprep.mubr.f32.mxu0 0.0
    %2720 = vmatmul.mubr.f32.gmra.mxu0 %v2598
    %v2721 = vpop.f32.mrf.mxu0
    %v2722 = vadd.f32 %v2100, %v2721
    %v2723 = vpop.f32.mrf.mxu0
    %2724 = vmatprep.mubr.f32.mxu0 0.0
    %2725 = vmatmul.mubr.f32.gmra.mxu0 %v2601
    %v2726 = vpop.f32.mrf.mxu0
    %v2727 = vadd.f32 %v2101, %v2726
    %v2728 = vpop.f32.mrf.mxu0
    %2729 = vmatprep.mubr.f32.mxu0 0.0
    %2730 = vmatmul.mubr.f32.gmra.mxu0 %v2604
    %v2731 = vpop.f32.mrf.mxu0
    %v2732 = vadd.f32 %v2102, %v2731
    %v2733 = vpop.f32.mrf.mxu0
    %2734 = vmatprep.mubr.f32.mxu0 0.0
    %2735 = vmatmul.mubr.f32.gmra.mxu0 %v2607
    %v2736 = vpop.f32.mrf.mxu0
    %v2737 = vadd.f32 %v2103, %v2736
    %v2738 = vpop.f32.mrf.mxu0
    %2739 = vmatprep.mubr.f32.mxu0 0.0
    %2740 = vmatmul.mubr.f32.gmra.mxu0 %v2610
    %v2741 = vpop.f32.mrf.mxu0
    %v2742 = vadd.f32 %v2104, %v2741
    %v2743 = vpop.f32.mrf.mxu0
    %2744 = vmatprep.mubr.f32.mxu0 0.0
    %2745 = vmatmul.mubr.f32.gmra.mxu0 %v2613
    %v2746 = vpop.f32.mrf.mxu0
    %v2747 = vadd.f32 %v2105, %v2746
    %v2748 = vpop.f32.mrf.mxu0
    %2749 = vmatprep.mubr.f32.mxu0 0.0
    %2750 = vmatmul.mubr.f32.gmra.mxu0 %v2616
    %v2751 = vpop.f32.mrf.mxu0
    %v2752 = vadd.f32 %v2106, %v2751
    %v2753 = vpop.f32.mrf.mxu0
    %2754 = vmatprep.mubr.f32.mxu0 0.0
    %2755 = vmatmul.mubr.f32.gmra.mxu0 %v2619
    %v2756 = vpop.f32.mrf.mxu0
    %v2757 = vadd.f32 %v2107, %v2756
    %v2758 = vpop.f32.mrf.mxu0
    %2759 = vmatprep.mubr.f32.mxu0 0.0
    %2760 = vmatmul.mubr.f32.gmra.mxu0 %v2622
    %v2761 = vpop.f32.mrf.mxu0
    %v2762 = vadd.f32 %v2108, %v2761
    %v2763 = vpop.f32.mrf.mxu0
    %2764 = vmatprep.mubr.f32.mxu0 0.0
    %2765 = vmatmul.mubr.f32.gmra.mxu0 %v2625
    %v2766 = vpop.f32.mrf.mxu0
    %v2767 = vadd.f32 %v2109, %v2766
    %v2768 = vpop.f32.mrf.mxu0
    %2769 = vmatprep.mubr.f32.mxu0 0.0
    %2770 = vmatmul.mubr.f32.gmra.mxu0 %v2628
    %v2771 = vpop.f32.mrf.mxu0
    %v2772 = vadd.f32 %v2110, %v2771
    %v2773 = vpop.f32.mrf.mxu0
    %2774 = vdwg.mxu0
    %2775 = vmax.xlane.f32.xlu0 %v2697
    %v2776 = vpop.xlane.xlu0 %2775
    %2777 = vmax.xlane.f32.xlu0 %v2702
    %v2778 = vpop.xlane.xlu0 %2777
    %2779 = vmax.xlane.f32.xlu0 %v2707
    %v2780 = vpop.xlane.xlu0 %2779
    %2781 = vmax.xlane.f32.xlu0 %v2712
    %v2782 = vpop.xlane.xlu0 %2781
    %2783 = vmax.xlane.f32.xlu0 %v2717
    %v2784 = vpop.xlane.xlu0 %2783
    %2785 = vmax.xlane.f32.xlu0 %v2722
    %v2786 = vpop.xlane.xlu0 %2785
    %2787 = vmax.xlane.f32.xlu0 %v2727
    %v2788 = vpop.xlane.xlu0 %2787
    %2789 = vmax.xlane.f32.xlu0 %v2732
    %v2790 = vpop.xlane.xlu0 %2789
    %2791 = vmax.xlane.f32.xlu0 %v2737
    %v2792 = vpop.xlane.xlu0 %2791
    %2793 = vmax.xlane.f32.xlu0 %v2742
    %v2794 = vpop.xlane.xlu0 %2793
    %2795 = vmax.xlane.f32.xlu0 %v2747
    %v2796 = vpop.xlane.xlu0 %2795
    %2797 = vmax.xlane.f32.xlu0 %v2752
    %v2798 = vpop.xlane.xlu0 %2797
    %2799 = vmax.xlane.f32.xlu0 %v2757
    %v2800 = vpop.xlane.xlu0 %2799
    %2801 = vmax.xlane.f32.xlu0 %v2762
    %v2802 = vpop.xlane.xlu0 %2801
    %2803 = vmax.xlane.f32.xlu0 %v2767
    %v2804 = vpop.xlane.xlu0 %2803
    %2805 = vmax.xlane.f32.xlu0 %v2772
    %v2806 = vpop.xlane.xlu0 %2805
    %v2807 = vsub.f32 %v2697, %v2776
    %v2808 = vsub.f32 %v2702, %v2778
    %v2809 = vsub.f32 %v2707, %v2780
    %v2810 = vsub.f32 %v2712, %v2782
    %v2811 = vsub.f32 %v2717, %v2784
    %v2812 = vsub.f32 %v2722, %v2786
    %v2813 = vsub.f32 %v2727, %v2788
    %v2814 = vsub.f32 %v2732, %v2790
    %v2815 = vsub.f32 %v2737, %v2792
    %v2816 = vsub.f32 %v2742, %v2794
    %v2817 = vsub.f32 %v2747, %v2796
    %v2818 = vsub.f32 %v2752, %v2798
    %v2819 = vsub.f32 %v2757, %v2800
    %v2820 = vsub.f32 %v2762, %v2802
    %v2821 = vsub.f32 %v2767, %v2804
    %v2822 = vsub.f32 %v2772, %v2806
    %v2823 = vmul.f32 %v2807, 1.442695
    %v2824 = vpow.pop %v2823
    %v2825 = vmul.f32 %v2808, 1.442695
    %v2826 = vpow.pop %v2825
    %v2827 = vmul.f32 %v2809, 1.442695
    %v2828 = vpow.pop %v2827
    %v2829 = vmul.f32 %v2810, 1.442695
    %v2830 = vpow.pop %v2829
    %v2831 = vmul.f32 %v2811, 1.442695
    %v2832 = vpow.pop %v2831
    %v2833 = vmul.f32 %v2812, 1.442695
    %v2834 = vpow.pop %v2833
    %v2835 = vmul.f32 %v2813, 1.442695
    %v2836 = vpow.pop %v2835
    %v2837 = vmul.f32 %v2814, 1.442695
    %v2838 = vpow.pop %v2837
    %v2839 = vmul.f32 %v2815, 1.442695
    %v2840 = vpow.pop %v2839
    %v2841 = vmul.f32 %v2816, 1.442695
    %v2842 = vpow.pop %v2841
    %v2843 = vmul.f32 %v2817, 1.442695
    %v2844 = vpow.pop %v2843
    %v2845 = vmul.f32 %v2818, 1.442695
    %v2846 = vpow.pop %v2845
    %v2847 = vmul.f32 %v2819, 1.442695
    %v2848 = vpow.pop %v2847
    %v2849 = vmul.f32 %v2820, 1.442695
    %v2850 = vpow.pop %v2849
    %v2851 = vmul.f32 %v2821, 1.442695
    %v2852 = vpow.pop %v2851
    %v2853 = vmul.f32 %v2822, 1.442695
    %v2854 = vpow.pop %v2853
    %2855 = vadd.xlane.f32.xlu0 %v2824
    %v2856 = vpop.xlane.xlu0 %2855
    %2857 = vadd.xlane.f32.xlu0 %v2826
    %v2858 = vpop.xlane.xlu0 %2857
    %2859 = vadd.xlane.f32.xlu0 %v2828
    %v2860 = vpop.xlane.xlu0 %2859
    %2861 = vadd.xlane.f32.xlu0 %v2830
    %v2862 = vpop.xlane.xlu0 %2861
    %2863 = vadd.xlane.f32.xlu0 %v2832
    %v2864 = vpop.xlane.xlu0 %2863
    %2865 = vadd.xlane.f32.xlu0 %v2834
    %v2866 = vpop.xlane.xlu0 %2865
    %2867 = vadd.xlane.f32.xlu0 %v2836
    %v2868 = vpop.xlane.xlu0 %2867
    %2869 = vadd.xlane.f32.xlu0 %v2838
    %v2870 = vpop.xlane.xlu0 %2869
    %2871 = vadd.xlane.f32.xlu0 %v2840
    %v2872 = vpop.xlane.xlu0 %2871
    %2873 = vadd.xlane.f32.xlu0 %v2842
    %v2874 = vpop.xlane.xlu0 %2873
    %2875 = vadd.xlane.f32.xlu0 %v2844
    %v2876 = vpop.xlane.xlu0 %2875
    %2877 = vadd.xlane.f32.xlu0 %v2846
    %v2878 = vpop.xlane.xlu0 %2877
    %2879 = vadd.xlane.f32.xlu0 %v2848
    %v2880 = vpop.xlane.xlu0 %2879
    %2881 = vadd.xlane.f32.xlu0 %v2850
    %v2882 = vpop.xlane.xlu0 %2881
    %2883 = vadd.xlane.f32.xlu0 %v2852
    %v2884 = vpop.xlane.xlu0 %2883
    %2885 = vadd.xlane.f32.xlu0 %v2854
    %v2886 = vpop.xlane.xlu0 %2885
    %v2887 = vrcp.pop %v2856
    %v2888 = vmul.f32 %v2824, %v2887
    %v2889 = vrcp.pop %v2858
    %v2890 = vmul.f32 %v2826, %v2889
    %v2891 = vrcp.pop %v2860
    %v2892 = vmul.f32 %v2828, %v2891
    %v2893 = vrcp.pop %v2862
    %v2894 = vmul.f32 %v2830, %v2893
    %v2895 = vrcp.pop %v2864
    %v2896 = vmul.f32 %v2832, %v2895
    %v2897 = vrcp.pop %v2866
    %v2898 = vmul.f32 %v2834, %v2897
    %v2899 = vrcp.pop %v2868
    %v2900 = vmul.f32 %v2836, %v2899
    %v2901 = vrcp.pop %v2870
    %v2902 = vmul.f32 %v2838, %v2901
    %v2903 = vrcp.pop %v2872
    %v2904 = vmul.f32 %v2840, %v2903
    %v2905 = vrcp.pop %v2874
    %v2906 = vmul.f32 %v2842, %v2905
    %v2907 = vrcp.pop %v2876
    %v2908 = vmul.f32 %v2844, %v2907
    %v2909 = vrcp.pop %v2878
    %v2910 = vmul.f32 %v2846, %v2909
    %v2911 = vrcp.pop %v2880
    %v2912 = vmul.f32 %v2848, %v2911
    %v2913 = vrcp.pop %v2882
    %v2914 = vmul.f32 %v2850, %v2913
    %v2915 = vrcp.pop %v2884
    %v2916 = vmul.f32 %v2852, %v2915
    %v2917 = vrcp.pop %v2886
    %v2918 = vmul.f32 %v2854, %v2917
    %2919 = vmatprep.subr.mxu0 0.0
    %2920 = vmatpush1.xpose.msra.mxu0 %v2918
    %2921 = vmatprep.subr.mxu0 0.0
    %2922 = vmatpush1.xpose.msra.mxu0 %v2916
    %2923 = vmatprep.subr.mxu0 0.0
    %2924 = vmatpush1.xpose.msra.mxu0 %v2914
    %2925 = vmatprep.subr.mxu0 0.0
    %2926 = vmatpush1.xpose.msra.mxu0 %v2912
    %2927 = vmatprep.subr.mxu0 0.0
    %2928 = vmatpush1.xpose.msra.mxu0 %v2910
    %2929 = vmatprep.subr.mxu0 0.0
    %2930 = vmatpush1.xpose.msra.mxu0 %v2908
    %2931 = vmatprep.subr.mxu0 0.0
    %2932 = vmatpush1.xpose.msra.mxu0 %v2906
    %2933 = vmatprep.subr.mxu0 0.0
    %2934 = vmatpush1.xpose.msra.mxu0 %v2904
    %2935 = vmatprep.subr.mxu0 0.0
    %2936 = vmatpush1.xpose.msra.mxu0 %v2902
    %2937 = vmatprep.subr.mxu0 0.0
    %2938 = vmatpush1.xpose.msra.mxu0 %v2900
    %2939 = vmatprep.subr.mxu0 0.0
    %2940 = vmatpush1.xpose.msra.mxu0 %v2898
    %2941 = vmatprep.subr.mxu0 0.0
    %2942 = vmatpush1.xpose.msra.mxu0 %v2896
    %2943 = vmatprep.subr.mxu0 0.0
    %2944 = vmatpush1.xpose.msra.mxu0 %v2894
    %2945 = vmatprep.subr.mxu0 0.0
    %2946 = vmatpush1.xpose.msra.mxu0 %v2892
    %2947 = vmatprep.subr.mxu0 0.0
    %2948 = vmatpush1.xpose.msra.mxu0 %v2890
    %2949 = vmatprep.subr.mxu0 0.0
    %2950 = vmatpush1.xpose.msra.mxu0 %v2888
    %2951 = vmatprep.subr.mxu0 0.0
    %2952 = vmatpush2.xpose.msra.mxu0 0.0
    %2953 = vmatprep.subr.mxu0 0.0
    %2954 = vmatpush2.xpose.msra.mxu0 0.0
    %2955 = vmatprep.subr.mxu0 0.0
    %2956 = vmatpush2.xpose.msra.mxu0 0.0
    %2957 = vmatprep.subr.mxu0 0.0
    %2958 = vmatpush2.xpose.msra.mxu0 0.0
    %2959 = vmatprep.subr.mxu0 0.0
    %2960 = vmatpush2.xpose.msra.mxu0 0.0
    %2961 = vmatprep.subr.mxu0 0.0
    %2962 = vmatpush2.xpose.msra.mxu0 0.0
    %2963 = vmatprep.subr.mxu0 0.0
    %2964 = vmatpush2.xpose.msra.mxu0 0.0
    %2965 = vmatprep.subr.mxu0 0.0
    %2966 = vmatpush2.xpose.msra.mxu0 0.0
    %2967 = vmatprep.subr.mxu0 0.0
    %2968 = vmatpush2.xpose.msra.mxu0 0.0
    %2969 = vmatprep.subr.mxu0 0.0
    %2970 = vmatpush2.xpose.msra.mxu0 0.0
    %2971 = vmatprep.subr.mxu0 0.0
    %2972 = vmatpush2.xpose.msra.mxu0 0.0
    %2973 = vmatprep.subr.mxu0 0.0
    %2974 = vmatpush2.xpose.msra.mxu0 0.0
    %2975 = vmatprep.subr.mxu0 0.0
    %2976 = vmatpush2.xpose.msra.mxu0 0.0
    %2977 = vmatprep.subr.mxu0 0.0
    %2978 = vmatpush2.xpose.msra.mxu0 0.0
    %2979 = vmatprep.subr.mxu0 0.0
    %2980 = vmatpush2.xpose.msra.mxu0 0.0
    %2981 = vmatprep.subr.mxu0 0.0
    %2982 = vmatpush2.xpose.msra.mxu0 0.0
    %2983 = vmatprep.mubr.f32.mxu0 0.0
    %2984 = vmatmul.mubr.f32.gmra.mxu0 %v296
    %v2985 = vpop.f32.mrf.mxu0
    %v2986 = vadd.f32 0.0, %v2985
    %v2987 = vpop.f32.mrf.mxu0
    %2988 = vdwg.mxu0
    %s2989 = scalar_lea.vmem [#allocation2], 384
    %v2990 = vld [vmem:[%s2989] sm:$0xff]
    %v2991 = vld [vmem:[%s2989 + $0x8] sm:$0xff]
    %v2992 = vld [vmem:[%s2989 + $0x10] sm:$0xff]
    %v2993 = vld [vmem:[%s2989 + $0x18] sm:$0xff]
    %v2994 = vld [vmem:[%s2989 + $0x20] sm:$0xff]
    %v2995 = vld [vmem:[%s2989 + $0x28] sm:$0xff]
    %v2996 = vld [vmem:[%s2989 + $0x30] sm:$0xff]
    %v2997 = vld [vmem:[%s2989 + $0x38] sm:$0xff]
    %v2998 = vld [vmem:[%s2989 + $0x40] sm:$0xff]
    %v2999 = vld [vmem:[%s2989 + $0x48] sm:$0xff]
    %v3000 = vld [vmem:[%s2989 + $0x50] sm:$0xff]
    %v3001 = vld [vmem:[%s2989 + $0x58] sm:$0xff]
    %v3002 = vld [vmem:[%s2989 + $0x60] sm:$0xff]
    %v3003 = vld [vmem:[%s2989 + $0x68] sm:$0xff]
    %v3004 = vld [vmem:[%s2989 + $0x70] sm:$0xff]
    %v3005 = vld [vmem:[%s2989 + $0x78] sm:$0xff]
    %3006 = vxpose.xlu0.b32.start [1/16] %v252, 128
    %3007 = vxpose.xlu0.b32.cont [2/16] 0.0, 128
    %3008 = vxpose.xlu0.b32.cont [3/16] 0.0, 128
    %3009 = vxpose.xlu0.b32.cont [4/16] 0.0, 128
    %3010 = vxpose.xlu0.b32.cont [5/16] 0.0, 128
    %3011 = vxpose.xlu0.b32.cont [6/16] 0.0, 128
    %3012 = vxpose.xlu0.b32.cont [7/16] 0.0, 128
    %3013 = vxpose.xlu0.b32.cont [8/16] 0.0, 128
    %3014 = vxpose.xlu0.b32.cont [9/16] 0.0, 128
    %3015 = vxpose.xlu0.b32.cont [10/16] 0.0, 128
    %3016 = vxpose.xlu0.b32.cont [11/16] 0.0, 128
    %3017 = vxpose.xlu0.b32.cont [12/16] 0.0, 128
    %3018 = vxpose.xlu0.b32.cont [13/16] 0.0, 128
    %3019 = vxpose.xlu0.b32.cont [14/16] 0.0, 128
    %3020 = vxpose.xlu0.b32.cont [15/16] 0.0, 128
    %3021 = vxpose.xlu0.b32.end [16/16] 0.0, 128
    %v3022 = vpop.trf.xlu0
    %v3023 = vpop.trf.xlu0
    %v3024 = vpop.trf.xlu0
    %v3025 = vpop.trf.xlu0
    %v3026 = vpop.trf.xlu0
    %v3027 = vpop.trf.xlu0
    %v3028 = vpop.trf.xlu0
    %v3029 = vpop.trf.xlu0
    %v3030 = vpop.trf.xlu0
    %v3031 = vpop.trf.xlu0
    %v3032 = vpop.trf.xlu0
    %v3033 = vpop.trf.xlu0
    %v3034 = vpop.trf.xlu0
    %v3035 = vpop.trf.xlu0
    %v3036 = vpop.trf.xlu0
    %v3037 = vpop.trf.xlu0
    %v3039 = vsel %vm352, %v3022, 0
    %v3042 = vsel %vm352, %v3023, 0
    %v3045 = vsel %vm352, %v3024, 0
    %v3048 = vsel %vm352, %v3025, 0
    %v3051 = vsel %vm352, %v3026, 0
    %v3054 = vsel %vm352, %v3027, 0
    %v3057 = vsel %vm352, %v3028, 0
    %v3060 = vsel %vm352, %v3029, 0
    %v3063 = vsel %vm352, %v3030, 0
    %v3066 = vsel %vm352, %v3031, 0
    %v3069 = vsel %vm352, %v3032, 0
    %v3072 = vsel %vm352, %v3033, 0
    %v3075 = vsel %vm352, %v3034, 0
    %v3078 = vsel %vm352, %v3035, 0
    %v3081 = vsel %vm352, %v3036, 0
    %v3084 = vsel %vm352, %v3037, 0
    %3086 = vmatprep.subr.mxu0 0.0
    %3087 = vmatpush1.msra.mxu0 0.0
    %3088 = vmatprep.subr.mxu0 0.0
    %3089 = vmatpush1.msra.mxu0 0.0
    %3090 = vmatprep.subr.mxu0 0.0
    %3091 = vmatpush1.msra.mxu0 0.0
    %3092 = vmatprep.subr.mxu0 0.0
    %3093 = vmatpush1.msra.mxu0 0.0
    %3094 = vmatprep.subr.mxu0 0.0
    %3095 = vmatpush1.msra.mxu0 0.0
    %3096 = vmatprep.subr.mxu0 0.0
    %3097 = vmatpush1.msra.mxu0 0.0
    %3098 = vmatprep.subr.mxu0 0.0
    %3099 = vmatpush1.msra.mxu0 0.0
    %3100 = vmatprep.subr.mxu0 0.0
    %3101 = vmatpush1.msra.mxu0 0.0
    %3102 = vmatprep.subr.mxu0 0.0
    %3103 = vmatpush1.msra.mxu0 0.0
    %3104 = vmatprep.subr.mxu0 0.0
    %3105 = vmatpush1.msra.mxu0 0.0
    %3106 = vmatprep.subr.mxu0 0.0
    %3107 = vmatpush1.msra.mxu0 0.0
    %3108 = vmatprep.subr.mxu0 0.0
    %3109 = vmatpush1.msra.mxu0 0.0
    %3110 = vmatprep.subr.mxu0 0.0
    %3111 = vmatpush1.msra.mxu0 0.0
    %3112 = vmatprep.subr.mxu0 0.0
    %3113 = vmatpush1.msra.mxu0 0.0
    %3114 = vmatprep.subr.mxu0 0.0
    %3115 = vmatpush1.msra.mxu0 0.0
    %3116 = vmatprep.subr.mxu0 0.0
    %3117 = vmatpush1.msra.mxu0 %v276
    %3118 = vmatprep.subr.mxu0 0.0
    %3119 = vmatpush2.msra.mxu0 0.0
    %3120 = vmatprep.subr.mxu0 0.0
    %3121 = vmatpush2.msra.mxu0 0.0
    %3122 = vmatprep.subr.mxu0 0.0
    %3123 = vmatpush2.msra.mxu0 0.0
    %3124 = vmatprep.subr.mxu0 0.0
    %3125 = vmatpush2.msra.mxu0 0.0
    %3126 = vmatprep.subr.mxu0 0.0
    %3127 = vmatpush2.msra.mxu0 0.0
    %3128 = vmatprep.subr.mxu0 0.0
    %3129 = vmatpush2.msra.mxu0 0.0
    %3130 = vmatprep.subr.mxu0 0.0
    %3131 = vmatpush2.msra.mxu0 0.0
    %3132 = vmatprep.subr.mxu0 0.0
    %3133 = vmatpush2.msra.mxu0 0.0
    %3134 = vmatprep.subr.mxu0 0.0
    %3135 = vmatpush2.msra.mxu0 0.0
    %3136 = vmatprep.subr.mxu0 0.0
    %3137 = vmatpush2.msra.mxu0 0.0
    %3138 = vmatprep.subr.mxu0 0.0
    %3139 = vmatpush2.msra.mxu0 0.0
    %3140 = vmatprep.subr.mxu0 0.0
    %3141 = vmatpush2.msra.mxu0 0.0
    %3142 = vmatprep.subr.mxu0 0.0
    %3143 = vmatpush2.msra.mxu0 0.0
    %3144 = vmatprep.subr.mxu0 0.0
    %3145 = vmatpush2.msra.mxu0 0.0
    %3146 = vmatprep.subr.mxu0 0.0
    %3147 = vmatpush2.msra.mxu0 0.0
    %3148 = vmatprep.subr.mxu0 0.0
    %3149 = vmatpush2.msra.mxu0 0.0
    %3150 = vmatprep.mubr.f32.mxu0 0.0
    %3151 = vmatmul.mubr.f32.gmra.mxu0 %v3039
    %v3152 = vpop.f32.mrf.mxu0
    %v3153 = vadd.f32 %v2990, %v3152
    %v3154 = vpop.f32.mrf.mxu0
    %3155 = vmatprep.mubr.f32.mxu0 0.0
    %3156 = vmatmul.mubr.f32.gmra.mxu0 %v3042
    %v3157 = vpop.f32.mrf.mxu0
    %v3158 = vadd.f32 %v2991, %v3157
    %v3159 = vpop.f32.mrf.mxu0
    %3160 = vmatprep.mubr.f32.mxu0 0.0
    %3161 = vmatmul.mubr.f32.gmra.mxu0 %v3045
    %v3162 = vpop.f32.mrf.mxu0
    %v3163 = vadd.f32 %v2992, %v3162
    %v3164 = vpop.f32.mrf.mxu0
    %3165 = vmatprep.mubr.f32.mxu0 0.0
    %3166 = vmatmul.mubr.f32.gmra.mxu0 %v3048
    %v3167 = vpop.f32.mrf.mxu0
    %v3168 = vadd.f32 %v2993, %v3167
    %v3169 = vpop.f32.mrf.mxu0
    %3170 = vmatprep.mubr.f32.mxu0 0.0
    %3171 = vmatmul.mubr.f32.gmra.mxu0 %v3051
    %v3172 = vpop.f32.mrf.mxu0
    %v3173 = vadd.f32 %v2994, %v3172
    %v3174 = vpop.f32.mrf.mxu0
    %3175 = vmatprep.mubr.f32.mxu0 0.0
    %3176 = vmatmul.mubr.f32.gmra.mxu0 %v3054
    %v3177 = vpop.f32.mrf.mxu0
    %v3178 = vadd.f32 %v2995, %v3177
    %v3179 = vpop.f32.mrf.mxu0
    %3180 = vmatprep.mubr.f32.mxu0 0.0
    %3181 = vmatmul.mubr.f32.gmra.mxu0 %v3057
    %v3182 = vpop.f32.mrf.mxu0
    %v3183 = vadd.f32 %v2996, %v3182
    %v3184 = vpop.f32.mrf.mxu0
    %3185 = vmatprep.mubr.f32.mxu0 0.0
    %3186 = vmatmul.mubr.f32.gmra.mxu0 %v3060
    %v3187 = vpop.f32.mrf.mxu0
    %v3188 = vadd.f32 %v2997, %v3187
    %v3189 = vpop.f32.mrf.mxu0
    %3190 = vmatprep.mubr.f32.mxu0 0.0
    %3191 = vmatmul.mubr.f32.gmra.mxu0 %v3063
    %v3192 = vpop.f32.mrf.mxu0
    %v3193 = vadd.f32 %v2998, %v3192
    %v3194 = vpop.f32.mrf.mxu0
    %3195 = vmatprep.mubr.f32.mxu0 0.0
    %3196 = vmatmul.mubr.f32.gmra.mxu0 %v3066
    %v3197 = vpop.f32.mrf.mxu0
    %v3198 = vadd.f32 %v2999, %v3197
    %v3199 = vpop.f32.mrf.mxu0
    %3200 = vmatprep.mubr.f32.mxu0 0.0
    %3201 = vmatmul.mubr.f32.gmra.mxu0 %v3069
    %v3202 = vpop.f32.mrf.mxu0
    %v3203 = vadd.f32 %v3000, %v3202
    %v3204 = vpop.f32.mrf.mxu0
    %3205 = vmatprep.mubr.f32.mxu0 0.0
    %3206 = vmatmul.mubr.f32.gmra.mxu0 %v3072
    %v3207 = vpop.f32.mrf.mxu0
    %v3208 = vadd.f32 %v3001, %v3207
    %v3209 = vpop.f32.mrf.mxu0
    %3210 = vmatprep.mubr.f32.mxu0 0.0
    %3211 = vmatmul.mubr.f32.gmra.mxu0 %v3075
    %v3212 = vpop.f32.mrf.mxu0
    %v3213 = vadd.f32 %v3002, %v3212
    %v3214 = vpop.f32.mrf.mxu0
    %3215 = vmatprep.mubr.f32.mxu0 0.0
    %3216 = vmatmul.mubr.f32.gmra.mxu0 %v3078
    %v3217 = vpop.f32.mrf.mxu0
    %v3218 = vadd.f32 %v3003, %v3217
    %v3219 = vpop.f32.mrf.mxu0
    %3220 = vmatprep.mubr.f32.mxu0 0.0
    %3221 = vmatmul.mubr.f32.gmra.mxu0 %v3081
    %v3222 = vpop.f32.mrf.mxu0
    %v3223 = vadd.f32 %v3004, %v3222
    %v3224 = vpop.f32.mrf.mxu0
    %3225 = vmatprep.mubr.f32.mxu0 0.0
    %3226 = vmatmul.mubr.f32.gmra.mxu0 %v3084
    %v3227 = vpop.f32.mrf.mxu0
    %v3228 = vadd.f32 %v3005, %v3227
    %v3229 = vpop.f32.mrf.mxu0
    %3230 = vdwg.mxu0
    %3231 = vmax.xlane.f32.xlu0 %v3153
    %v3232 = vpop.xlane.xlu0 %3231
    %3233 = vmax.xlane.f32.xlu0 %v3158
    %v3234 = vpop.xlane.xlu0 %3233
    %3235 = vmax.xlane.f32.xlu0 %v3163
    %v3236 = vpop.xlane.xlu0 %3235
    %3237 = vmax.xlane.f32.xlu0 %v3168
    %v3238 = vpop.xlane.xlu0 %3237
    %3239 = vmax.xlane.f32.xlu0 %v3173
    %v3240 = vpop.xlane.xlu0 %3239
    %3241 = vmax.xlane.f32.xlu0 %v3178
    %v3242 = vpop.xlane.xlu0 %3241
    %3243 = vmax.xlane.f32.xlu0 %v3183
    %v3244 = vpop.xlane.xlu0 %3243
    %3245 = vmax.xlane.f32.xlu0 %v3188
    %v3246 = vpop.xlane.xlu0 %3245
    %3247 = vmax.xlane.f32.xlu0 %v3193
    %v3248 = vpop.xlane.xlu0 %3247
    %3249 = vmax.xlane.f32.xlu0 %v3198
    %v3250 = vpop.xlane.xlu0 %3249
    %3251 = vmax.xlane.f32.xlu0 %v3203
    %v3252 = vpop.xlane.xlu0 %3251
    %3253 = vmax.xlane.f32.xlu0 %v3208
    %v3254 = vpop.xlane.xlu0 %3253
    %3255 = vmax.xlane.f32.xlu0 %v3213
    %v3256 = vpop.xlane.xlu0 %3255
    %3257 = vmax.xlane.f32.xlu0 %v3218
    %v3258 = vpop.xlane.xlu0 %3257
    %3259 = vmax.xlane.f32.xlu0 %v3223
    %v3260 = vpop.xlane.xlu0 %3259
    %3261 = vmax.xlane.f32.xlu0 %v3228
    %v3262 = vpop.xlane.xlu0 %3261
    %v3263 = vsub.f32 %v3153, %v3232
    %v3264 = vsub.f32 %v3158, %v3234
    %v3265 = vsub.f32 %v3163, %v3236
    %v3266 = vsub.f32 %v3168, %v3238
    %v3267 = vsub.f32 %v3173, %v3240
    %v3268 = vsub.f32 %v3178, %v3242
    %v3269 = vsub.f32 %v3183, %v3244
    %v3270 = vsub.f32 %v3188, %v3246
    %v3271 = vsub.f32 %v3193, %v3248
    %v3272 = vsub.f32 %v3198, %v3250
    %v3273 = vsub.f32 %v3203, %v3252
    %v3274 = vsub.f32 %v3208, %v3254
    %v3275 = vsub.f32 %v3213, %v3256
    %v3276 = vsub.f32 %v3218, %v3258
    %v3277 = vsub.f32 %v3223, %v3260
    %v3278 = vsub.f32 %v3228, %v3262
    %v3279 = vmul.f32 %v3263, 1.442695
    %v3280 = vpow.pop %v3279
    %v3281 = vmul.f32 %v3264, 1.442695
    %v3282 = vpow.pop %v3281
    %v3283 = vmul.f32 %v3265, 1.442695
    %v3284 = vpow.pop %v3283
    %v3285 = vmul.f32 %v3266, 1.442695
    %v3286 = vpow.pop %v3285
    %v3287 = vmul.f32 %v3267, 1.442695
    %v3288 = vpow.pop %v3287
    %v3289 = vmul.f32 %v3268, 1.442695
    %v3290 = vpow.pop %v3289
    %v3291 = vmul.f32 %v3269, 1.442695
    %v3292 = vpow.pop %v3291
    %v3293 = vmul.f32 %v3270, 1.442695
    %v3294 = vpow.pop %v3293
    %v3295 = vmul.f32 %v3271, 1.442695
    %v3296 = vpow.pop %v3295
    %v3297 = vmul.f32 %v3272, 1.442695
    %v3298 = vpow.pop %v3297
    %v3299 = vmul.f32 %v3273, 1.442695
    %v3300 = vpow.pop %v3299
    %v3301 = vmul.f32 %v3274, 1.442695
    %v3302 = vpow.pop %v3301
    %v3303 = vmul.f32 %v3275, 1.442695
    %v3304 = vpow.pop %v3303
    %v3305 = vmul.f32 %v3276, 1.442695
    %v3306 = vpow.pop %v3305
    %v3307 = vmul.f32 %v3277, 1.442695
    %v3308 = vpow.pop %v3307
    %v3309 = vmul.f32 %v3278, 1.442695
    %v3310 = vpow.pop %v3309
    %3311 = vadd.xlane.f32.xlu0 %v3280
    %v3312 = vpop.xlane.xlu0 %3311
    %3313 = vadd.xlane.f32.xlu0 %v3282
    %v3314 = vpop.xlane.xlu0 %3313
    %3315 = vadd.xlane.f32.xlu0 %v3284
    %v3316 = vpop.xlane.xlu0 %3315
    %3317 = vadd.xlane.f32.xlu0 %v3286
    %v3318 = vpop.xlane.xlu0 %3317
    %3319 = vadd.xlane.f32.xlu0 %v3288
    %v3320 = vpop.xlane.xlu0 %3319
    %3321 = vadd.xlane.f32.xlu0 %v3290
    %v3322 = vpop.xlane.xlu0 %3321
    %3323 = vadd.xlane.f32.xlu0 %v3292
    %v3324 = vpop.xlane.xlu0 %3323
    %3325 = vadd.xlane.f32.xlu0 %v3294
    %v3326 = vpop.xlane.xlu0 %3325
    %3327 = vadd.xlane.f32.xlu0 %v3296
    %v3328 = vpop.xlane.xlu0 %3327
    %3329 = vadd.xlane.f32.xlu0 %v3298
    %v3330 = vpop.xlane.xlu0 %3329
    %3331 = vadd.xlane.f32.xlu0 %v3300
    %v3332 = vpop.xlane.xlu0 %3331
    %3333 = vadd.xlane.f32.xlu0 %v3302
    %v3334 = vpop.xlane.xlu0 %3333
    %3335 = vadd.xlane.f32.xlu0 %v3304
    %v3336 = vpop.xlane.xlu0 %3335
    %3337 = vadd.xlane.f32.xlu0 %v3306
    %v3338 = vpop.xlane.xlu0 %3337
    %3339 = vadd.xlane.f32.xlu0 %v3308
    %v3340 = vpop.xlane.xlu0 %3339
    %3341 = vadd.xlane.f32.xlu0 %v3310
    %v3342 = vpop.xlane.xlu0 %3341
    %v3343 = vrcp.pop %v3312
    %v3344 = vmul.f32 %v3280, %v3343
    %v3345 = vrcp.pop %v3314
    %v3346 = vmul.f32 %v3282, %v3345
    %v3347 = vrcp.pop %v3316
    %v3348 = vmul.f32 %v3284, %v3347
    %v3349 = vrcp.pop %v3318
    %v3350 = vmul.f32 %v3286, %v3349
    %v3351 = vrcp.pop %v3320
    %v3352 = vmul.f32 %v3288, %v3351
    %v3353 = vrcp.pop %v3322
    %v3354 = vmul.f32 %v3290, %v3353
    %v3355 = vrcp.pop %v3324
    %v3356 = vmul.f32 %v3292, %v3355
    %v3357 = vrcp.pop %v3326
    %v3358 = vmul.f32 %v3294, %v3357
    %v3359 = vrcp.pop %v3328
    %v3360 = vmul.f32 %v3296, %v3359
    %v3361 = vrcp.pop %v3330
    %v3362 = vmul.f32 %v3298, %v3361
    %v3363 = vrcp.pop %v3332
    %v3364 = vmul.f32 %v3300, %v3363
    %v3365 = vrcp.pop %v3334
    %v3366 = vmul.f32 %v3302, %v3365
    %v3367 = vrcp.pop %v3336
    %v3368 = vmul.f32 %v3304, %v3367
    %v3369 = vrcp.pop %v3338
    %v3370 = vmul.f32 %v3306, %v3369
    %v3371 = vrcp.pop %v3340
    %v3372 = vmul.f32 %v3308, %v3371
    %v3373 = vrcp.pop %v3342
    %v3374 = vmul.f32 %v3310, %v3373
    %3375 = vmatprep.subr.mxu0 0.0
    %3376 = vmatpush1.xpose.msra.mxu0 %v3374
    %3377 = vmatprep.subr.mxu0 0.0
    %3378 = vmatpush1.xpose.msra.mxu0 %v3372
    %3379 = vmatprep.subr.mxu0 0.0
    %3380 = vmatpush1.xpose.msra.mxu0 %v3370
    %3381 = vmatprep.subr.mxu0 0.0
    %3382 = vmatpush1.xpose.msra.mxu0 %v3368
    %3383 = vmatprep.subr.mxu0 0.0
    %3384 = vmatpush1.xpose.msra.mxu0 %v3366
    %3385 = vmatprep.subr.mxu0 0.0
    %3386 = vmatpush1.xpose.msra.mxu0 %v3364
    %3387 = vmatprep.subr.mxu0 0.0
    %3388 = vmatpush1.xpose.msra.mxu0 %v3362
    %3389 = vmatprep.subr.mxu0 0.0
    %3390 = vmatpush1.xpose.msra.mxu0 %v3360
    %3391 = vmatprep.subr.mxu0 0.0
    %3392 = vmatpush1.xpose.msra.mxu0 %v3358
    %3393 = vmatprep.subr.mxu0 0.0
    %3394 = vmatpush1.xpose.msra.mxu0 %v3356
    %3395 = vmatprep.subr.mxu0 0.0
    %3396 = vmatpush1.xpose.msra.mxu0 %v3354
    %3397 = vmatprep.subr.mxu0 0.0
    %3398 = vmatpush1.xpose.msra.mxu0 %v3352
    %3399 = vmatprep.subr.mxu0 0.0
    %3400 = vmatpush1.xpose.msra.mxu0 %v3350
    %3401 = vmatprep.subr.mxu0 0.0
    %3402 = vmatpush1.xpose.msra.mxu0 %v3348
    %3403 = vmatprep.subr.mxu0 0.0
    %3404 = vmatpush1.xpose.msra.mxu0 %v3346
    %3405 = vmatprep.subr.mxu0 0.0
    %3406 = vmatpush1.xpose.msra.mxu0 %v3344
    %3407 = vmatprep.subr.mxu0 0.0
    %3408 = vmatpush2.xpose.msra.mxu0 0.0
    %3409 = vmatprep.subr.mxu0 0.0
    %3410 = vmatpush2.xpose.msra.mxu0 0.0
    %3411 = vmatprep.subr.mxu0 0.0
    %3412 = vmatpush2.xpose.msra.mxu0 0.0
    %3413 = vmatprep.subr.mxu0 0.0
    %3414 = vmatpush2.xpose.msra.mxu0 0.0
    %3415 = vmatprep.subr.mxu0 0.0
    %3416 = vmatpush2.xpose.msra.mxu0 0.0
    %3417 = vmatprep.subr.mxu0 0.0
    %3418 = vmatpush2.xpose.msra.mxu0 0.0
    %3419 = vmatprep.subr.mxu0 0.0
    %3420 = vmatpush2.xpose.msra.mxu0 0.0
    %3421 = vmatprep.subr.mxu0 0.0
    %3422 = vmatpush2.xpose.msra.mxu0 0.0
    %3423 = vmatprep.subr.mxu0 0.0
    %3424 = vmatpush2.xpose.msra.mxu0 0.0
    %3425 = vmatprep.subr.mxu0 0.0
    %3426 = vmatpush2.xpose.msra.mxu0 0.0
    %3427 = vmatprep.subr.mxu0 0.0
    %3428 = vmatpush2.xpose.msra.mxu0 0.0
    %3429 = vmatprep.subr.mxu0 0.0
    %3430 = vmatpush2.xpose.msra.mxu0 0.0
    %3431 = vmatprep.subr.mxu0 0.0
    %3432 = vmatpush2.xpose.msra.mxu0 0.0
    %3433 = vmatprep.subr.mxu0 0.0
    %3434 = vmatpush2.xpose.msra.mxu0 0.0
    %3435 = vmatprep.subr.mxu0 0.0
    %3436 = vmatpush2.xpose.msra.mxu0 0.0
    %3437 = vmatprep.subr.mxu0 0.0
    %3438 = vmatpush2.xpose.msra.mxu0 0.0
    %3439 = vmatprep.mubr.f32.mxu0 0.0
    %3440 = vmatmul.mubr.f32.gmra.mxu0 %v300
    %v3441 = vpop.f32.mrf.mxu0
    %v3442 = vadd.f32 0.0, %v3441
    %v3443 = vpop.f32.mrf.mxu0
    %3444 = vdwg.mxu0
    %3445 = vxpose.xlu0.b32.start [1/16] %v254, 128
    %3446 = vxpose.xlu0.b32.cont [2/16] 0.0, 128
    %3447 = vxpose.xlu0.b32.cont [3/16] 0.0, 128
    %3448 = vxpose.xlu0.b32.cont [4/16] 0.0, 128
    %3449 = vxpose.xlu0.b32.cont [5/16] 0.0, 128
    %3450 = vxpose.xlu0.b32.cont [6/16] 0.0, 128
    %3451 = vxpose.xlu0.b32.cont [7/16] 0.0, 128
    %3452 = vxpose.xlu0.b32.cont [8/16] 0.0, 128
    %3453 = vxpose.xlu0.b32.cont [9/16] 0.0, 128
    %3454 = vxpose.xlu0.b32.cont [10/16] 0.0, 128
    %3455 = vxpose.xlu0.b32.cont [11/16] 0.0, 128
    %3456 = vxpose.xlu0.b32.cont [12/16] 0.0, 128
    %3457 = vxpose.xlu0.b32.cont [13/16] 0.0, 128
    %3458 = vxpose.xlu0.b32.cont [14/16] 0.0, 128
    %3459 = vxpose.xlu0.b32.cont [15/16] 0.0, 128
    %3460 = vxpose.xlu0.b32.end [16/16] 0.0, 128
    %v3461 = vpop.trf.xlu0
    %v3462 = vpop.trf.xlu0
    %v3463 = vpop.trf.xlu0
    %v3464 = vpop.trf.xlu0
    %v3465 = vpop.trf.xlu0
    %v3466 = vpop.trf.xlu0
    %v3467 = vpop.trf.xlu0
    %v3468 = vpop.trf.xlu0
    %v3469 = vpop.trf.xlu0
    %v3470 = vpop.trf.xlu0
    %v3471 = vpop.trf.xlu0
    %v3472 = vpop.trf.xlu0
    %v3473 = vpop.trf.xlu0
    %v3474 = vpop.trf.xlu0
    %v3475 = vpop.trf.xlu0
    %v3476 = vpop.trf.xlu0
    %v3478 = vsel %vm352, %v3461, 0
    %v3481 = vsel %vm352, %v3462, 0
    %v3484 = vsel %vm352, %v3463, 0
    %v3487 = vsel %vm352, %v3464, 0
    %v3490 = vsel %vm352, %v3465, 0
    %v3493 = vsel %vm352, %v3466, 0
    %v3496 = vsel %vm352, %v3467, 0
    %v3499 = vsel %vm352, %v3468, 0
    %v3502 = vsel %vm352, %v3469, 0
    %v3505 = vsel %vm352, %v3470, 0
    %v3508 = vsel %vm352, %v3471, 0
    %v3511 = vsel %vm352, %v3472, 0
    %v3514 = vsel %vm352, %v3473, 0
    %v3517 = vsel %vm352, %v3474, 0
    %v3520 = vsel %vm352, %v3475, 0
    %v3523 = vsel %vm352, %v3476, 0
    %3525 = vmatprep.subr.mxu0 0.0
    %3526 = vmatpush1.msra.mxu0 0.0
    %3527 = vmatprep.subr.mxu0 0.0
    %3528 = vmatpush1.msra.mxu0 0.0
    %3529 = vmatprep.subr.mxu0 0.0
    %3530 = vmatpush1.msra.mxu0 0.0
    %3531 = vmatprep.subr.mxu0 0.0
    %3532 = vmatpush1.msra.mxu0 0.0
    %3533 = vmatprep.subr.mxu0 0.0
    %3534 = vmatpush1.msra.mxu0 0.0
    %3535 = vmatprep.subr.mxu0 0.0
    %3536 = vmatpush1.msra.mxu0 0.0
    %3537 = vmatprep.subr.mxu0 0.0
    %3538 = vmatpush1.msra.mxu0 0.0
    %3539 = vmatprep.subr.mxu0 0.0
    %3540 = vmatpush1.msra.mxu0 0.0
    %3541 = vmatprep.subr.mxu0 0.0
    %3542 = vmatpush1.msra.mxu0 0.0
    %3543 = vmatprep.subr.mxu0 0.0
    %3544 = vmatpush1.msra.mxu0 0.0
    %3545 = vmatprep.subr.mxu0 0.0
    %3546 = vmatpush1.msra.mxu0 0.0
    %3547 = vmatprep.subr.mxu0 0.0
    %3548 = vmatpush1.msra.mxu0 0.0
    %3549 = vmatprep.subr.mxu0 0.0
    %3550 = vmatpush1.msra.mxu0 0.0
    %3551 = vmatprep.subr.mxu0 0.0
    %3552 = vmatpush1.msra.mxu0 0.0
    %3553 = vmatprep.subr.mxu0 0.0
    %3554 = vmatpush1.msra.mxu0 0.0
    %3555 = vmatprep.subr.mxu0 0.0
    %3556 = vmatpush1.msra.mxu0 %v278
    %3557 = vmatprep.subr.mxu0 0.0
    %3558 = vmatpush2.msra.mxu0 0.0
    %3559 = vmatprep.subr.mxu0 0.0
    %3560 = vmatpush2.msra.mxu0 0.0
    %3561 = vmatprep.subr.mxu0 0.0
    %3562 = vmatpush2.msra.mxu0 0.0
    %3563 = vmatprep.subr.mxu0 0.0
    %3564 = vmatpush2.msra.mxu0 0.0
    %3565 = vmatprep.subr.mxu0 0.0
    %3566 = vmatpush2.msra.mxu0 0.0
    %3567 = vmatprep.subr.mxu0 0.0
    %3568 = vmatpush2.msra.mxu0 0.0
    %3569 = vmatprep.subr.mxu0 0.0
    %3570 = vmatpush2.msra.mxu0 0.0
    %3571 = vmatprep.subr.mxu0 0.0
    %3572 = vmatpush2.msra.mxu0 0.0
    %3573 = vmatprep.subr.mxu0 0.0
    %3574 = vmatpush2.msra.mxu0 0.0
    %3575 = vmatprep.subr.mxu0 0.0
    %3576 = vmatpush2.msra.mxu0 0.0
    %3577 = vmatprep.subr.mxu0 0.0
    %3578 = vmatpush2.msra.mxu0 0.0
    %3579 = vmatprep.subr.mxu0 0.0
    %3580 = vmatpush2.msra.mxu0 0.0
    %3581 = vmatprep.subr.mxu0 0.0
    %3582 = vmatpush2.msra.mxu0 0.0
    %3583 = vmatprep.subr.mxu0 0.0
    %3584 = vmatpush2.msra.mxu0 0.0
    %3585 = vmatprep.subr.mxu0 0.0
    %3586 = vmatpush2.msra.mxu0 0.0
    %3587 = vmatprep.subr.mxu0 0.0
    %3588 = vmatpush2.msra.mxu0 0.0
    %3589 = vmatprep.mubr.f32.mxu0 0.0
    %3590 = vmatmul.mubr.f32.gmra.mxu0 %v3478
    %v3591 = vpop.f32.mrf.mxu0
    %v3592 = vadd.f32 %v2990, %v3591
    %v3593 = vpop.f32.mrf.mxu0
    %3594 = vmatprep.mubr.f32.mxu0 0.0
    %3595 = vmatmul.mubr.f32.gmra.mxu0 %v3481
    %v3596 = vpop.f32.mrf.mxu0
    %v3597 = vadd.f32 %v2991, %v3596
    %v3598 = vpop.f32.mrf.mxu0
    %3599 = vmatprep.mubr.f32.mxu0 0.0
    %3600 = vmatmul.mubr.f32.gmra.mxu0 %v3484
    %v3601 = vpop.f32.mrf.mxu0
    %v3602 = vadd.f32 %v2992, %v3601
    %v3603 = vpop.f32.mrf.mxu0
    %3604 = vmatprep.mubr.f32.mxu0 0.0
    %3605 = vmatmul.mubr.f32.gmra.mxu0 %v3487
    %v3606 = vpop.f32.mrf.mxu0
    %v3607 = vadd.f32 %v2993, %v3606
    %v3608 = vpop.f32.mrf.mxu0
    %3609 = vmatprep.mubr.f32.mxu0 0.0
    %3610 = vmatmul.mubr.f32.gmra.mxu0 %v3490
    %v3611 = vpop.f32.mrf.mxu0
    %v3612 = vadd.f32 %v2994, %v3611
    %v3613 = vpop.f32.mrf.mxu0
    %3614 = vmatprep.mubr.f32.mxu0 0.0
    %3615 = vmatmul.mubr.f32.gmra.mxu0 %v3493
    %v3616 = vpop.f32.mrf.mxu0
    %v3617 = vadd.f32 %v2995, %v3616
    %v3618 = vpop.f32.mrf.mxu0
    %3619 = vmatprep.mubr.f32.mxu0 0.0
    %3620 = vmatmul.mubr.f32.gmra.mxu0 %v3496
    %v3621 = vpop.f32.mrf.mxu0
    %v3622 = vadd.f32 %v2996, %v3621
    %v3623 = vpop.f32.mrf.mxu0
    %3624 = vmatprep.mubr.f32.mxu0 0.0
    %3625 = vmatmul.mubr.f32.gmra.mxu0 %v3499
    %v3626 = vpop.f32.mrf.mxu0
    %v3627 = vadd.f32 %v2997, %v3626
    %v3628 = vpop.f32.mrf.mxu0
    %3629 = vmatprep.mubr.f32.mxu0 0.0
    %3630 = vmatmul.mubr.f32.gmra.mxu0 %v3502
    %v3631 = vpop.f32.mrf.mxu0
    %v3632 = vadd.f32 %v2998, %v3631
    %v3633 = vpop.f32.mrf.mxu0
    %3634 = vmatprep.mubr.f32.mxu0 0.0
    %3635 = vmatmul.mubr.f32.gmra.mxu0 %v3505
    %v3636 = vpop.f32.mrf.mxu0
    %v3637 = vadd.f32 %v2999, %v3636
    %v3638 = vpop.f32.mrf.mxu0
    %3639 = vmatprep.mubr.f32.mxu0 0.0
    %3640 = vmatmul.mubr.f32.gmra.mxu0 %v3508
    %v3641 = vpop.f32.mrf.mxu0
    %v3642 = vadd.f32 %v3000, %v3641
    %v3643 = vpop.f32.mrf.mxu0
    %3644 = vmatprep.mubr.f32.mxu0 0.0
    %3645 = vmatmul.mubr.f32.gmra.mxu0 %v3511
    %v3646 = vpop.f32.mrf.mxu0
    %v3647 = vadd.f32 %v3001, %v3646
    %v3648 = vpop.f32.mrf.mxu0
    %3649 = vmatprep.mubr.f32.mxu0 0.0
    %3650 = vmatmul.mubr.f32.gmra.mxu0 %v3514
    %v3651 = vpop.f32.mrf.mxu0
    %v3652 = vadd.f32 %v3002, %v3651
    %v3653 = vpop.f32.mrf.mxu0
    %3654 = vmatprep.mubr.f32.mxu0 0.0
    %3655 = vmatmul.mubr.f32.gmra.mxu0 %v3517
    %v3656 = vpop.f32.mrf.mxu0
    %v3657 = vadd.f32 %v3003, %v3656
    %v3658 = vpop.f32.mrf.mxu0
    %3659 = vmatprep.mubr.f32.mxu0 0.0
    %3660 = vmatmul.mubr.f32.gmra.mxu0 %v3520
    %v3661 = vpop.f32.mrf.mxu0
    %v3662 = vadd.f32 %v3004, %v3661
    %v3663 = vpop.f32.mrf.mxu0
    %3664 = vmatprep.mubr.f32.mxu0 0.0
    %3665 = vmatmul.mubr.f32.gmra.mxu0 %v3523
    %v3666 = vpop.f32.mrf.mxu0
    %v3667 = vadd.f32 %v3005, %v3666
    %v3668 = vpop.f32.mrf.mxu0
    %3669 = vdwg.mxu0
    %3670 = vmax.xlane.f32.xlu0 %v3592
    %v3671 = vpop.xlane.xlu0 %3670
    %3672 = vmax.xlane.f32.xlu0 %v3597
    %v3673 = vpop.xlane.xlu0 %3672
    %3674 = vmax.xlane.f32.xlu0 %v3602
    %v3675 = vpop.xlane.xlu0 %3674
    %3676 = vmax.xlane.f32.xlu0 %v3607
    %v3677 = vpop.xlane.xlu0 %3676
    %3678 = vmax.xlane.f32.xlu0 %v3612
    %v3679 = vpop.xlane.xlu0 %3678
    %3680 = vmax.xlane.f32.xlu0 %v3617
    %v3681 = vpop.xlane.xlu0 %3680
    %3682 = vmax.xlane.f32.xlu0 %v3622
    %v3683 = vpop.xlane.xlu0 %3682
    %3684 = vmax.xlane.f32.xlu0 %v3627
    %v3685 = vpop.xlane.xlu0 %3684
    %3686 = vmax.xlane.f32.xlu0 %v3632
    %v3687 = vpop.xlane.xlu0 %3686
    %3688 = vmax.xlane.f32.xlu0 %v3637
    %v3689 = vpop.xlane.xlu0 %3688
    %3690 = vmax.xlane.f32.xlu0 %v3642
    %v3691 = vpop.xlane.xlu0 %3690
    %3692 = vmax.xlane.f32.xlu0 %v3647
    %v3693 = vpop.xlane.xlu0 %3692
    %3694 = vmax.xlane.f32.xlu0 %v3652
    %v3695 = vpop.xlane.xlu0 %3694
    %3696 = vmax.xlane.f32.xlu0 %v3657
    %v3697 = vpop.xlane.xlu0 %3696
    %3698 = vmax.xlane.f32.xlu0 %v3662
    %v3699 = vpop.xlane.xlu0 %3698
    %3700 = vmax.xlane.f32.xlu0 %v3667
    %v3701 = vpop.xlane.xlu0 %3700
    %v3702 = vsub.f32 %v3592, %v3671
    %v3703 = vsub.f32 %v3597, %v3673
    %v3704 = vsub.f32 %v3602, %v3675
    %v3705 = vsub.f32 %v3607, %v3677
    %v3706 = vsub.f32 %v3612, %v3679
    %v3707 = vsub.f32 %v3617, %v3681
    %v3708 = vsub.f32 %v3622, %v3683
    %v3709 = vsub.f32 %v3627, %v3685
    %v3710 = vsub.f32 %v3632, %v3687
    %v3711 = vsub.f32 %v3637, %v3689
    %v3712 = vsub.f32 %v3642, %v3691
    %v3713 = vsub.f32 %v3647, %v3693
    %v3714 = vsub.f32 %v3652, %v3695
    %v3715 = vsub.f32 %v3657, %v3697
    %v3716 = vsub.f32 %v3662, %v3699
    %v3717 = vsub.f32 %v3667, %v3701
    %v3718 = vmul.f32 %v3702, 1.442695
    %v3719 = vpow.pop %v3718
    %v3720 = vmul.f32 %v3703, 1.442695
    %v3721 = vpow.pop %v3720
    %v3722 = vmul.f32 %v3704, 1.442695
    %v3723 = vpow.pop %v3722
    %v3724 = vmul.f32 %v3705, 1.442695
    %v3725 = vpow.pop %v3724
    %v3726 = vmul.f32 %v3706, 1.442695
    %v3727 = vpow.pop %v3726
    %v3728 = vmul.f32 %v3707, 1.442695
    %v3729 = vpow.pop %v3728
    %v3730 = vmul.f32 %v3708, 1.442695
    %v3731 = vpow.pop %v3730
    %v3732 = vmul.f32 %v3709, 1.442695
    %v3733 = vpow.pop %v3732
    %v3734 = vmul.f32 %v3710, 1.442695
    %v3735 = vpow.pop %v3734
    %v3736 = vmul.f32 %v3711, 1.442695
    %v3737 = vpow.pop %v3736
    %v3738 = vmul.f32 %v3712, 1.442695
    %v3739 = vpow.pop %v3738
    %v3740 = vmul.f32 %v3713, 1.442695
    %v3741 = vpow.pop %v3740
    %v3742 = vmul.f32 %v3714, 1.442695
    %v3743 = vpow.pop %v3742
    %v3744 = vmul.f32 %v3715, 1.442695
    %v3745 = vpow.pop %v3744
    %v3746 = vmul.f32 %v3716, 1.442695
    %v3747 = vpow.pop %v3746
    %v3748 = vmul.f32 %v3717, 1.442695
    %v3749 = vpow.pop %v3748
    %3750 = vadd.xlane.f32.xlu0 %v3719
    %v3751 = vpop.xlane.xlu0 %3750
    %3752 = vadd.xlane.f32.xlu0 %v3721
    %v3753 = vpop.xlane.xlu0 %3752
    %3754 = vadd.xlane.f32.xlu0 %v3723
    %v3755 = vpop.xlane.xlu0 %3754
    %3756 = vadd.xlane.f32.xlu0 %v3725
    %v3757 = vpop.xlane.xlu0 %3756
    %3758 = vadd.xlane.f32.xlu0 %v3727
    %v3759 = vpop.xlane.xlu0 %3758
    %3760 = vadd.xlane.f32.xlu0 %v3729
    %v3761 = vpop.xlane.xlu0 %3760
    %3762 = vadd.xlane.f32.xlu0 %v3731
    %v3763 = vpop.xlane.xlu0 %3762
    %3764 = vadd.xlane.f32.xlu0 %v3733
    %v3765 = vpop.xlane.xlu0 %3764
    %3766 = vadd.xlane.f32.xlu0 %v3735
    %v3767 = vpop.xlane.xlu0 %3766
    %3768 = vadd.xlane.f32.xlu0 %v3737
    %v3769 = vpop.xlane.xlu0 %3768
    %3770 = vadd.xlane.f32.xlu0 %v3739
    %v3771 = vpop.xlane.xlu0 %3770
    %3772 = vadd.xlane.f32.xlu0 %v3741
    %v3773 = vpop.xlane.xlu0 %3772
    %3774 = vadd.xlane.f32.xlu0 %v3743
    %v3775 = vpop.xlane.xlu0 %3774
    %3776 = vadd.xlane.f32.xlu0 %v3745
    %v3777 = vpop.xlane.xlu0 %3776
    %3778 = vadd.xlane.f32.xlu0 %v3747
    %v3779 = vpop.xlane.xlu0 %3778
    %3780 = vadd.xlane.f32.xlu0 %v3749
    %v3781 = vpop.xlane.xlu0 %3780
    %v3782 = vrcp.pop %v3751
    %v3783 = vmul.f32 %v3719, %v3782
    %v3784 = vrcp.pop %v3753
    %v3785 = vmul.f32 %v3721, %v3784
    %v3786 = vrcp.pop %v3755
    %v3787 = vmul.f32 %v3723, %v3786
    %v3788 = vrcp.pop %v3757
    %v3789 = vmul.f32 %v3725, %v3788
    %v3790 = vrcp.pop %v3759
    %v3791 = vmul.f32 %v3727, %v3790
    %v3792 = vrcp.pop %v3761
    %v3793 = vmul.f32 %v3729, %v3792
    %v3794 = vrcp.pop %v3763
    %v3795 = vmul.f32 %v3731, %v3794
    %v3796 = vrcp.pop %v3765
    %v3797 = vmul.f32 %v3733, %v3796
    %v3798 = vrcp.pop %v3767
    %v3799 = vmul.f32 %v3735, %v3798
    %v3800 = vrcp.pop %v3769
    %v3801 = vmul.f32 %v3737, %v3800
    %v3802 = vrcp.pop %v3771
    %v3803 = vmul.f32 %v3739, %v3802
    %v3804 = vrcp.pop %v3773
    %v3805 = vmul.f32 %v3741, %v3804
    %v3806 = vrcp.pop %v3775
    %v3807 = vmul.f32 %v3743, %v3806
    %v3808 = vrcp.pop %v3777
    %v3809 = vmul.f32 %v3745, %v3808
    %v3810 = vrcp.pop %v3779
    %v3811 = vmul.f32 %v3747, %v3810
    %v3812 = vrcp.pop %v3781
    %v3813 = vmul.f32 %v3749, %v3812
    %3814 = vmatprep.subr.mxu0 0.0
    %3815 = vmatpush1.xpose.msra.mxu0 %v3813
    %3816 = vmatprep.subr.mxu0 0.0
    %3817 = vmatpush1.xpose.msra.mxu0 %v3811
    %3818 = vmatprep.subr.mxu0 0.0
    %3819 = vmatpush1.xpose.msra.mxu0 %v3809
    %3820 = vmatprep.subr.mxu0 0.0
    %3821 = vmatpush1.xpose.msra.mxu0 %v3807
    %3822 = vmatprep.subr.mxu0 0.0
    %3823 = vmatpush1.xpose.msra.mxu0 %v3805
    %3824 = vmatprep.subr.mxu0 0.0
    %3825 = vmatpush1.xpose.msra.mxu0 %v3803
    %3826 = vmatprep.subr.mxu0 0.0
    %3827 = vmatpush1.xpose.msra.mxu0 %v3801
    %3828 = vmatprep.subr.mxu0 0.0
    %3829 = vmatpush1.xpose.msra.mxu0 %v3799
    %3830 = vmatprep.subr.mxu0 0.0
    %3831 = vmatpush1.xpose.msra.mxu0 %v3797
    %3832 = vmatprep.subr.mxu0 0.0
    %3833 = vmatpush1.xpose.msra.mxu0 %v3795
    %3834 = vmatprep.subr.mxu0 0.0
    %3835 = vmatpush1.xpose.msra.mxu0 %v3793
    %3836 = vmatprep.subr.mxu0 0.0
    %3837 = vmatpush1.xpose.msra.mxu0 %v3791
    %3838 = vmatprep.subr.mxu0 0.0
    %3839 = vmatpush1.xpose.msra.mxu0 %v3789
    %3840 = vmatprep.subr.mxu0 0.0
    %3841 = vmatpush1.xpose.msra.mxu0 %v3787
    %3842 = vmatprep.subr.mxu0 0.0
    %3843 = vmatpush1.xpose.msra.mxu0 %v3785
    %3844 = vmatprep.subr.mxu0 0.0
    %3845 = vmatpush1.xpose.msra.mxu0 %v3783
    %3846 = vmatprep.subr.mxu0 0.0
    %3847 = vmatpush2.xpose.msra.mxu0 0.0
    %3848 = vmatprep.subr.mxu0 0.0
    %3849 = vmatpush2.xpose.msra.mxu0 0.0
    %3850 = vmatprep.subr.mxu0 0.0
    %3851 = vmatpush2.xpose.msra.mxu0 0.0
    %3852 = vmatprep.subr.mxu0 0.0
    %3853 = vmatpush2.xpose.msra.mxu0 0.0
    %3854 = vmatprep.subr.mxu0 0.0
    %3855 = vmatpush2.xpose.msra.mxu0 0.0
    %3856 = vmatprep.subr.mxu0 0.0
    %3857 = vmatpush2.xpose.msra.mxu0 0.0
    %3858 = vmatprep.subr.mxu0 0.0
    %3859 = vmatpush2.xpose.msra.mxu0 0.0
    %3860 = vmatprep.subr.mxu0 0.0
    %3861 = vmatpush2.xpose.msra.mxu0 0.0
    %3862 = vmatprep.subr.mxu0 0.0
    %3863 = vmatpush2.xpose.msra.mxu0 0.0
    %3864 = vmatprep.subr.mxu0 0.0
    %3865 = vmatpush2.xpose.msra.mxu0 0.0
    %3866 = vmatprep.subr.mxu0 0.0
    %3867 = vmatpush2.xpose.msra.mxu0 0.0
    %3868 = vmatprep.subr.mxu0 0.0
    %3869 = vmatpush2.xpose.msra.mxu0 0.0
    %3870 = vmatprep.subr.mxu0 0.0
    %3871 = vmatpush2.xpose.msra.mxu0 0.0
    %3872 = vmatprep.subr.mxu0 0.0
    %3873 = vmatpush2.xpose.msra.mxu0 0.0
    %3874 = vmatprep.subr.mxu0 0.0
    %3875 = vmatpush2.xpose.msra.mxu0 0.0
    %3876 = vmatprep.subr.mxu0 0.0
    %3877 = vmatpush2.xpose.msra.mxu0 0.0
    %3878 = vmatprep.mubr.f32.mxu0 0.0
    %3879 = vmatmul.mubr.f32.gmra.mxu0 %v302
    %v3880 = vpop.f32.mrf.mxu0
    %v3881 = vadd.f32 0.0, %v3880
    %v3882 = vpop.f32.mrf.mxu0
    %3883 = vdwg.mxu0
    %v3884 = vld [vmem:[%s3] sm:$0xff]
    %v3885 = vld [vmem:[%s3 + $0x8] sm:$0xff]
    %v3886 = vld [vmem:[%s3 + $0x10] sm:$0xff]
    %v3887 = vld [vmem:[%s3 + $0x18] sm:$0xff]
    %v3888 = vld [vmem:[%s4] sm:$0xff]
    %v3889 = vld [vmem:[%s4 + $0x8] sm:$0xff]
    %v3890 = vld [vmem:[%s4 + $0x10] sm:$0xff]
    %v3891 = vld [vmem:[%s4 + $0x18] sm:$0xff]
    %3893 = vset.pattern.permute.xlu0 0
    %3894 = vperm.xlu0 %3893, %v3888
    %v3895 = vpop.permute.xlu0 %3894
    %3898 = vset.pattern.permute.xlu0 0
    %3899 = vperm.xlu0 %3898, %v3889
    %v3900 = vpop.permute.xlu0 %3899
    %3903 = vset.pattern.permute.xlu0 0
    %3904 = vperm.xlu0 %3903, %v3890
    %v3905 = vpop.permute.xlu0 %3904
    %3908 = vset.pattern.permute.xlu0 0
    %3909 = vperm.xlu0 %3908, %v3891
    %v3910 = vpop.permute.xlu0 %3909
    %v3913 = vsel %vm130, %v3884, 0
    %v3916 = vsel %vm130, %v3885, 0
    %v3919 = vsel %vm130, %v3886, 0
    %v3922 = vsel %vm130, %v3887, 0
    %3924 = vmatprep.subr.mxu0 0.0
    %3925 = vmatpush1.msra.mxu0 0.0
    %3926 = vmatprep.subr.mxu0 0.0
    %3927 = vmatpush1.msra.mxu0 0.0
    %3928 = vmatprep.subr.mxu0 0.0
    %3929 = vmatpush1.msra.mxu0 0.0
    %3930 = vmatprep.subr.mxu0 0.0
    %3931 = vmatpush1.msra.mxu0 0.0
    %3932 = vmatprep.subr.mxu0 0.0
    %3933 = vmatpush1.msra.mxu0 0.0
    %3934 = vmatprep.subr.mxu0 0.0
    %3935 = vmatpush1.msra.mxu0 0.0
    %3936 = vmatprep.subr.mxu0 0.0
    %3937 = vmatpush1.msra.mxu0 0.0
    %3938 = vmatprep.subr.mxu0 0.0
    %3939 = vmatpush1.msra.mxu0 0.0
    %3940 = vmatprep.subr.mxu0 0.0
    %3941 = vmatpush1.msra.mxu0 0.0
    %3942 = vmatprep.subr.mxu0 0.0
    %3943 = vmatpush1.msra.mxu0 0.0
    %3944 = vmatprep.subr.mxu0 0.0
    %3945 = vmatpush1.msra.mxu0 0.0
    %3946 = vmatprep.subr.mxu0 0.0
    %3947 = vmatpush1.msra.mxu0 0.0
    %3948 = vmatprep.subr.mxu0 %v3881
    %3949 = vmatpush1.msra.mxu0 %v3442
    %3950 = vmatprep.subr.mxu0 %v2986
    %3951 = vmatpush1.msra.mxu0 %v2547
    %3952 = vmatprep.subr.mxu0 %v2091
    %3953 = vmatpush1.msra.mxu0 %v1652
    %3954 = vmatprep.subr.mxu0 %v1196
    %3955 = vmatpush1.msra.mxu0 %v757
    %3956 = vmatprep.subr.mxu0 0.0
    %3957 = vmatpush2.msra.mxu0 0.0
    %3958 = vmatprep.subr.mxu0 0.0
    %3959 = vmatpush2.msra.mxu0 0.0
    %3960 = vmatprep.subr.mxu0 0.0
    %3961 = vmatpush2.msra.mxu0 0.0
    %3962 = vmatprep.subr.mxu0 0.0
    %3963 = vmatpush2.msra.mxu0 0.0
    %3964 = vmatprep.subr.mxu0 0.0
    %3965 = vmatpush2.msra.mxu0 0.0
    %3966 = vmatprep.subr.mxu0 0.0
    %3967 = vmatpush2.msra.mxu0 0.0
    %3968 = vmatprep.subr.mxu0 0.0
    %3969 = vmatpush2.msra.mxu0 0.0
    %3970 = vmatprep.subr.mxu0 0.0
    %3971 = vmatpush2.msra.mxu0 0.0
    %3972 = vmatprep.subr.mxu0 0.0
    %3973 = vmatpush2.msra.mxu0 0.0
    %3974 = vmatprep.subr.mxu0 0.0
    %3975 = vmatpush2.msra.mxu0 0.0
    %3976 = vmatprep.subr.mxu0 0.0
    %3977 = vmatpush2.msra.mxu0 0.0
    %3978 = vmatprep.subr.mxu0 0.0
    %3979 = vmatpush2.msra.mxu0 0.0
    %3980 = vmatprep.subr.mxu0 0.0
    %3981 = vmatpush2.msra.mxu0 0.0
    %3982 = vmatprep.subr.mxu0 0.0
    %3983 = vmatpush2.msra.mxu0 0.0
    %3984 = vmatprep.subr.mxu0 0.0
    %3985 = vmatpush2.msra.mxu0 0.0
    %3986 = vmatprep.subr.mxu0 0.0
    %3987 = vmatpush2.msra.mxu0 0.0
    %3988 = vmatprep.mubr.f32.mxu0 0.0
    %3989 = vmatmul.mubr.f32.gmra.mxu0 %v3913
    %v3990 = vpop.f32.mrf.mxu0
    %v3991 = vadd.f32 %v3895, %v3990
    %v3992 = vpop.f32.mrf.mxu0
    %v3993 = vadd.f32 %v3895, %v3992
    %3994 = vmatprep.mubr.f32.mxu0 0.0
    %3995 = vmatmul.mubr.f32.gmra.mxu0 %v3916
    %v3996 = vpop.f32.mrf.mxu0
    %v3997 = vadd.f32 %v3900, %v3996
    %v3998 = vpop.f32.mrf.mxu0
    %v3999 = vadd.f32 %v3900, %v3998
    %4000 = vmatprep.mubr.f32.mxu0 0.0
    %4001 = vmatmul.mubr.f32.gmra.mxu0 %v3919
    %v4002 = vpop.f32.mrf.mxu0
    %v4003 = vadd.f32 %v3905, %v4002
    %v4004 = vpop.f32.mrf.mxu0
    %v4005 = vadd.f32 %v3905, %v4004
    %4006 = vmatprep.mubr.f32.mxu0 0.0
    %4007 = vmatmul.mubr.f32.gmra.mxu0 %v3922
    %v4008 = vpop.f32.mrf.mxu0
    %v4009 = vadd.f32 %v3910, %v4008
    %v4010 = vpop.f32.mrf.mxu0
    %v4011 = vadd.f32 %v3910, %v4010
    %4012 = vdwg.mxu0
    %4013 = vst [vmem:[#allocation5] sm:$0xff] %v3991
    %4014 = vst [vmem:[#allocation5 + $0x8] sm:$0xff] %v3993
    %4015 = vst [vmem:[#allocation5 + $0x10] sm:$0xff] %v3997
    %4016 = vst [vmem:[#allocation5 + $0x18] sm:$0xff] %v3999
    %4017 = vst [vmem:[#allocation5 + $0x20] sm:$0xff] %v4003
    %4018 = vst [vmem:[#allocation5 + $0x28] sm:$0xff] %v4005
    %4019 = vst [vmem:[#allocation5 + $0x30] sm:$0xff] %v4009
    %4020 = vst [vmem:[#allocation5 + $0x38] sm:$0xff] %v4011
    // Predicated region
    $region30: #{tpu_custom_call.1} parent=1 // pred_check
      _
    $region31: #{tpu_custom_call.1} parent=1 // pred_check_branch
      %4022 = sbr.rel (0) target = $region33
    $region32: #{tpu_custom_call.1} parent=1 // pred_region
      %s4024 = ssub.s32 1024, 1024
      %4025 = vsyncadd [#allocation4], %s4024
      %s4026 = sshll.u32 [#allocation5], 4
      %s4027 = int_to_ptr.vmem [resolvable:$true] %s4026
      %4032 = dma.vmem_to_hbm [thread:$0]  %s4027, 1024, %s6, [#allocation4], 256, 256, 16
    $region33: #{tpu_custom_call.1} parent=1 // pred_fallthru
      _
    // Predicated region
    $region34: #{tpu_custom_call.1} parent=1 // pred_check
      _
    $region35: #{tpu_custom_call.1} parent=1 // pred_check_branch
      %4034 = sbr.rel (0) target = $region37
    $region36: #{tpu_custom_call.1} parent=1 // pred_region
      %4035 = dma.done [#allocation4], 1024
    $region37: #{tpu_custom_call.1} parent=1 // pred_fallthru
      _
    %4036 = vsyncpa [#allocation3], 1
    %4037 = vsyncpa [#allocation4], 1

</llo_original>
